<compile_context>
chip_gen: v7x
topology: tpu7x:2x2x1
jax: 0.10.0
libtpu: 0.0.40
codegen_flags: <defaults>
</compile_context>

<pallas_src>
import functools

import jax
import jax.numpy as jnp
from jax.experimental import pallas as pl
from jax.experimental.pallas import tpu as pltpu

BN_EPS = 1e-5


# ----------------------------------------------------------------------------
# Fused kernel: conv3x3+BN+ReLU -> conv3x3+BN+ReLU -> 1x1 heads (all tasks)
# ----------------------------------------------------------------------------
def _per_decoder_fused_kernel(x_ref, mask_ref, w1_ref, s1_ref, b1_ref,
                              w2_ref, s2_ref, b2_ref, wh_ref, bh_ref,
                              out_ref, h1p_ref, *, H, W):
    """Shapes (per grid step / batch element), flattened padded-width layout:

    x_ref   : ((H+3)*(W+2), Cin)      bf16, zero-padded input (1 top, 2 bottom,
                                      1 left, 1 right pad), row-major flattened
    mask_ref: (H*(W+2), 1)            f32, 1.0 on valid columns, 0.0 on the two
                                      padded-width garbage columns per row
    w1_ref  : (9*Cin, T*Cin)          bf16, tap-packed conv1 weights, all tasks
    s1,b1   : (1, T*Cin)              f32, folded BN scale / bias
    w2_ref  : (9*T*Cin, T*E)          bf16, tap-packed block-diagonal conv2
    s2,b2   : (1, T*E)                f32
    wh_ref  : (T*E, sum K_t)          bf16, block-diagonal 1x1 head weights
    bh_ref  : (1, sum K_t)            f32
    out_ref : (H*(W+2), T*E + sum K_t) f32, [features | predictions] slab
    h1p_ref : ((H+3)*(W+2), T*Cin)    bf16 VMEM scratch (padded intermediate)
    """
    Wp = W + 2
    m = H * Wp                       # rows computed in padded-width layout
    r_pad = h1p_ref.shape[0]         # (H+3)*Wp >= m + 2*Wp + 2 (tap-safe)
    c1 = h1p_ref.shape[1]            # T*Cin

    taps = [ky * Wp + kx for ky in range(3) for kx in range(3)]

    # ---- ConvBlock 1 (all tasks): one K = 9*Cin MXU matmul -----------------
    x = x_ref[...]                                           # (r_pad, Cin) bf16
    x_cat = jnp.concatenate([x[o:o + m, :] for o in taps], axis=1)
    acc1 = jnp.dot(x_cat, w1_ref[...], preferred_element_type=jnp.float32)
    y1 = jnp.maximum(acc1 * s1_ref[...] + b1_ref[...], 0.0)
    # Zero the padded-width garbage columns so that, after the (Wp+1) shift
    # below, they land exactly on the zero border that conv2 must see.
    y1 = y1 * mask_ref[...]

    # ---- In-kernel zero padding of the intermediate (stays in VMEM) --------
    h1p_ref[0:Wp + 1, :] = jnp.zeros((Wp + 1, c1), h1p_ref.dtype)
    h1p_ref[Wp + 1 + m:r_pad, :] = jnp.zeros((r_pad - Wp - 1 - m, c1),
                                             h1p_ref.dtype)
    h1p_ref[Wp + 1:Wp + 1 + m, :] = y1.astype(h1p_ref.dtype)

    # ---- ConvBlock 2 (all tasks, block-diagonal): one K = 9*T*Cin matmul ---
    h1 = h1p_ref[...]                                        # (r_pad, T*Cin)
    h1_cat = jnp.concatenate([h1[o:o + m, :] for o in taps], axis=1)
    acc2 = jnp.dot(h1_cat, w2_ref[...], preferred_element_type=jnp.float32)
    h2 = jnp.maximum(acc2 * s2_ref[...] + b2_ref[...], 0.0)  # (m, T*E) f32

    # ---- 1x1 intermediate heads (all tasks, block-diagonal weight) ---------
    pred = jnp.dot(h2.astype(wh_ref.dtype), wh_ref[...],
                   preferred_element_type=jnp.float32) + bh_ref[...]

    # Single lane-combined store: [task features | task predictions].
    out_ref[...] = jnp.concatenate([h2, pred], axis=1).astype(out_ref.dtype)


# ----------------------------------------------------------------------------
# Wrapper (layout plumbing only; fused by XLA with the mandatory transposes)
# ----------------------------------------------------------------------------
def _per_decoder_forward_impl(x_nchw, params, task_names):
    n, cin, h, w = x_nchw.shape
    t_n = len(task_names)
    emb = params[task_names[0]]["w2"].shape[-1]
    k_list = [params[t]["wh"].shape[-1] for t in task_names]
    k_sum = sum(k_list)
    wp = w + 2
    m = h * wp
    r_pad = (h + 3) * wp             # 1 top + 2 bottom pad rows -> tap-safe

    # Input: NCHW -> NHWC, zero pad, flatten spatial, cast to bf16 (one pass).
    x_nhwc = jnp.transpose(x_nchw, (0, 2, 3, 1))
    xp = jnp.pad(x_nhwc, ((0, 0), (1, 2), (1, 1), (0, 0)))
    x_flat = xp.reshape(n, r_pad, cin).astype(jnp.bfloat16)

    # Valid-column mask for the padded-width flattened layout (constant).
    mask = (jnp.tile(jnp.arange(wp, dtype=jnp.int32), h) < w)
    mask = mask.astype(jnp.float32).reshape(m, 1)

    # conv1 weights: (9*Cin, T*Cin), tasks stacked along Cout.
    w1p = jnp.concatenate(
        [params[t]["w1"].reshape(9 * cin, cin) for t in task_names],
        axis=1).astype(jnp.bfloat16)
    s1 = jnp.concatenate([params[t]["s1"] for t in task_names]
                         ).reshape(1, t_n * cin).astype(jnp.float32)
    b1 = jnp.concatenate([params[t]["b1"] for t in task_names]
                         ).reshape(1, t_n * cin).astype(jnp.float32)

    # conv2 weights: block-diagonal (9*T*Cin, T*E).
    w2_stack = jnp.stack([params[t]["w2"] for t in task_names], axis=0)
    w2r = jnp.transpose(w2_stack, (1, 2, 0, 3, 4)).reshape(9, t_n, cin, emb)
    eye = jnp.eye(t_n, dtype=w2r.dtype)
    w2bd = jnp.einsum("ktcd,ts->ktcsd", w2r, eye
                      ).reshape(9 * t_n * cin, t_n * emb).astype(jnp.bfloat16)
    s2 = jnp.concatenate([params[t]["s2"] for t in task_names]
                         ).reshape(1, t_n * emb).astype(jnp.float32)
    b2 = jnp.concatenate([params[t]["b2"] for t in task_names]
                         ).reshape(1, t_n * emb).astype(jnp.float32)

    # 1x1 heads: block-diagonal (T*E, sum K_t) + concatenated bias.
    wh = jnp.zeros((t_n * emb, k_sum), jnp.float32)
    off = 0
    for ti, t in enumerate(task_names):
        kt = k_list[ti]
        wh = wh.at[ti * emb:(ti + 1) * emb, off:off + kt].set(params[t]["wh"])
        off += kt
    wh = wh.astype(jnp.bfloat16)
    bh = jnp.concatenate([params[t]["bh"] for t in task_names]
                         ).reshape(1, k_sum).astype(jnp.float32)

    c_slab = t_n * emb + k_sum
    kernel = functools.partial(_per_decoder_fused_kernel, H=h, W=w)
    out = pl.pallas_call(
        kernel,
        out_shape=jax.ShapeDtypeStruct((n, m, c_slab), jnp.float32),
        grid=(n,),
        in_specs=[
            pl.BlockSpec((None, r_pad, cin), lambda i: (i, 0, 0)),
            pl.BlockSpec((m, 1), lambda i: (0, 0)),
            pl.BlockSpec((9 * cin, t_n * cin), lambda i: (0, 0)),
            pl.BlockSpec((1, t_n * cin), lambda i: (0, 0)),
            pl.BlockSpec((1, t_n * cin), lambda i: (0, 0)),
            pl.BlockSpec((9 * t_n * cin, t_n * emb), lambda i: (0, 0)),
            pl.BlockSpec((1, t_n * emb), lambda i: (0, 0)),
            pl.BlockSpec((1, t_n * emb), lambda i: (0, 0)),
            pl.BlockSpec((t_n * emb, k_sum), lambda i: (0, 0)),
            pl.BlockSpec((1, k_sum), lambda i: (0, 0)),
        ],
        out_specs=pl.BlockSpec((None, m, c_slab), lambda i: (i, 0, 0)),
        scratch_shapes=[pltpu.VMEM((r_pad, t_n * cin), jnp.bfloat16)],
        compiler_params=pltpu.CompilerParams(
            dimension_semantics=("parallel",)),
    )(x_flat, mask, w1p, s1, b1, w2bd, s2, b2, wh, bh)

    # Drop padded-width garbage columns and split the slab; these slices fuse
    # with the mandatory NHWC -> NCHW output transposes.
    valid = out.reshape(n, h, wp, c_slab)[:, :, :w, :]
    ms_feat, inter_pred = {}, {}
    off = 0
    for ti, t in enumerate(task_names):
        kt = k_list[ti]
        ms_feat[t] = jnp.transpose(valid[..., ti * emb:(ti + 1) * emb],
                                   (0, 3, 1, 2))
        inter_pred[t] = jnp.transpose(
            valid[..., t_n * emb + off:t_n * emb + off + kt], (0, 3, 1, 2))
        off += kt
    return ms_feat, inter_pred


per_decoder_forward = jax.jit(_per_decoder_forward_impl,
                              static_argnames="task_names")


# ----------------------------------------------------------------------------
# Deterministic synthetic parameters (BN folded to eval-mode scale/bias)
# ----------------------------------------------------------------------------
def _fold_bn(gamma, beta, mean, var):
    scale = gamma / jnp.sqrt(var + BN_EPS)
    bias = beta - mean * scale
    return scale, bias


def make_params(key, cin, cembed, task_names, num_output):
    params = {}
    for t in task_names:
        key, k1, k2, k3, k4, k5, k6, k7, k8 = jax.random.split(key, 9)
        # ConvBlock 1: Cin -> Cin
        w1 = jax.random.normal(k1, (3, 3, cin, cin), jnp.float32) * (2.0 / (9 * cin)) ** 0.5
        g1 = 0.5 + jax.random.uniform(k2, (cin,), jnp.float32)
        be1 = 0.1 * jax.random.normal(k3, (cin,), jnp.float32)
        m1 = 0.1 * jax.random.normal(k3, (cin,), jnp.float32) + 0.05
        v1 = 0.5 + jax.random.uniform(k2, (cin,), jnp.float32)
        s1, b1 = _fold_bn(g1, be1, m1, v1)
        # ConvBlock 2: Cin -> embed_dim
        w2 = jax.random.normal(k4, (3, 3, cin, cembed), jnp.float32) * (2.0 / (9 * cin)) ** 0.5
        g2 = 0.5 + jax.random.uniform(k5, (cembed,), jnp.float32)
        be2 = 0.1 * jax.random.normal(k6, (cembed,), jnp.float32)
        m2 = 0.1 * jax.random.normal(k6, (cembed,), jnp.float32) - 0.05
        v2 = 0.5 + jax.random.uniform(k5, (cembed,), jnp.float32)
        s2, b2 = _fold_bn(g2, be2, m2, v2)
        # intermediate head: 1x1 conv embed_dim -> NUM_OUTPUT[t], with bias
        kout = num_output[t]
        wh = jax.random.normal(k7, (cembed, kout), jnp.float32) * (1.0 / cembed) ** 0.5
        bh = 0.1 * jax.random.normal(k8, (kout,), jnp.float32)
        params[t] = dict(w1=w1, s1=s1, b1=b1, w2=w2, s2=s2, b2=b2, wh=wh, bh=bh)
    return params


# ----------------------------------------------------------------------------
# Pure-JAX reference (float32, for numerical validation)
# ----------------------------------------------------------------------------
def _ref_convblock(x_nhwc, w_hwio, scale, bias):
    y = jax.lax.conv_general_dilated(
        x_nhwc, w_hwio, window_strides=(1, 1), padding="SAME",
        dimension_numbers=("NHWC", "HWIO", "NHWC"))
    return jnp.maximum(y * scale + bias, 0.0)


def _ref_forward(x_nchw, params, task_names):
    x = jnp.transpose(x_nchw, (0, 2, 3, 1))
    ms, pred = {}, {}
    for t in task_names:
        pt = params[t]
        hh = _ref_convblock(x, pt["w1"], pt["s1"], pt["b1"])
        hh = _ref_convblock(hh, pt["w2"], pt["s2"], pt["b2"])
        ms[t] = jnp.transpose(hh, (0, 3, 1, 2))
        p = jnp.einsum("nhwc,ck->nhwk", hh, pt["wh"]) + pt["bh"]
        pred[t] = jnp.transpose(p, (0, 3, 1, 2))
    return ms, pred


# ----------------------------------------------------------------------------
if __name__ == "__main__":
    class _NS:
        pass

    p = _NS()
    p.embed_dim = 32
    p.backbone_channels = [16, 32]
    p.TASKS = _NS()
    p.TASKS.NAMES = ("semseg", "depth")          # tuple (static under jit)
    p.TASKS.NUM_OUTPUT = {"semseg": 8, "depth": 1}

    N, H, W = 2, 16, 16
    cin = p.backbone_channels[-1]

    key = jax.random.PRNGKey(0)
    kx, kp = jax.random.split(key)
    x = jax.random.normal(kx, (N, cin, H, W), jnp.float32)   # NCHW like PyTorch
    params = make_params(kp, cin, p.embed_dim, p.TASKS.NAMES, p.TASKS.NUM_OUTPUT)

    ms_feat, inter_pred = per_decoder_forward(x, params, task_names=p.TASKS.NAMES)
    jax.block_until_ready((ms_feat, inter_pred))

    # Shape checks (match PyTorch NCHW outputs).
    assert ms_feat["semseg"].shape == (N, p.embed_dim, H, W)
    assert ms_feat["depth"].shape == (N, p.embed_dim, H, W)
    assert inter_pred["semseg"].shape == (N, 8, H, W)
    assert inter_pred["depth"].shape == (N, 1, H, W)

    # Numerical check against a pure-JAX f32 reference.  Tolerance is loosened
    # because the kernel feeds the MXU with bfloat16 operands (f32 accumulate).
    ms_ref, pred_ref = _ref_forward(x, params, p.TASKS.NAMES)
    for t in p.TASKS.NAMES:
        assert jnp.allclose(ms_feat[t], ms_ref[t], rtol=5e-2, atol=1e-1), t
        assert jnp.allclose(inter_pred[t], pred_ref[t], rtol=5e-2, atol=1e-1), t

    print("KERNEL_OK")
</pallas_src>

<mosaic_0001>
module attributes {stable_mosaic.version = 11 : i64} {
  func.func @_per_decoder_fused_kernel(%arg0: i32, %arg1: memref<1x342x32xbf16, #tpu.memory_space<vmem>>, %arg2: memref<288x1xf32, #tpu.memory_space<vmem>>, %arg3: memref<288x64xbf16, #tpu.memory_space<vmem>>, %arg4: memref<1x64xf32, #tpu.memory_space<vmem>>, %arg5: memref<1x64xf32, #tpu.memory_space<vmem>>, %arg6: memref<576x64xbf16, #tpu.memory_space<vmem>>, %arg7: memref<1x64xf32, #tpu.memory_space<vmem>>, %arg8: memref<1x64xf32, #tpu.memory_space<vmem>>, %arg9: memref<64x9xbf16, #tpu.memory_space<vmem>>, %arg10: memref<1x9xf32, #tpu.memory_space<vmem>>, %arg11: memref<1x288x73xf32, #tpu.memory_space<vmem>>, %arg12: memref<342x64xbf16, #tpu.memory_space<vmem>>) attributes {dimension_semantics = [#tpu.dimension_semantics<parallel>], iteration_bounds = array<i64: 2>, scalar_prefetch = 0 : i64, scratch_operands = 1 : i64, tpu.core_type = #tpu.core_type<tc>, window_params = [{transform_indices = @transform_0, window_bounds = array<i64: 1, 342, 32>}, {pipeline_mode = #tpu.pipeline_mode<synchronous>, transform_indices = @transform_1, window_bounds = array<i64: 288, 1>}, {pipeline_mode = #tpu.pipeline_mode<synchronous>, transform_indices = @transform_2, window_bounds = array<i64: 288, 64>}, {pipeline_mode = #tpu.pipeline_mode<synchronous>, transform_indices = @transform_3, window_bounds = array<i64: 1, 64>}, {pipeline_mode = #tpu.pipeline_mode<synchronous>, transform_indices = @transform_4, window_bounds = array<i64: 1, 64>}, {pipeline_mode = #tpu.pipeline_mode<synchronous>, transform_indices = @transform_5, window_bounds = array<i64: 576, 64>}, {pipeline_mode = #tpu.pipeline_mode<synchronous>, transform_indices = @transform_6, window_bounds = array<i64: 1, 64>}, {pipeline_mode = #tpu.pipeline_mode<synchronous>, transform_indices = @transform_7, window_bounds = array<i64: 1, 64>}, {pipeline_mode = #tpu.pipeline_mode<synchronous>, transform_indices = @transform_8, window_bounds = array<i64: 64, 9>}, {pipeline_mode = #tpu.pipeline_mode<synchronous>, transform_indices = @transform_9, window_bounds = array<i64: 1, 9>}, {transform_indices = @transform_10, window_bounds = array<i64: 1, 288, 73>}]} {
    %c0 = arith.constant 0 : index
    %c0_0 = arith.constant 0 : index
    %c0_1 = arith.constant 0 : index
    %0 = vector.load %arg1[%c0, %c0_0, %c0_1] : memref<1x342x32xbf16, #tpu.memory_space<vmem>>, vector<1x342x32xbf16>
    %1 = vector.shape_cast %0 : vector<1x342x32xbf16> to vector<342x32xbf16>
    %2 = vector.extract_strided_slice %1 {offsets = [0, 0], sizes = [288, 32], strides = [1, 1]} : vector<342x32xbf16> to vector<288x32xbf16>
    %3 = vector.extract_strided_slice %1 {offsets = [1, 0], sizes = [288, 32], strides = [1, 1]} : vector<342x32xbf16> to vector<288x32xbf16>
    %4 = vector.extract_strided_slice %1 {offsets = [2, 0], sizes = [288, 32], strides = [1, 1]} : vector<342x32xbf16> to vector<288x32xbf16>
    %5 = vector.extract_strided_slice %1 {offsets = [18, 0], sizes = [288, 32], strides = [1, 1]} : vector<342x32xbf16> to vector<288x32xbf16>
    %6 = vector.extract_strided_slice %1 {offsets = [19, 0], sizes = [288, 32], strides = [1, 1]} : vector<342x32xbf16> to vector<288x32xbf16>
    %7 = vector.extract_strided_slice %1 {offsets = [20, 0], sizes = [288, 32], strides = [1, 1]} : vector<342x32xbf16> to vector<288x32xbf16>
    %8 = vector.extract_strided_slice %1 {offsets = [36, 0], sizes = [288, 32], strides = [1, 1]} : vector<342x32xbf16> to vector<288x32xbf16>
    %9 = vector.extract_strided_slice %1 {offsets = [37, 0], sizes = [288, 32], strides = [1, 1]} : vector<342x32xbf16> to vector<288x32xbf16>
    %10 = vector.extract_strided_slice %1 {offsets = [38, 0], sizes = [288, 32], strides = [1, 1]} : vector<342x32xbf16> to vector<288x32xbf16>
    %11 = tpu.concatenate %2, %3, %4, %5, %6, %7, %8, %9, %10 in 1 : vector<288x32xbf16>, vector<288x32xbf16>, vector<288x32xbf16>, vector<288x32xbf16>, vector<288x32xbf16>, vector<288x32xbf16>, vector<288x32xbf16>, vector<288x32xbf16>, vector<288x32xbf16> -> vector<288x288xbf16>
    %c0_2 = arith.constant 0 : index
    %c0_3 = arith.constant 0 : index
    %12 = vector.load %arg3[%c0_2, %c0_3] : memref<288x64xbf16, #tpu.memory_space<vmem>>, vector<288x64xbf16>
    %cst = arith.constant dense<0.000000e+00> : vector<288x64xf32>
    %13 = tpu.matmul %11, %12, %cst {dimension_numbers = #tpu.dot_dimension_numbers<[1], [0], [0], [1], [0, 0, 1, 1], [], []>} : vector<288x288xbf16>, vector<288x64xbf16>, vector<288x64xf32> -> vector<288x64xf32>
    %c0_4 = arith.constant 0 : index
    %c0_5 = arith.constant 0 : index
    %14 = vector.load %arg4[%c0_4, %c0_5] : memref<1x64xf32, #tpu.memory_space<vmem>>, vector<1x64xf32>
    %15 = vector.broadcast %14 : vector<1x64xf32> to vector<288x64xf32>
    %16 = arith.mulf %13, %15 : vector<288x64xf32>
    %c0_6 = arith.constant 0 : index
    %c0_7 = arith.constant 0 : index
    %17 = vector.load %arg5[%c0_6, %c0_7] : memref<1x64xf32, #tpu.memory_space<vmem>>, vector<1x64xf32>
    %18 = vector.broadcast %17 : vector<1x64xf32> to vector<288x64xf32>
    %19 = arith.addf %16, %18 : vector<288x64xf32>
    %cst_8 = arith.constant 0.000000e+00 : f32
    %20 = vector.broadcast %cst_8 : f32 to vector<288x64xf32>
    %21 = arith.maximumf %19, %20 : vector<288x64xf32>
    %c0_9 = arith.constant 0 : index
    %c0_10 = arith.constant 0 : index
    %22 = vector.load %arg2[%c0_9, %c0_10] : memref<288x1xf32, #tpu.memory_space<vmem>>, vector<288x1xf32>
    %23 = vector.broadcast %22 : vector<288x1xf32> to vector<288x64xf32>
    %24 = arith.mulf %21, %23 : vector<288x64xf32>
    %cst_11 = arith.constant 0.000000e+00 : bf16
    %25 = vector.broadcast %cst_11 : bf16 to vector<19x64xbf16>
    %c0_12 = arith.constant 0 : index
    %c0_13 = arith.constant 0 : index
    %26 = vector.load %arg12[%c0_12, %c0_13] : memref<342x64xbf16, #tpu.memory_space<vmem>>, vector<19x64xbf16>
    tpu.vector_store %arg12[%c0_12, %c0_13], %25 {strides = array<i32>} : memref<342x64xbf16, #tpu.memory_space<vmem>>, vector<19x64xbf16>,
    %cst_14 = arith.constant 0.000000e+00 : bf16
    %27 = vector.broadcast %cst_14 : bf16 to vector<35x64xbf16>
    %c307 = arith.constant 307 : index
    %c0_15 = arith.constant 0 : index
    %28 = vector.load %arg12[%c307, %c0_15] : memref<342x64xbf16, #tpu.memory_space<vmem>>, vector<35x64xbf16>
    tpu.vector_store %arg12[%c307, %c0_15], %27 {strides = array<i32>} : memref<342x64xbf16, #tpu.memory_space<vmem>>, vector<35x64xbf16>,
    %29 = arith.truncf %24 : vector<288x64xf32> to vector<288x64xbf16>
    %c19 = arith.constant 19 : index
    %c0_16 = arith.constant 0 : index
    %30 = vector.load %arg12[%c19, %c0_16] : memref<342x64xbf16, #tpu.memory_space<vmem>>, vector<288x64xbf16>
    tpu.vector_store %arg12[%c19, %c0_16], %29 {strides = array<i32>} : memref<342x64xbf16, #tpu.memory_space<vmem>>, vector<288x64xbf16>,
    %c0_17 = arith.constant 0 : index
    %c0_18 = arith.constant 0 : index
    %31 = vector.load %arg12[%c0_17, %c0_18] : memref<342x64xbf16, #tpu.memory_space<vmem>>, vector<342x64xbf16>
    %32 = vector.extract_strided_slice %31 {offsets = [0, 0], sizes = [288, 64], strides = [1, 1]} : vector<342x64xbf16> to vector<288x64xbf16>
    %33 = vector.extract_strided_slice %31 {offsets = [1, 0], sizes = [288, 64], strides = [1, 1]} : vector<342x64xbf16> to vector<288x64xbf16>
    %34 = vector.extract_strided_slice %31 {offsets = [2, 0], sizes = [288, 64], strides = [1, 1]} : vector<342x64xbf16> to vector<288x64xbf16>
    %35 = vector.extract_strided_slice %31 {offsets = [18, 0], sizes = [288, 64], strides = [1, 1]} : vector<342x64xbf16> to vector<288x64xbf16>
    %36 = vector.extract_strided_slice %31 {offsets = [19, 0], sizes = [288, 64], strides = [1, 1]} : vector<342x64xbf16> to vector<288x64xbf16>
    %37 = vector.extract_strided_slice %31 {offsets = [20, 0], sizes = [288, 64], strides = [1, 1]} : vector<342x64xbf16> to vector<288x64xbf16>
    %38 = vector.extract_strided_slice %31 {offsets = [36, 0], sizes = [288, 64], strides = [1, 1]} : vector<342x64xbf16> to vector<288x64xbf16>
    %39 = vector.extract_strided_slice %31 {offsets = [37, 0], sizes = [288, 64], strides = [1, 1]} : vector<342x64xbf16> to vector<288x64xbf16>
    %40 = vector.extract_strided_slice %31 {offsets = [38, 0], sizes = [288, 64], strides = [1, 1]} : vector<342x64xbf16> to vector<288x64xbf16>
    %41 = tpu.concatenate %32, %33, %34, %35, %36, %37, %38, %39, %40 in 1 : vector<288x64xbf16>, vector<288x64xbf16>, vector<288x64xbf16>, vector<288x64xbf16>, vector<288x64xbf16>, vector<288x64xbf16>, vector<288x64xbf16>, vector<288x64xbf16>, vector<288x64xbf16> -> vector<288x576xbf16>
    %c0_19 = arith.constant 0 : index
    %c0_20 = arith.constant 0 : index
    %42 = vector.load %arg6[%c0_19, %c0_20] : memref<576x64xbf16, #tpu.memory_space<vmem>>, vector<576x64xbf16>
    %cst_21 = arith.constant dense<0.000000e+00> : vector<288x64xf32>
    %43 = tpu.matmul %41, %42, %cst_21 {dimension_numbers = #tpu.dot_dimension_numbers<[1], [0], [0], [1], [0, 0, 1, 1], [], []>} : vector<288x576xbf16>, vector<576x64xbf16>, vector<288x64xf32> -> vector<288x64xf32>
    %c0_22 = arith.constant 0 : index
    %c0_23 = arith.constant 0 : index
    %44 = vector.load %arg7[%c0_22, %c0_23] : memref<1x64xf32, #tpu.memory_space<vmem>>, vector<1x64xf32>
    %45 = vector.broadcast %44 : vector<1x64xf32> to vector<288x64xf32>
    %46 = arith.mulf %43, %45 : vector<288x64xf32>
    %c0_24 = arith.constant 0 : index
    %c0_25 = arith.constant 0 : index
    %47 = vector.load %arg8[%c0_24, %c0_25] : memref<1x64xf32, #tpu.memory_space<vmem>>, vector<1x64xf32>
    %48 = vector.broadcast %47 : vector<1x64xf32> to vector<288x64xf32>
    %49 = arith.addf %46, %48 : vector<288x64xf32>
    %cst_26 = arith.constant 0.000000e+00 : f32
    %50 = vector.broadcast %cst_26 : f32 to vector<288x64xf32>
    %51 = arith.maximumf %49, %50 : vector<288x64xf32>
    %52 = arith.truncf %51 : vector<288x64xf32> to vector<288x64xbf16>
    %c0_27 = arith.constant 0 : index
    %c0_28 = arith.constant 0 : index
    %53 = vector.load %arg9[%c0_27, %c0_28] : memref<64x9xbf16, #tpu.memory_space<vmem>>, vector<64x9xbf16>
    %cst_29 = arith.constant dense<0.000000e+00> : vector<288x9xf32>
    %54 = tpu.matmul %52, %53, %cst_29 {dimension_numbers = #tpu.dot_dimension_numbers<[1], [0], [0], [1], [0, 0, 1, 1], [], []>} : vector<288x64xbf16>, vector<64x9xbf16>, vector<288x9xf32> -> vector<288x9xf32>
    %c0_30 = arith.constant 0 : index
    %c0_31 = arith.constant 0 : index
    %55 = vector.load %arg10[%c0_30, %c0_31] : memref<1x9xf32, #tpu.memory_space<vmem>>, vector<1x9xf32>
    %56 = vector.broadcast %55 : vector<1x9xf32> to vector<288x9xf32>
    %57 = arith.addf %54, %56 : vector<288x9xf32>
    %58 = tpu.concatenate %51, %57 in 1 : vector<288x64xf32>, vector<288x9xf32> -> vector<288x73xf32>
    %c0_32 = arith.constant 0 : index
    %c0_33 = arith.constant 0 : index
    %c0_34 = arith.constant 0 : index
    %59 = vector.load %arg11[%c0_32, %c0_33, %c0_34] : memref<1x288x73xf32, #tpu.memory_space<vmem>>, vector<1x288x73xf32>
    %60 = vector.shape_cast %59 : vector<1x288x73xf32> to vector<288x73xf32>
    %61 = vector.shape_cast %58 : vector<288x73xf32> to vector<1x288x73xf32>
    tpu.vector_store %arg11[%c0_32, %c0_33, %c0_34], %61 {strides = array<i32>} : memref<1x288x73xf32, #tpu.memory_space<vmem>>, vector<1x288x73xf32>,
    return
  }
  func.func @transform_0(%arg0: i32) -> (i32, i32, i32) {
    %c0_i32 = arith.constant 0 : i32
    %c0_i32_0 = arith.constant 0 : i32
    %c0_i32_1 = arith.constant 0 : i32
    return %arg0, %c0_i32, %c0_i32_0 : i32, i32, i32
  }
  func.func @transform_1(%arg0: i32) -> (i32, i32) {
    %c0_i32 = arith.constant 0 : i32
    %c0_i32_0 = arith.constant 0 : i32
    %c0_i32_1 = arith.constant 0 : i32
    return %c0_i32, %c0_i32_0 : i32, i32
  }
  func.func @transform_2(%arg0: i32) -> (i32, i32) {
    %c0_i32 = arith.constant 0 : i32
    %c0_i32_0 = arith.constant 0 : i32
    %c0_i32_1 = arith.constant 0 : i32
    return %c0_i32, %c0_i32_0 : i32, i32
  }
  func.func @transform_3(%arg0: i32) -> (i32, i32) {
    %c0_i32 = arith.constant 0 : i32
    %c0_i32_0 = arith.constant 0 : i32
    %c0_i32_1 = arith.constant 0 : i32
    return %c0_i32, %c0_i32_0 : i32, i32
  }
  func.func @transform_4(%arg0: i32) -> (i32, i32) {
    %c0_i32 = arith.constant 0 : i32
    %c0_i32_0 = arith.constant 0 : i32
    %c0_i32_1 = arith.constant 0 : i32
    return %c0_i32, %c0_i32_0 : i32, i32
  }
  func.func @transform_5(%arg0: i32) -> (i32, i32) {
    %c0_i32 = arith.constant 0 : i32
    %c0_i32_0 = arith.constant 0 : i32
    %c0_i32_1 = arith.constant 0 : i32
    return %c0_i32, %c0_i32_0 : i32, i32
  }
  func.func @transform_6(%arg0: i32) -> (i32, i32) {
    %c0_i32 = arith.constant 0 : i32
    %c0_i32_0 = arith.constant 0 : i32
    %c0_i32_1 = arith.constant 0 : i32
    return %c0_i32, %c0_i32_0 : i32, i32
  }
  func.func @transform_7(%arg0: i32) -> (i32, i32) {
    %c0_i32 = arith.constant 0 : i32
    %c0_i32_0 = arith.constant 0 : i32
    %c0_i32_1 = arith.constant 0 : i32
    return %c0_i32, %c0_i32_0 : i32, i32
  }
  func.func @transform_8(%arg0: i32) -> (i32, i32) {
    %c0_i32 = arith.constant 0 : i32
    %c0_i32_0 = arith.constant 0 : i32
    %c0_i32_1 = arith.constant 0 : i32
    return %c0_i32, %c0_i32_0 : i32, i32
  }
  func.func @transform_9(%arg0: i32) -> (i32, i32) {
    %c0_i32 = arith.constant 0 : i32
    %c0_i32_0 = arith.constant 0 : i32
    %c0_i32_1 = arith.constant 0 : i32
    return %c0_i32, %c0_i32_0 : i32, i32
  }
  func.func @transform_10(%arg0: i32) -> (i32, i32, i32) {
    %c0_i32 = arith.constant 0 : i32
    %c0_i32_0 = arith.constant 0 : i32
    %c0_i32_1 = arith.constant 0 : i32
    return %arg0, %c0_i32, %c0_i32_0 : i32, i32, i32
  }
}

</mosaic_0001>

<llo_original>
// kernel: _per_decoder_forward_impl.1
$region0: #{_per_decoder_forward_impl.1}
  #allocation0 [shape = 'u32[]', space=smem, size = 0x4, offset = 0x4, fixed_abs, tag = 'smem constant byte address 0x4 - core index']
  #allocation1 [shape = 'u32[144,128]{1,0:T(1,128)}', space=vmem, size = 0x12000, scoped, tag = 'internal scratch']
  #allocation2 [shape = 'bf16[342,64]{1,0:T(8,128)(2,1)}', space=vmem, size = 0x15800, scoped, tag = 'scratch operand']
  %s0 = inlined_call_operand.vmem [shape: bf16[2,342,32], index: 0, kind: input, shape index: {}]
  %s1 = inlined_call_operand.vmem [shape: f32[288,1], index: 1, kind: input, shape index: {}]
  %s2 = inlined_call_operand.vmem [shape: bf16[288,64], index: 2, kind: input, shape index: {}]
  %s3 = inlined_call_operand.vmem [shape: f32[1,64], index: 3, kind: input, shape index: {}]
  %s4 = inlined_call_operand.vmem [shape: f32[1,64], index: 4, kind: input, shape index: {}]
  %s5 = inlined_call_operand.vmem [shape: bf16[576,64], index: 5, kind: input, shape index: {}]
  %s6 = inlined_call_operand.vmem [shape: f32[1,64], index: 6, kind: input, shape index: {}]
  %s7 = inlined_call_operand.vmem [shape: f32[1,64], index: 7, kind: input, shape index: {}]
  %s8 = inlined_call_operand.vmem [shape: bf16[64,9], index: 8, kind: input, shape index: {}]
  %s9 = inlined_call_operand.vmem [shape: f32[1,9], index: 9, kind: input, shape index: {}]
  %s10 = inlined_call_operand.vmem [shape: f32[2,288,73], index: 10, kind: output, shape index: {}]
  %s11 = sld [smem:[#allocation0]]
  $region73: #{_per_decoder_forward_impl.1} parent=0
    _
  %s13 = ssub.s32 1, %s11
  %s14 = scalar_select 0, %s13, %s11
  loop: start=0, step=1, limit=4
  $region2: #{_per_decoder_forward_impl.1} parent=0 // loop_pre_header
    _
  $region3: #{_per_decoder_forward_impl.1} parent=0 // loop_header
    %s16 = sphi 0, %s20
    %p17 = scmp.ge.s32.totalorder %s16, 4
    %s26 = sphi 0, %s28
    %s29 = sphi 0, %s26
    %s30 = sphi 0, %s29
    %s46 = sphi 0, %s30
    %s50 = sphi 0, %s50
    %s52 = sphi 0, %s50
    %s53 = sphi 0, %s52
    %s67 = sphi 0, %s53
    %s71 = sphi 0, %s71
    %s73 = sphi 0, %s71
    %s74 = sphi 0, %s73
    %s88 = sphi 0, %s74
    %s92 = sphi 0, %s92
    %s94 = sphi 0, %s92
    %s95 = sphi 0, %s94
    %s109 = sphi 0, %s95
    %s113 = sphi 0, %s113
    %s115 = sphi 0, %s113
    %s116 = sphi 0, %s115
    %s130 = sphi 0, %s116
    %s134 = sphi 0, %s134
    %s136 = sphi 0, %s134
    %s137 = sphi 0, %s136
    %s151 = sphi 0, %s137
    %s155 = sphi 0, %s155
    %s157 = sphi 0, %s155
    %s158 = sphi 0, %s157
    %s172 = sphi 0, %s158
    %s176 = sphi 0, %s176
    %s178 = sphi 0, %s176
    %s179 = sphi 0, %s178
    %s193 = sphi 0, %s179
    %s197 = sphi 0, %s197
    %s199 = sphi 0, %s197
    %s200 = sphi 0, %s199
    %s214 = sphi 0, %s200
    %s218 = sphi 0, %s218
    %s220 = sphi 0, %s218
    %s221 = sphi 0, %s220
    %s235 = sphi 0, %s221
    %s241 = sphi 0, %s243
    %s244 = sphi 0, %s241
    %s245 = sphi 0, %s244
    %s261 = sphi 0, %s245
  $region4: #{_per_decoder_forward_impl.1} parent=0 // loop_header_branch
    %19 = sbr.rel (%p17) target = $region8
  $region5: #{_per_decoder_forward_impl.1} parent=0 // loop_body
    %s21 = ssub.s32 %s16, 1
    %s22 = ssub.s32 %s16, 2
    %s23 = sadd.s32 %s16, 1
    %s24 = ssub.s32 %s16, %s23
    %p25 = scmp.eq.s32.totalorder %s24, 0
    %s27 = sadd.s32 %s26, 1
    %s28 = scalar_select %p25, %s26, %s27
    %p31 = pneg %p25
    %p32 = scmp.eq.s32.totalorder %s16, 1
    %p33 = por %p31, %p32
    %p34 = scmp.ne.s32.totalorder %s26, %s29
    %p35 = scmp.eq.s32.totalorder %s16, 0
    %p36 = por %p34, %p35
    %p37 = scmp.ne.s32.totalorder %s26, %s29
    %p38 = scmp.eq.s32.totalorder %s21, 1
    %p39 = por %p37, %p38
    %p40 = scmp.ne.s32.totalorder %s29, %s30
    %p41 = scmp.eq.s32.totalorder %s21, 0
    %p42 = por %p40, %p41
    %p43 = scmp.ne.s32.totalorder %s29, %s30
    %p44 = scmp.eq.s32.totalorder %s22, 1
    %p45 = por %p43, %p44
    %p47 = scmp.ne.s32.totalorder %s30, %s46
    %p48 = scmp.eq.s32.totalorder %s22, 0
    %p49 = por %p47, %p48
    %s51 = sadd.s32 %s50, 1
    %p54 = scmp.eq.s32.totalorder %s16, 1
    %p55 = scmp.ne.s32.totalorder %s50, %s52
    %p56 = scmp.eq.s32.totalorder %s16, 0
    %p57 = por %p55, %p56
    %p58 = scmp.ne.s32.totalorder %s50, %s52
    %p59 = scmp.eq.s32.totalorder %s21, 1
    %p60 = por %p58, %p59
    %p61 = scmp.ne.s32.totalorder %s52, %s53
    %p62 = scmp.eq.s32.totalorder %s21, 0
    %p63 = por %p61, %p62
    %p64 = scmp.ne.s32.totalorder %s52, %s53
    %p65 = scmp.eq.s32.totalorder %s22, 1
    %p66 = por %p64, %p65
    %p68 = scmp.ne.s32.totalorder %s53, %s67
    %p69 = scmp.eq.s32.totalorder %s22, 0
    %p70 = por %p68, %p69
    %s72 = sadd.s32 %s71, 1
    %p75 = scmp.eq.s32.totalorder %s16, 1
    %p76 = scmp.ne.s32.totalorder %s71, %s73
    %p77 = scmp.eq.s32.totalorder %s16, 0
    %p78 = por %p76, %p77
    %p79 = scmp.ne.s32.totalorder %s71, %s73
    %p80 = scmp.eq.s32.totalorder %s21, 1
    %p81 = por %p79, %p80
    %p82 = scmp.ne.s32.totalorder %s73, %s74
    %p83 = scmp.eq.s32.totalorder %s21, 0
    %p84 = por %p82, %p83
    %p85 = scmp.ne.s32.totalorder %s73, %s74
    %p86 = scmp.eq.s32.totalorder %s22, 1
    %p87 = por %p85, %p86
    %p89 = scmp.ne.s32.totalorder %s74, %s88
    %p90 = scmp.eq.s32.totalorder %s22, 0
    %p91 = por %p89, %p90
    %s93 = sadd.s32 %s92, 1
    %p96 = scmp.eq.s32.totalorder %s16, 1
    %p97 = scmp.ne.s32.totalorder %s92, %s94
    %p98 = scmp.eq.s32.totalorder %s16, 0
    %p99 = por %p97, %p98
    %p100 = scmp.ne.s32.totalorder %s92, %s94
    %p101 = scmp.eq.s32.totalorder %s21, 1
    %p102 = por %p100, %p101
    %p103 = scmp.ne.s32.totalorder %s94, %s95
    %p104 = scmp.eq.s32.totalorder %s21, 0
    %p105 = por %p103, %p104
    %p106 = scmp.ne.s32.totalorder %s94, %s95
    %p107 = scmp.eq.s32.totalorder %s22, 1
    %p108 = por %p106, %p107
    %p110 = scmp.ne.s32.totalorder %s95, %s109
    %p111 = scmp.eq.s32.totalorder %s22, 0
    %p112 = por %p110, %p111
    %s114 = sadd.s32 %s113, 1
    %p117 = scmp.eq.s32.totalorder %s16, 1
    %p118 = scmp.ne.s32.totalorder %s113, %s115
    %p119 = scmp.eq.s32.totalorder %s16, 0
    %p120 = por %p118, %p119
    %p121 = scmp.ne.s32.totalorder %s113, %s115
    %p122 = scmp.eq.s32.totalorder %s21, 1
    %p123 = por %p121, %p122
    %p124 = scmp.ne.s32.totalorder %s115, %s116
    %p125 = scmp.eq.s32.totalorder %s21, 0
    %p126 = por %p124, %p125
    %p127 = scmp.ne.s32.totalorder %s115, %s116
    %p128 = scmp.eq.s32.totalorder %s22, 1
    %p129 = por %p127, %p128
    %p131 = scmp.ne.s32.totalorder %s116, %s130
    %p132 = scmp.eq.s32.totalorder %s22, 0
    %p133 = por %p131, %p132
    %s135 = sadd.s32 %s134, 1
    %p138 = scmp.eq.s32.totalorder %s16, 1
    %p139 = scmp.ne.s32.totalorder %s134, %s136
    %p140 = scmp.eq.s32.totalorder %s16, 0
    %p141 = por %p139, %p140
    %p142 = scmp.ne.s32.totalorder %s134, %s136
    %p143 = scmp.eq.s32.totalorder %s21, 1
    %p144 = por %p142, %p143
    %p145 = scmp.ne.s32.totalorder %s136, %s137
    %p146 = scmp.eq.s32.totalorder %s21, 0
    %p147 = por %p145, %p146
    %p148 = scmp.ne.s32.totalorder %s136, %s137
    %p149 = scmp.eq.s32.totalorder %s22, 1
    %p150 = por %p148, %p149
    %p152 = scmp.ne.s32.totalorder %s137, %s151
    %p153 = scmp.eq.s32.totalorder %s22, 0
    %p154 = por %p152, %p153
    %s156 = sadd.s32 %s155, 1
    %p159 = scmp.eq.s32.totalorder %s16, 1
    %p160 = scmp.ne.s32.totalorder %s155, %s157
    %p161 = scmp.eq.s32.totalorder %s16, 0
    %p162 = por %p160, %p161
    %p163 = scmp.ne.s32.totalorder %s155, %s157
    %p164 = scmp.eq.s32.totalorder %s21, 1
    %p165 = por %p163, %p164
    %p166 = scmp.ne.s32.totalorder %s157, %s158
    %p167 = scmp.eq.s32.totalorder %s21, 0
    %p168 = por %p166, %p167
    %p169 = scmp.ne.s32.totalorder %s157, %s158
    %p170 = scmp.eq.s32.totalorder %s22, 1
    %p171 = por %p169, %p170
    %p173 = scmp.ne.s32.totalorder %s158, %s172
    %p174 = scmp.eq.s32.totalorder %s22, 0
    %p175 = por %p173, %p174
    %s177 = sadd.s32 %s176, 1
    %p180 = scmp.eq.s32.totalorder %s16, 1
    %p181 = scmp.ne.s32.totalorder %s176, %s178
    %p182 = scmp.eq.s32.totalorder %s16, 0
    %p183 = por %p181, %p182
    %p184 = scmp.ne.s32.totalorder %s176, %s178
    %p185 = scmp.eq.s32.totalorder %s21, 1
    %p186 = por %p184, %p185
    %p187 = scmp.ne.s32.totalorder %s178, %s179
    %p188 = scmp.eq.s32.totalorder %s21, 0
    %p189 = por %p187, %p188
    %p190 = scmp.ne.s32.totalorder %s178, %s179
    %p191 = scmp.eq.s32.totalorder %s22, 1
    %p192 = por %p190, %p191
    %p194 = scmp.ne.s32.totalorder %s179, %s193
    %p195 = scmp.eq.s32.totalorder %s22, 0
    %p196 = por %p194, %p195
    %s198 = sadd.s32 %s197, 1
    %p201 = scmp.eq.s32.totalorder %s16, 1
    %p202 = scmp.ne.s32.totalorder %s197, %s199
    %p203 = scmp.eq.s32.totalorder %s16, 0
    %p204 = por %p202, %p203
    %p205 = scmp.ne.s32.totalorder %s197, %s199
    %p206 = scmp.eq.s32.totalorder %s21, 1
    %p207 = por %p205, %p206
    %p208 = scmp.ne.s32.totalorder %s199, %s200
    %p209 = scmp.eq.s32.totalorder %s21, 0
    %p210 = por %p208, %p209
    %p211 = scmp.ne.s32.totalorder %s199, %s200
    %p212 = scmp.eq.s32.totalorder %s22, 1
    %p213 = por %p211, %p212
    %p215 = scmp.ne.s32.totalorder %s200, %s214
    %p216 = scmp.eq.s32.totalorder %s22, 0
    %p217 = por %p215, %p216
    %s219 = sadd.s32 %s218, 1
    %p222 = scmp.eq.s32.totalorder %s16, 1
    %p223 = scmp.ne.s32.totalorder %s218, %s220
    %p224 = scmp.eq.s32.totalorder %s16, 0
    %p225 = por %p223, %p224
    %p226 = scmp.ne.s32.totalorder %s218, %s220
    %p227 = scmp.eq.s32.totalorder %s21, 1
    %p228 = por %p226, %p227
    %p229 = scmp.ne.s32.totalorder %s220, %s221
    %p230 = scmp.eq.s32.totalorder %s21, 0
    %p231 = por %p229, %p230
    %p232 = scmp.ne.s32.totalorder %s220, %s221
    %p233 = scmp.eq.s32.totalorder %s22, 1
    %p234 = por %p232, %p233
    %p236 = scmp.ne.s32.totalorder %s221, %s235
    %p237 = scmp.eq.s32.totalorder %s22, 0
    %p238 = por %p236, %p237
    %s239 = ssub.s32 %s16, %s23
    %p240 = scmp.eq.s32.totalorder %s239, 0
    %s242 = sadd.s32 %s241, 1
    %s243 = scalar_select %p240, %s241, %s242
    %p246 = pneg %p240
    %p247 = scmp.eq.s32.totalorder %s16, 1
    %p248 = por %p246, %p247
    %p249 = scmp.ne.s32.totalorder %s241, %s244
    %p250 = scmp.eq.s32.totalorder %s16, 0
    %p251 = por %p249, %p250
    %p252 = scmp.ne.s32.totalorder %s241, %s244
    %p253 = scmp.eq.s32.totalorder %s21, 1
    %p254 = por %p252, %p253
    %p255 = scmp.ne.s32.totalorder %s244, %s245
    %p256 = scmp.eq.s32.totalorder %s21, 0
    %p257 = por %p255, %p256
    %p258 = scmp.ne.s32.totalorder %s244, %s245
    %p259 = scmp.eq.s32.totalorder %s22, 1
    %p260 = por %p258, %p259
    %p262 = scmp.ne.s32.totalorder %s245, %s261
    %p263 = scmp.eq.s32.totalorder %s22, 0
    %p264 = por %p262, %p263
    %p265 = scmp.le.s32.totalorder 1, %s16
    %p266 = scmp.lt.s32.totalorder %s16, 3
    %p267 = pnand %p265, %p266
    %p268 = pneg %p267
    // Predicated region
    $region9: #{_per_decoder_forward_impl.1} parent=5 // pred_check
      _
    $region10: #{_per_decoder_forward_impl.1} parent=5 // pred_check_branch
      %270 = sbr.rel (%p267) target = $region12
    $region11: #{_per_decoder_forward_impl.1} parent=5 // pred_region
      %s271 = ssub.s32 %s16, 1
      // Predicated region
      $region13: #{_per_decoder_forward_impl.1} parent=11 // pred_check
        %p272 = pneg %p63
      $region14: #{_per_decoder_forward_impl.1} parent=11 // pred_check_branch
        %274 = sbr.rel (%p272) target = $region16
      $region15: #{_per_decoder_forward_impl.1} parent=11 // pred_region
        _
      $region16: #{_per_decoder_forward_impl.1} parent=11 // pred_fallthru
        _
      // Predicated region
      $region17: #{_per_decoder_forward_impl.1} parent=11 // pred_check
        %p275 = pneg %p84
      $region18: #{_per_decoder_forward_impl.1} parent=11 // pred_check_branch
        %277 = sbr.rel (%p275) target = $region20
      $region19: #{_per_decoder_forward_impl.1} parent=11 // pred_region
        _
      $region20: #{_per_decoder_forward_impl.1} parent=11 // pred_fallthru
        _
      // Predicated region
      $region21: #{_per_decoder_forward_impl.1} parent=11 // pred_check
        %p278 = pneg %p105
      $region22: #{_per_decoder_forward_impl.1} parent=11 // pred_check_branch
        %280 = sbr.rel (%p278) target = $region24
      $region23: #{_per_decoder_forward_impl.1} parent=11 // pred_region
        _
      $region24: #{_per_decoder_forward_impl.1} parent=11 // pred_fallthru
        _
      // Predicated region
      $region25: #{_per_decoder_forward_impl.1} parent=11 // pred_check
        %p281 = pneg %p126
      $region26: #{_per_decoder_forward_impl.1} parent=11 // pred_check_branch
        %283 = sbr.rel (%p281) target = $region28
      $region27: #{_per_decoder_forward_impl.1} parent=11 // pred_region
        _
      $region28: #{_per_decoder_forward_impl.1} parent=11 // pred_fallthru
        _
      // Predicated region
      $region29: #{_per_decoder_forward_impl.1} parent=11 // pred_check
        %p284 = pneg %p147
      $region30: #{_per_decoder_forward_impl.1} parent=11 // pred_check_branch
        %286 = sbr.rel (%p284) target = $region32
      $region31: #{_per_decoder_forward_impl.1} parent=11 // pred_region
        _
      $region32: #{_per_decoder_forward_impl.1} parent=11 // pred_fallthru
        _
      // Predicated region
      $region33: #{_per_decoder_forward_impl.1} parent=11 // pred_check
        %p287 = pneg %p168
      $region34: #{_per_decoder_forward_impl.1} parent=11 // pred_check_branch
        %289 = sbr.rel (%p287) target = $region36
      $region35: #{_per_decoder_forward_impl.1} parent=11 // pred_region
        _
      $region36: #{_per_decoder_forward_impl.1} parent=11 // pred_fallthru
        _
      // Predicated region
      $region37: #{_per_decoder_forward_impl.1} parent=11 // pred_check
        %p290 = pneg %p189
      $region38: #{_per_decoder_forward_impl.1} parent=11 // pred_check_branch
        %292 = sbr.rel (%p290) target = $region40
      $region39: #{_per_decoder_forward_impl.1} parent=11 // pred_region
        _
      $region40: #{_per_decoder_forward_impl.1} parent=11 // pred_fallthru
        _
      // Predicated region
      $region41: #{_per_decoder_forward_impl.1} parent=11 // pred_check
        %p293 = pneg %p210
      $region42: #{_per_decoder_forward_impl.1} parent=11 // pred_check_branch
        %295 = sbr.rel (%p293) target = $region44
      $region43: #{_per_decoder_forward_impl.1} parent=11 // pred_region
        _
      $region44: #{_per_decoder_forward_impl.1} parent=11 // pred_fallthru
        _
      // Predicated region
      $region45: #{_per_decoder_forward_impl.1} parent=11 // pred_check
        %p296 = pneg %p231
      $region46: #{_per_decoder_forward_impl.1} parent=11 // pred_check_branch
        %298 = sbr.rel (%p296) target = $region48
      $region47: #{_per_decoder_forward_impl.1} parent=11 // pred_region
        _
      $region48: #{_per_decoder_forward_impl.1} parent=11 // pred_fallthru
        _
    $region12: #{_per_decoder_forward_impl.1} parent=5 // pred_fallthru
      _
    %p299 = scmp.lt.s32.totalorder %s16, 2
    // Predicated region
    $region49: #{_per_decoder_forward_impl.1} parent=5 // pred_check
      %p300 = pneg %p299
    $region50: #{_per_decoder_forward_impl.1} parent=5 // pred_check_branch
      %302 = sbr.rel (%p300) target = $region52
    $region51: #{_per_decoder_forward_impl.1} parent=5 // pred_region
      // Predicated region
      $region53: #{_per_decoder_forward_impl.1} parent=51 // pred_check
        %p303 = pneg %p36
      $region54: #{_per_decoder_forward_impl.1} parent=51 // pred_check_branch
        %305 = sbr.rel (%p303) target = $region56
      $region55: #{_per_decoder_forward_impl.1} parent=51 // pred_region
        %p306 = scmp.lt.s32.totalorder %s16, 1
        %s307 = scalar_select %p306, %s16, 1
        %s308 = smul.addr %s307, 43
        %s309 = smul.addr %s308, 4
        %s310 = scalar_lea.vmem %s0, %s309
      $region56: #{_per_decoder_forward_impl.1} parent=51 // pred_fallthru
        _
    $region52: #{_per_decoder_forward_impl.1} parent=5 // pred_fallthru
      _
    %p311 = scmp.le.s32.totalorder 1, %s16
    %p312 = scmp.lt.s32.totalorder %s16, 3
    %p313 = pnand %p311, %p312
    %p314 = pneg %p313
    // Predicated region
    $region57: #{_per_decoder_forward_impl.1} parent=5 // pred_check
      _
    $region58: #{_per_decoder_forward_impl.1} parent=5 // pred_check_branch
      %316 = sbr.rel (%p313) target = $region60
    $region59: #{_per_decoder_forward_impl.1} parent=5 // pred_region
      %s317 = ssub.s32 %s16, 1
      %p318 = scmp.lt.s32.totalorder %s21, 1
      %s319 = scalar_select %p318, %s21, 1
      %s320 = smul.addr %s319, 43
      %s321 = smul.addr %s320, 4
      %s322 = scalar_lea.vmem %s0, %s321
      %p323 = pneg %p42
      %p324 = pneg %p39
      %p325 = pneg %p63
      %p326 = pneg %p60
      %p327 = pneg %p84
      %p328 = pneg %p81
      %p329 = pneg %p105
      %p330 = pneg %p102
      %p331 = pneg %p126
      %p332 = pneg %p123
      %p333 = pneg %p147
      %p334 = pneg %p144
      %p335 = pneg %p168
      %p336 = pneg %p165
      %p337 = pneg %p189
      %p338 = pneg %p186
      %p339 = pneg %p210
      %p340 = pneg %p207
      %p341 = pneg %p231
      %p342 = pneg %p228
      %p343 = pneg %p257
      %p344 = pneg %p254
      %p345 = scmp.lt.s32.totalorder %s21, 1
      %s346 = scalar_select %p345, %s21, 1
      %s347 = smul.addr %s346, 36
      %s348 = smul.addr %s347, 8
      %s349 = scalar_lea.vmem %s10, %s348
      %p350 = scmp.lt.s32.totalorder %s21, 1
      %s351 = scalar_select %p350, %s21, 1
      %s352 = smul.addr %s351, 43
      %s353 = smul.addr %s352, 4
      %s354 = scalar_lea.vmem %s0, %s353
      %p355 = scmp.lt.s32.totalorder %s21, 1
      %s356 = scalar_select %p355, %s21, 1
      %s357 = smul.addr %s356, 36
      %s358 = smul.addr %s357, 8
      %s359 = scalar_lea.vmem %s10, %s358
      %v361 = vld [vmem:[%s354] sm:$0xf]
      %v362 = vld [vmem:[%s354 + $0x4] sm:$0xf]
      %v363 = vld [vmem:[%s354 + $0x8] sm:$0xf]
      %v364 = vld [vmem:[%s354 + $0xc] sm:$0xf]
      %v365 = vld [vmem:[%s354 + $0x10] sm:$0xf]
      %v366 = vld [vmem:[%s354 + $0x14] sm:$0xf]
      %v367 = vld [vmem:[%s354 + $0x18] sm:$0xf]
      %v368 = vld [vmem:[%s354 + $0x1c] sm:$0xf]
      %v369 = vld [vmem:[%s354 + $0x20] sm:$0xf]
      %v370 = vld [vmem:[%s354 + $0x24] sm:$0xf]
      %v371 = vld [vmem:[%s354 + $0x28] sm:$0xf]
      %v372 = vld [vmem:[%s354 + $0x2c] sm:$0xf]
      %v373 = vld [vmem:[%s354 + $0x30] sm:$0xf]
      %v374 = vld [vmem:[%s354 + $0x34] sm:$0xf]
      %v375 = vld [vmem:[%s354 + $0x38] sm:$0xf]
      %v376 = vld [vmem:[%s354 + $0x3c] sm:$0xf]
      %v377 = vld [vmem:[%s354 + $0x40] sm:$0xf]
      %v378 = vld [vmem:[%s354 + $0x44] sm:$0xf]
      %v379 = vld [vmem:[%s354 + $0x48] sm:$0xf]
      %v380 = vld [vmem:[%s354 + $0x4c] sm:$0xf]
      %v381 = vld [vmem:[%s354 + $0x50] sm:$0xf]
      %v382 = vld [vmem:[%s354 + $0x54] sm:$0xf]
      %v383 = vld [vmem:[%s354 + $0x58] sm:$0xf]
      %v384 = vld [vmem:[%s354 + $0x5c] sm:$0xf]
      %v385 = vld [vmem:[%s354 + $0x60] sm:$0xf]
      %v386 = vld [vmem:[%s354 + $0x64] sm:$0xf]
      %v387 = vld [vmem:[%s354 + $0x68] sm:$0xf]
      %v388 = vld [vmem:[%s354 + $0x6c] sm:$0xf]
      %v389 = vld [vmem:[%s354 + $0x70] sm:$0xf]
      %v390 = vld [vmem:[%s354 + $0x74] sm:$0xf]
      %v391 = vld [vmem:[%s354 + $0x78] sm:$0xf]
      %v392 = vld [vmem:[%s354 + $0x7c] sm:$0xf]
      %v393 = vld [vmem:[%s354 + $0x80] sm:$0xf]
      %v394 = vld [vmem:[%s354 + $0x84] sm:$0xf]
      %v395 = vld [vmem:[%s354 + $0x88] sm:$0xf]
      %v396 = vld [vmem:[%s354 + $0x8c] sm:$0xf]
      %v397 = vld [vmem:[%s354 + $0x90] sm:$0xf]
      %v398 = vld [vmem:[%s354 + $0x94] sm:$0xf]
      %v399 = vld [vmem:[%s354 + $0x98] sm:$0xf]
      %v400 = vld [vmem:[%s354 + $0x9c] sm:$0xf]
      %v401 = vld [vmem:[%s354 + $0xa0] sm:$0xf]
      %v438 = vunpack.c.l.b16 %v361
      %v439 = vunpack.c.l.b16 %v362
      %v440 = vunpack.c.l.b16 %v363
      %v441 = vunpack.c.l.b16 %v364
      %v442 = vunpack.c.l.b16 %v365
      %v443 = vunpack.c.l.b16 %v366
      %v444 = vunpack.c.l.b16 %v367
      %v445 = vunpack.c.l.b16 %v368
      %v446 = vunpack.c.l.b16 %v369
      %v447 = vunpack.c.l.b16 %v370
      %v448 = vunpack.c.l.b16 %v371
      %v449 = vunpack.c.l.b16 %v372
      %v450 = vunpack.c.l.b16 %v373
      %v451 = vunpack.c.l.b16 %v374
      %v452 = vunpack.c.l.b16 %v375
      %v453 = vunpack.c.l.b16 %v376
      %v454 = vunpack.c.l.b16 %v377
      %v455 = vunpack.c.l.b16 %v378
      %v456 = vunpack.c.l.b16 %v379
      %v457 = vunpack.c.l.b16 %v380
      %v458 = vunpack.c.l.b16 %v381
      %v459 = vunpack.c.l.b16 %v382
      %v460 = vunpack.c.l.b16 %v383
      %v461 = vunpack.c.l.b16 %v384
      %v462 = vunpack.c.l.b16 %v385
      %v463 = vunpack.c.l.b16 %v386
      %v464 = vunpack.c.l.b16 %v387
      %v465 = vunpack.c.l.b16 %v388
      %v466 = vunpack.c.l.b16 %v389
      %v467 = vunpack.c.l.b16 %v390
      %v468 = vunpack.c.l.b16 %v391
      %v469 = vunpack.c.l.b16 %v392
      %v470 = vunpack.c.l.b16 %v393
      %v471 = vunpack.c.l.b16 %v394
      %v472 = vunpack.c.l.b16 %v395
      %v473 = vunpack.c.l.b16 %v396
      %v474 = vpack.c.b16 %v439, %v438
      %v475 = vpack.c.b16 %v441, %v440
      %v476 = vpack.c.b16 %v443, %v442
      %v477 = vpack.c.b16 %v445, %v444
      %v478 = vpack.c.b16 %v447, %v446
      %v479 = vpack.c.b16 %v449, %v448
      %v480 = vpack.c.b16 %v451, %v450
      %v481 = vpack.c.b16 %v453, %v452
      %v482 = vpack.c.b16 %v455, %v454
      %v483 = vpack.c.b16 %v457, %v456
      %v484 = vpack.c.b16 %v459, %v458
      %v485 = vpack.c.b16 %v461, %v460
      %v486 = vpack.c.b16 %v463, %v462
      %v487 = vpack.c.b16 %v465, %v464
      %v488 = vpack.c.b16 %v467, %v466
      %v489 = vpack.c.b16 %v469, %v468
      %v490 = vpack.c.b16 %v471, %v470
      %v491 = vpack.c.b16 %v473, %v472
      %v493 = vunpack.c.l.b16 %v397
      %v494 = vpack.c.b16 %v493, %v493
      %vm495 = vsmask.f32 7424
      %v497 = vshrl.u32 %v474, 16
      %v499 = vshll.u32 %v474, 16
      %v501 = vrot.slane %v499, 1
      %v502 = vor.u32 %v497, %v501
      %v504 = vshll.u32 %v475, 16
      %v506 = vrot.slane %v504, 1
      %v507 = vsel %vm495, %v502, %v506
      %v508 = vshrl.u32 %v475, 16
      %v510 = vor.u32 %v508, %v506
      %v512 = vshll.u32 %v476, 16
      %v514 = vrot.slane %v512, 1
      %v515 = vsel %vm495, %v510, %v514
      %v516 = vshrl.u32 %v476, 16
      %v518 = vor.u32 %v516, %v514
      %v520 = vshll.u32 %v477, 16
      %v522 = vrot.slane %v520, 1
      %v523 = vsel %vm495, %v518, %v522
      %v524 = vshrl.u32 %v477, 16
      %v526 = vor.u32 %v524, %v522
      %v528 = vshll.u32 %v478, 16
      %v530 = vrot.slane %v528, 1
      %v531 = vsel %vm495, %v526, %v530
      %v532 = vshrl.u32 %v478, 16
      %v534 = vor.u32 %v532, %v530
      %v536 = vshll.u32 %v479, 16
      %v538 = vrot.slane %v536, 1
      %v539 = vsel %vm495, %v534, %v538
      %v540 = vshrl.u32 %v479, 16
      %v542 = vor.u32 %v540, %v538
      %v544 = vshll.u32 %v480, 16
      %v546 = vrot.slane %v544, 1
      %v547 = vsel %vm495, %v542, %v546
      %v548 = vshrl.u32 %v480, 16
      %v550 = vor.u32 %v548, %v546
      %v552 = vshll.u32 %v481, 16
      %v554 = vrot.slane %v552, 1
      %v555 = vsel %vm495, %v550, %v554
      %v556 = vshrl.u32 %v481, 16
      %v558 = vor.u32 %v556, %v554
      %v560 = vshll.u32 %v482, 16
      %v562 = vrot.slane %v560, 1
      %v563 = vsel %vm495, %v558, %v562
      %v564 = vshrl.u32 %v482, 16
      %v566 = vor.u32 %v564, %v562
      %v568 = vshll.u32 %v483, 16
      %v570 = vrot.slane %v568, 1
      %v571 = vsel %vm495, %v566, %v570
      %v572 = vshrl.u32 %v483, 16
      %v574 = vor.u32 %v572, %v570
      %v576 = vshll.u32 %v484, 16
      %v578 = vrot.slane %v576, 1
      %v579 = vsel %vm495, %v574, %v578
      %v580 = vshrl.u32 %v484, 16
      %v582 = vor.u32 %v580, %v578
      %v584 = vshll.u32 %v485, 16
      %v586 = vrot.slane %v584, 1
      %v587 = vsel %vm495, %v582, %v586
      %v588 = vshrl.u32 %v485, 16
      %v590 = vor.u32 %v588, %v586
      %v592 = vshll.u32 %v486, 16
      %v594 = vrot.slane %v592, 1
      %v595 = vsel %vm495, %v590, %v594
      %v596 = vshrl.u32 %v486, 16
      %v598 = vor.u32 %v596, %v594
      %v600 = vshll.u32 %v487, 16
      %v602 = vrot.slane %v600, 1
      %v603 = vsel %vm495, %v598, %v602
      %v604 = vshrl.u32 %v487, 16
      %v606 = vor.u32 %v604, %v602
      %v608 = vshll.u32 %v488, 16
      %v610 = vrot.slane %v608, 1
      %v611 = vsel %vm495, %v606, %v610
      %v612 = vshrl.u32 %v488, 16
      %v614 = vor.u32 %v612, %v610
      %v616 = vshll.u32 %v489, 16
      %v618 = vrot.slane %v616, 1
      %v619 = vsel %vm495, %v614, %v618
      %v620 = vshrl.u32 %v489, 16
      %v622 = vor.u32 %v620, %v618
      %v624 = vshll.u32 %v490, 16
      %v626 = vrot.slane %v624, 1
      %v627 = vsel %vm495, %v622, %v626
      %v628 = vshrl.u32 %v490, 16
      %v630 = vor.u32 %v628, %v626
      %v632 = vshll.u32 %v491, 16
      %v634 = vrot.slane %v632, 1
      %v635 = vsel %vm495, %v630, %v634
      %v636 = vshrl.u32 %v491, 16
      %v638 = vor.u32 %v636, %v634
      %v640 = vshll.u32 %v494, 16
      %v642 = vrot.slane %v640, 1
      %v643 = vsel %vm495, %v638, %v642
      %644 = vrot.lane.b32.xlu0 %v507, 32
      %v645 = vpop.permute.xlu0 %644
      %646 = vrot.lane.b32.xlu0 %v515, 32
      %v647 = vpop.permute.xlu0 %646
      %648 = vrot.lane.b32.xlu0 %v523, 32
      %v649 = vpop.permute.xlu0 %648
      %650 = vrot.lane.b32.xlu0 %v531, 32
      %v651 = vpop.permute.xlu0 %650
      %652 = vrot.lane.b32.xlu0 %v539, 32
      %v653 = vpop.permute.xlu0 %652
      %654 = vrot.lane.b32.xlu0 %v547, 32
      %v655 = vpop.permute.xlu0 %654
      %656 = vrot.lane.b32.xlu0 %v555, 32
      %v657 = vpop.permute.xlu0 %656
      %658 = vrot.lane.b32.xlu0 %v563, 32
      %v659 = vpop.permute.xlu0 %658
      %660 = vrot.lane.b32.xlu0 %v571, 32
      %v661 = vpop.permute.xlu0 %660
      %662 = vrot.lane.b32.xlu0 %v579, 32
      %v663 = vpop.permute.xlu0 %662
      %664 = vrot.lane.b32.xlu0 %v587, 32
      %v665 = vpop.permute.xlu0 %664
      %666 = vrot.lane.b32.xlu0 %v595, 32
      %v667 = vpop.permute.xlu0 %666
      %668 = vrot.lane.b32.xlu0 %v603, 32
      %v669 = vpop.permute.xlu0 %668
      %670 = vrot.lane.b32.xlu0 %v611, 32
      %v671 = vpop.permute.xlu0 %670
      %672 = vrot.lane.b32.xlu0 %v619, 32
      %v673 = vpop.permute.xlu0 %672
      %674 = vrot.lane.b32.xlu0 %v627, 32
      %v675 = vpop.permute.xlu0 %674
      %676 = vrot.lane.b32.xlu0 %v635, 32
      %v677 = vpop.permute.xlu0 %676
      %678 = vrot.lane.b32.xlu0 %v643, 32
      %v679 = vpop.permute.xlu0 %678
      %vm680 = vcmask 1046528
      %v681 = vrot.slane %v474, 1
      %v682 = vrot.slane %v475, 1
      %v683 = vsel %vm680, %v681, %v682
      %v684 = vrot.slane %v476, 1
      %v685 = vsel %vm680, %v682, %v684
      %v686 = vrot.slane %v477, 1
      %v687 = vsel %vm680, %v684, %v686
      %v688 = vrot.slane %v478, 1
      %v689 = vsel %vm680, %v686, %v688
      %v690 = vrot.slane %v479, 1
      %v691 = vsel %vm680, %v688, %v690
      %v692 = vrot.slane %v480, 1
      %v693 = vsel %vm680, %v690, %v692
      %v694 = vrot.slane %v481, 1
      %v695 = vsel %vm680, %v692, %v694
      %v696 = vrot.slane %v482, 1
      %v697 = vsel %vm680, %v694, %v696
      %v698 = vrot.slane %v483, 1
      %v699 = vsel %vm680, %v696, %v698
      %v700 = vrot.slane %v484, 1
      %v701 = vsel %vm680, %v698, %v700
      %v702 = vrot.slane %v485, 1
      %v703 = vsel %vm680, %v700, %v702
      %v704 = vrot.slane %v486, 1
      %v705 = vsel %vm680, %v702, %v704
      %v706 = vrot.slane %v487, 1
      %v707 = vsel %vm680, %v704, %v706
      %v708 = vrot.slane %v488, 1
      %v709 = vsel %vm680, %v706, %v708
      %v710 = vrot.slane %v489, 1
      %v711 = vsel %vm680, %v708, %v710
      %v712 = vrot.slane %v490, 1
      %v713 = vsel %vm680, %v710, %v712
      %v714 = vrot.slane %v491, 1
      %v715 = vsel %vm680, %v712, %v714
      %v716 = vrot.slane %v494, 1
      %v717 = vsel %vm680, %v714, %v716
      %718 = vrot.lane.b32.xlu0 %v683, 64
      %v719 = vpop.permute.xlu0 %718
      %720 = vrot.lane.b32.xlu0 %v685, 64
      %v721 = vpop.permute.xlu0 %720
      %722 = vrot.lane.b32.xlu0 %v687, 64
      %v723 = vpop.permute.xlu0 %722
      %724 = vrot.lane.b32.xlu0 %v689, 64
      %v725 = vpop.permute.xlu0 %724
      %726 = vrot.lane.b32.xlu0 %v691, 64
      %v727 = vpop.permute.xlu0 %726
      %728 = vrot.lane.b32.xlu0 %v693, 64
      %v729 = vpop.permute.xlu0 %728
      %730 = vrot.lane.b32.xlu0 %v695, 64
      %v731 = vpop.permute.xlu0 %730
      %732 = vrot.lane.b32.xlu0 %v697, 64
      %v733 = vpop.permute.xlu0 %732
      %734 = vrot.lane.b32.xlu0 %v699, 64
      %v735 = vpop.permute.xlu0 %734
      %736 = vrot.lane.b32.xlu0 %v701, 64
      %v737 = vpop.permute.xlu0 %736
      %738 = vrot.lane.b32.xlu0 %v703, 64
      %v739 = vpop.permute.xlu0 %738
      %740 = vrot.lane.b32.xlu0 %v705, 64
      %v741 = vpop.permute.xlu0 %740
      %742 = vrot.lane.b32.xlu0 %v707, 64
      %v743 = vpop.permute.xlu0 %742
      %744 = vrot.lane.b32.xlu0 %v709, 64
      %v745 = vpop.permute.xlu0 %744
      %746 = vrot.lane.b32.xlu0 %v711, 64
      %v747 = vpop.permute.xlu0 %746
      %748 = vrot.lane.b32.xlu0 %v713, 64
      %v749 = vpop.permute.xlu0 %748
      %750 = vrot.lane.b32.xlu0 %v715, 64
      %v751 = vpop.permute.xlu0 %750
      %752 = vrot.lane.b32.xlu0 %v717, 64
      %v753 = vpop.permute.xlu0 %752
      %v756 = vunpack.c.l.b16 %v398
      %v757 = vunpack.c.l.b16 %v399
      %v758 = vpack.c.b16 %v756, %v493
      %v759 = vpack.c.b16 %v757, %v757
      %v760 = vrot.slane %v758, 1
      %v761 = vsel %vm680, %v714, %v760
      %v762 = vrot.slane %v759, 1
      %v763 = vsel %vm680, %v760, %v762
      %764 = vrot.lane.b32.xlu0 %v685, 96
      %v765 = vpop.permute.xlu0 %764
      %766 = vrot.lane.b32.xlu0 %v687, 96
      %v767 = vpop.permute.xlu0 %766
      %768 = vrot.lane.b32.xlu0 %v689, 96
      %v769 = vpop.permute.xlu0 %768
      %770 = vrot.lane.b32.xlu0 %v691, 96
      %v771 = vpop.permute.xlu0 %770
      %772 = vrot.lane.b32.xlu0 %v693, 96
      %v773 = vpop.permute.xlu0 %772
      %774 = vrot.lane.b32.xlu0 %v695, 96
      %v775 = vpop.permute.xlu0 %774
      %776 = vrot.lane.b32.xlu0 %v697, 96
      %v777 = vpop.permute.xlu0 %776
      %778 = vrot.lane.b32.xlu0 %v699, 96
      %v779 = vpop.permute.xlu0 %778
      %780 = vrot.lane.b32.xlu0 %v701, 96
      %v781 = vpop.permute.xlu0 %780
      %782 = vrot.lane.b32.xlu0 %v703, 96
      %v783 = vpop.permute.xlu0 %782
      %784 = vrot.lane.b32.xlu0 %v705, 96
      %v785 = vpop.permute.xlu0 %784
      %786 = vrot.lane.b32.xlu0 %v707, 96
      %v787 = vpop.permute.xlu0 %786
      %788 = vrot.lane.b32.xlu0 %v709, 96
      %v789 = vpop.permute.xlu0 %788
      %790 = vrot.lane.b32.xlu0 %v711, 96
      %v791 = vpop.permute.xlu0 %790
      %792 = vrot.lane.b32.xlu0 %v713, 96
      %v793 = vpop.permute.xlu0 %792
      %794 = vrot.lane.b32.xlu0 %v715, 96
      %v795 = vpop.permute.xlu0 %794
      %796 = vrot.lane.b32.xlu0 %v761, 96
      %v797 = vpop.permute.xlu0 %796
      %798 = vrot.lane.b32.xlu0 %v763, 96
      %v799 = vpop.permute.xlu0 %798
      %vm800 = vsmask.f32 6400
      %v801 = vrot.slane %v508, 1
      %v802 = vrot.slane %v504, 2
      %v803 = vor.u32 %v801, %v802
      %v804 = vrot.slane %v516, 1
      %v805 = vrot.slane %v512, 2
      %v806 = vor.u32 %v804, %v805
      %v807 = vsel %vm800, %v803, %v806
      %v808 = vrot.slane %v524, 1
      %v809 = vrot.slane %v520, 2
      %v810 = vor.u32 %v808, %v809
      %v811 = vsel %vm800, %v806, %v810
      %v812 = vrot.slane %v532, 1
      %v813 = vrot.slane %v528, 2
      %v814 = vor.u32 %v812, %v813
      %v815 = vsel %vm800, %v810, %v814
      %v816 = vrot.slane %v540, 1
      %v817 = vrot.slane %v536, 2
      %v818 = vor.u32 %v816, %v817
      %v819 = vsel %vm800, %v814, %v818
      %v820 = vrot.slane %v548, 1
      %v821 = vrot.slane %v544, 2
      %v822 = vor.u32 %v820, %v821
      %v823 = vsel %vm800, %v818, %v822
      %v824 = vrot.slane %v556, 1
      %v825 = vrot.slane %v552, 2
      %v826 = vor.u32 %v824, %v825
      %v827 = vsel %vm800, %v822, %v826
      %v828 = vrot.slane %v564, 1
      %v829 = vrot.slane %v560, 2
      %v830 = vor.u32 %v828, %v829
      %v831 = vsel %vm800, %v826, %v830
      %v832 = vrot.slane %v572, 1
      %v833 = vrot.slane %v568, 2
      %v834 = vor.u32 %v832, %v833
      %v835 = vsel %vm800, %v830, %v834
      %v836 = vrot.slane %v580, 1
      %v837 = vrot.slane %v576, 2
      %v838 = vor.u32 %v836, %v837
      %v839 = vsel %vm800, %v834, %v838
      %v840 = vrot.slane %v588, 1
      %v841 = vrot.slane %v584, 2
      %v842 = vor.u32 %v840, %v841
      %v843 = vsel %vm800, %v838, %v842
      %v844 = vrot.slane %v596, 1
      %v845 = vrot.slane %v592, 2
      %v846 = vor.u32 %v844, %v845
      %v847 = vsel %vm800, %v842, %v846
      %v848 = vrot.slane %v604, 1
      %v849 = vrot.slane %v600, 2
      %v850 = vor.u32 %v848, %v849
      %v851 = vsel %vm800, %v846, %v850
      %v852 = vrot.slane %v612, 1
      %v853 = vrot.slane %v608, 2
      %v854 = vor.u32 %v852, %v853
      %v855 = vsel %vm800, %v850, %v854
      %v856 = vrot.slane %v620, 1
      %v857 = vrot.slane %v616, 2
      %v858 = vor.u32 %v856, %v857
      %v859 = vsel %vm800, %v854, %v858
      %v860 = vrot.slane %v628, 1
      %v861 = vrot.slane %v624, 2
      %v862 = vor.u32 %v860, %v861
      %v863 = vsel %vm800, %v858, %v862
      %v864 = vrot.slane %v636, 1
      %v865 = vrot.slane %v632, 2
      %v866 = vor.u32 %v864, %v865
      %v867 = vsel %vm800, %v862, %v866
      %v869 = vshrl.u32 %v758, 16
      %v871 = vrot.slane %v869, 1
      %v872 = vshll.u32 %v758, 16
      %v874 = vrot.slane %v872, 2
      %v875 = vor.u32 %v871, %v874
      %v876 = vsel %vm800, %v866, %v875
      %v878 = vshrl.u32 %v759, 16
      %v880 = vrot.slane %v878, 1
      %v881 = vshll.u32 %v759, 16
      %v883 = vrot.slane %v881, 2
      %v884 = vor.u32 %v880, %v883
      %v885 = vsel %vm800, %v875, %v884
      %vm886 = vcmask 1045504
      %v887 = vrot.slane %v475, 2
      %v888 = vrot.slane %v476, 2
      %v889 = vsel %vm886, %v887, %v888
      %v890 = vrot.slane %v477, 2
      %v891 = vsel %vm886, %v888, %v890
      %v892 = vrot.slane %v478, 2
      %v893 = vsel %vm886, %v890, %v892
      %v894 = vrot.slane %v479, 2
      %v895 = vsel %vm886, %v892, %v894
      %v896 = vrot.slane %v480, 2
      %v897 = vsel %vm886, %v894, %v896
      %v898 = vrot.slane %v481, 2
      %v899 = vsel %vm886, %v896, %v898
      %v900 = vrot.slane %v482, 2
      %v901 = vsel %vm886, %v898, %v900
      %v902 = vrot.slane %v483, 2
      %v903 = vsel %vm886, %v900, %v902
      %v904 = vrot.slane %v484, 2
      %v905 = vsel %vm886, %v902, %v904
      %v906 = vrot.slane %v485, 2
      %v907 = vsel %vm886, %v904, %v906
      %v908 = vrot.slane %v486, 2
      %v909 = vsel %vm886, %v906, %v908
      %v910 = vrot.slane %v487, 2
      %v911 = vsel %vm886, %v908, %v910
      %v912 = vrot.slane %v488, 2
      %v913 = vsel %vm886, %v910, %v912
      %v914 = vrot.slane %v489, 2
      %v915 = vsel %vm886, %v912, %v914
      %v916 = vrot.slane %v490, 2
      %v917 = vsel %vm886, %v914, %v916
      %v918 = vrot.slane %v491, 2
      %v919 = vsel %vm886, %v916, %v918
      %v920 = vrot.slane %v758, 2
      %v921 = vsel %vm886, %v918, %v920
      %v922 = vrot.slane %v759, 2
      %v923 = vsel %vm886, %v920, %v922
      %924 = vrot.lane.b32.xlu0 %v889, 32
      %v925 = vpop.permute.xlu0 %924
      %926 = vrot.lane.b32.xlu0 %v891, 32
      %v927 = vpop.permute.xlu0 %926
      %928 = vrot.lane.b32.xlu0 %v893, 32
      %v929 = vpop.permute.xlu0 %928
      %930 = vrot.lane.b32.xlu0 %v895, 32
      %v931 = vpop.permute.xlu0 %930
      %932 = vrot.lane.b32.xlu0 %v897, 32
      %v933 = vpop.permute.xlu0 %932
      %934 = vrot.lane.b32.xlu0 %v899, 32
      %v935 = vpop.permute.xlu0 %934
      %936 = vrot.lane.b32.xlu0 %v901, 32
      %v937 = vpop.permute.xlu0 %936
      %938 = vrot.lane.b32.xlu0 %v903, 32
      %v939 = vpop.permute.xlu0 %938
      %940 = vrot.lane.b32.xlu0 %v905, 32
      %v941 = vpop.permute.xlu0 %940
      %942 = vrot.lane.b32.xlu0 %v907, 32
      %v943 = vpop.permute.xlu0 %942
      %944 = vrot.lane.b32.xlu0 %v909, 32
      %v945 = vpop.permute.xlu0 %944
      %946 = vrot.lane.b32.xlu0 %v911, 32
      %v947 = vpop.permute.xlu0 %946
      %948 = vrot.lane.b32.xlu0 %v913, 32
      %v949 = vpop.permute.xlu0 %948
      %950 = vrot.lane.b32.xlu0 %v915, 32
      %v951 = vpop.permute.xlu0 %950
      %952 = vrot.lane.b32.xlu0 %v917, 32
      %v953 = vpop.permute.xlu0 %952
      %954 = vrot.lane.b32.xlu0 %v919, 32
      %v955 = vpop.permute.xlu0 %954
      %956 = vrot.lane.b32.xlu0 %v921, 32
      %v957 = vpop.permute.xlu0 %956
      %958 = vrot.lane.b32.xlu0 %v923, 32
      %v959 = vpop.permute.xlu0 %958
      %v962 = vunpack.c.l.b16 %v400
      %v963 = vunpack.c.l.b16 %v401
      %v964 = vpack.c.b16 %v962, %v757
      %v965 = vpack.c.b16 %v963, %v963
      %v966 = vrot.slane %v964, 2
      %v967 = vsel %vm886, %v920, %v966
      %v968 = vrot.slane %v965, 2
      %v969 = vsel %vm886, %v966, %v968
      %970 = vrot.lane.b32.xlu0 %v891, 64
      %v971 = vpop.permute.xlu0 %970
      %972 = vrot.lane.b32.xlu0 %v893, 64
      %v973 = vpop.permute.xlu0 %972
      %974 = vrot.lane.b32.xlu0 %v895, 64
      %v975 = vpop.permute.xlu0 %974
      %976 = vrot.lane.b32.xlu0 %v897, 64
      %v977 = vpop.permute.xlu0 %976
      %978 = vrot.lane.b32.xlu0 %v899, 64
      %v979 = vpop.permute.xlu0 %978
      %980 = vrot.lane.b32.xlu0 %v901, 64
      %v981 = vpop.permute.xlu0 %980
      %982 = vrot.lane.b32.xlu0 %v903, 64
      %v983 = vpop.permute.xlu0 %982
      %984 = vrot.lane.b32.xlu0 %v905, 64
      %v985 = vpop.permute.xlu0 %984
      %986 = vrot.lane.b32.xlu0 %v907, 64
      %v987 = vpop.permute.xlu0 %986
      %988 = vrot.lane.b32.xlu0 %v909, 64
      %v989 = vpop.permute.xlu0 %988
      %990 = vrot.lane.b32.xlu0 %v911, 64
      %v991 = vpop.permute.xlu0 %990
      %992 = vrot.lane.b32.xlu0 %v913, 64
      %v993 = vpop.permute.xlu0 %992
      %994 = vrot.lane.b32.xlu0 %v915, 64
      %v995 = vpop.permute.xlu0 %994
      %996 = vrot.lane.b32.xlu0 %v917, 64
      %v997 = vpop.permute.xlu0 %996
      %998 = vrot.lane.b32.xlu0 %v919, 64
      %v999 = vpop.permute.xlu0 %998
      %1000 = vrot.lane.b32.xlu0 %v921, 64
      %v1001 = vpop.permute.xlu0 %1000
      %1002 = vrot.lane.b32.xlu0 %v967, 64
      %v1003 = vpop.permute.xlu0 %1002
      %1004 = vrot.lane.b32.xlu0 %v969, 64
      %v1005 = vpop.permute.xlu0 %1004
      %vm1006 = vsmask.f32 5376
      %v1007 = vrot.slane %v516, 2
      %v1008 = vrot.slane %v512, 3
      %v1009 = vor.u32 %v1007, %v1008
      %v1010 = vrot.slane %v524, 2
      %v1011 = vrot.slane %v520, 3
      %v1012 = vor.u32 %v1010, %v1011
      %v1013 = vsel %vm1006, %v1009, %v1012
      %v1014 = vrot.slane %v532, 2
      %v1015 = vrot.slane %v528, 3
      %v1016 = vor.u32 %v1014, %v1015
      %v1017 = vsel %vm1006, %v1012, %v1016
      %v1018 = vrot.slane %v540, 2
      %v1019 = vrot.slane %v536, 3
      %v1020 = vor.u32 %v1018, %v1019
      %v1021 = vsel %vm1006, %v1016, %v1020
      %v1022 = vrot.slane %v548, 2
      %v1023 = vrot.slane %v544, 3
      %v1024 = vor.u32 %v1022, %v1023
      %v1025 = vsel %vm1006, %v1020, %v1024
      %v1026 = vrot.slane %v556, 2
      %v1027 = vrot.slane %v552, 3
      %v1028 = vor.u32 %v1026, %v1027
      %v1029 = vsel %vm1006, %v1024, %v1028
      %v1030 = vrot.slane %v564, 2
      %v1031 = vrot.slane %v560, 3
      %v1032 = vor.u32 %v1030, %v1031
      %v1033 = vsel %vm1006, %v1028, %v1032
      %v1034 = vrot.slane %v572, 2
      %v1035 = vrot.slane %v568, 3
      %v1036 = vor.u32 %v1034, %v1035
      %v1037 = vsel %vm1006, %v1032, %v1036
      %v1038 = vrot.slane %v580, 2
      %v1039 = vrot.slane %v576, 3
      %v1040 = vor.u32 %v1038, %v1039
      %v1041 = vsel %vm1006, %v1036, %v1040
      %v1042 = vrot.slane %v588, 2
      %v1043 = vrot.slane %v584, 3
      %v1044 = vor.u32 %v1042, %v1043
      %v1045 = vsel %vm1006, %v1040, %v1044
      %v1046 = vrot.slane %v596, 2
      %v1047 = vrot.slane %v592, 3
      %v1048 = vor.u32 %v1046, %v1047
      %v1049 = vsel %vm1006, %v1044, %v1048
      %v1050 = vrot.slane %v604, 2
      %v1051 = vrot.slane %v600, 3
      %v1052 = vor.u32 %v1050, %v1051
      %v1053 = vsel %vm1006, %v1048, %v1052
      %v1054 = vrot.slane %v612, 2
      %v1055 = vrot.slane %v608, 3
      %v1056 = vor.u32 %v1054, %v1055
      %v1057 = vsel %vm1006, %v1052, %v1056
      %v1058 = vrot.slane %v620, 2
      %v1059 = vrot.slane %v616, 3
      %v1060 = vor.u32 %v1058, %v1059
      %v1061 = vsel %vm1006, %v1056, %v1060
      %v1062 = vrot.slane %v628, 2
      %v1063 = vrot.slane %v624, 3
      %v1064 = vor.u32 %v1062, %v1063
      %v1065 = vsel %vm1006, %v1060, %v1064
      %v1066 = vrot.slane %v636, 2
      %v1067 = vrot.slane %v632, 3
      %v1068 = vor.u32 %v1066, %v1067
      %v1069 = vsel %vm1006, %v1064, %v1068
      %v1070 = vrot.slane %v869, 2
      %v1071 = vrot.slane %v872, 3
      %v1072 = vor.u32 %v1070, %v1071
      %v1073 = vsel %vm1006, %v1068, %v1072
      %v1075 = vshrl.u32 %v964, 16
      %v1077 = vrot.slane %v1075, 2
      %v1078 = vshll.u32 %v964, 16
      %v1080 = vrot.slane %v1078, 3
      %v1081 = vor.u32 %v1077, %v1080
      %v1082 = vsel %vm1006, %v1072, %v1081
      %v1084 = vshrl.u32 %v965, 16
      %v1086 = vrot.slane %v1084, 2
      %v1087 = vshll.u32 %v965, 16
      %v1089 = vrot.slane %v1087, 3
      %v1090 = vor.u32 %v1086, %v1089
      %v1091 = vsel %vm1006, %v1081, %v1090
      %1092 = vrot.lane.b32.xlu0 %v1013, 96
      %v1093 = vpop.permute.xlu0 %1092
      %1094 = vrot.lane.b32.xlu0 %v1017, 96
      %v1095 = vpop.permute.xlu0 %1094
      %1096 = vrot.lane.b32.xlu0 %v1021, 96
      %v1097 = vpop.permute.xlu0 %1096
      %1098 = vrot.lane.b32.xlu0 %v1025, 96
      %v1099 = vpop.permute.xlu0 %1098
      %1100 = vrot.lane.b32.xlu0 %v1029, 96
      %v1101 = vpop.permute.xlu0 %1100
      %1102 = vrot.lane.b32.xlu0 %v1033, 96
      %v1103 = vpop.permute.xlu0 %1102
      %1104 = vrot.lane.b32.xlu0 %v1037, 96
      %v1105 = vpop.permute.xlu0 %1104
      %1106 = vrot.lane.b32.xlu0 %v1041, 96
      %v1107 = vpop.permute.xlu0 %1106
      %1108 = vrot.lane.b32.xlu0 %v1045, 96
      %v1109 = vpop.permute.xlu0 %1108
      %1110 = vrot.lane.b32.xlu0 %v1049, 96
      %v1111 = vpop.permute.xlu0 %1110
      %1112 = vrot.lane.b32.xlu0 %v1053, 96
      %v1113 = vpop.permute.xlu0 %1112
      %1114 = vrot.lane.b32.xlu0 %v1057, 96
      %v1115 = vpop.permute.xlu0 %1114
      %1116 = vrot.lane.b32.xlu0 %v1061, 96
      %v1117 = vpop.permute.xlu0 %1116
      %1118 = vrot.lane.b32.xlu0 %v1065, 96
      %v1119 = vpop.permute.xlu0 %1118
      %1120 = vrot.lane.b32.xlu0 %v1069, 96
      %v1121 = vpop.permute.xlu0 %1120
      %1122 = vrot.lane.b32.xlu0 %v1073, 96
      %v1123 = vpop.permute.xlu0 %1122
      %1124 = vrot.lane.b32.xlu0 %v1082, 96
      %v1125 = vpop.permute.xlu0 %1124
      %1126 = vrot.lane.b32.xlu0 %v1091, 96
      %v1127 = vpop.permute.xlu0 %1126
      %vm1128 = vcmask 1044480
      %v1129 = vrot.slane %v476, 3
      %v1130 = vrot.slane %v477, 3
      %v1131 = vsel %vm1128, %v1129, %v1130
      %v1132 = vrot.slane %v478, 3
      %v1133 = vsel %vm1128, %v1130, %v1132
      %v1134 = vrot.slane %v479, 3
      %v1135 = vsel %vm1128, %v1132, %v1134
      %v1136 = vrot.slane %v480, 3
      %v1137 = vsel %vm1128, %v1134, %v1136
      %v1138 = vrot.slane %v481, 3
      %v1139 = vsel %vm1128, %v1136, %v1138
      %v1140 = vrot.slane %v482, 3
      %v1141 = vsel %vm1128, %v1138, %v1140
      %v1142 = vrot.slane %v483, 3
      %v1143 = vsel %vm1128, %v1140, %v1142
      %v1144 = vrot.slane %v484, 3
      %v1145 = vsel %vm1128, %v1142, %v1144
      %v1146 = vrot.slane %v485, 3
      %v1147 = vsel %vm1128, %v1144, %v1146
      %v1148 = vrot.slane %v486, 3
      %v1149 = vsel %vm1128, %v1146, %v1148
      %v1150 = vrot.slane %v487, 3
      %v1151 = vsel %vm1128, %v1148, %v1150
      %v1152 = vrot.slane %v488, 3
      %v1153 = vsel %vm1128, %v1150, %v1152
      %v1154 = vrot.slane %v489, 3
      %v1155 = vsel %vm1128, %v1152, %v1154
      %v1156 = vrot.slane %v490, 3
      %v1157 = vsel %vm1128, %v1154, %v1156
      %v1158 = vrot.slane %v491, 3
      %v1159 = vsel %vm1128, %v1156, %v1158
      %v1160 = vrot.slane %v758, 3
      %v1161 = vsel %vm1128, %v1158, %v1160
      %v1162 = vrot.slane %v964, 3
      %v1163 = vsel %vm1128, %v1160, %v1162
      %v1164 = vrot.slane %v965, 3
      %v1165 = vsel %vm1128, %v1162, %v1164
      %vm1166 = vcmask 261120
      %v1168 = vsel %vm1166, %v474, %v645
      %v1170 = vsel %vm1166, %v475, %v647
      %v1172 = vsel %vm1166, %v476, %v649
      %v1174 = vsel %vm1166, %v477, %v651
      %v1176 = vsel %vm1166, %v478, %v653
      %v1178 = vsel %vm1166, %v479, %v655
      %v1180 = vsel %vm1166, %v480, %v657
      %v1182 = vsel %vm1166, %v481, %v659
      %v1184 = vsel %vm1166, %v482, %v661
      %v1186 = vsel %vm1166, %v483, %v663
      %v1188 = vsel %vm1166, %v484, %v665
      %v1190 = vsel %vm1166, %v485, %v667
      %v1192 = vsel %vm1166, %v486, %v669
      %v1194 = vsel %vm1166, %v487, %v671
      %v1196 = vsel %vm1166, %v488, %v673
      %v1198 = vsel %vm1166, %v489, %v675
      %v1200 = vsel %vm1166, %v490, %v677
      %v1202 = vsel %vm1166, %v491, %v679
      %vm1203 = vcmask 523264
      %v1205 = vsel %vm1203, %v1168, %v719
      %v1207 = vsel %vm1203, %v1170, %v721
      %v1209 = vsel %vm1203, %v1172, %v723
      %v1211 = vsel %vm1203, %v1174, %v725
      %v1213 = vsel %vm1203, %v1176, %v727
      %v1215 = vsel %vm1203, %v1178, %v729
      %v1217 = vsel %vm1203, %v1180, %v731
      %v1219 = vsel %vm1203, %v1182, %v733
      %v1221 = vsel %vm1203, %v1184, %v735
      %v1223 = vsel %vm1203, %v1186, %v737
      %v1225 = vsel %vm1203, %v1188, %v739
      %v1227 = vsel %vm1203, %v1190, %v741
      %v1229 = vsel %vm1203, %v1192, %v743
      %v1231 = vsel %vm1203, %v1194, %v745
      %v1233 = vsel %vm1203, %v1196, %v747
      %v1235 = vsel %vm1203, %v1198, %v749
      %v1237 = vsel %vm1203, %v1200, %v751
      %v1239 = vsel %vm1203, %v1202, %v753
      %vm1240 = vcmask 785408
      %v1242 = vsel %vm1240, %v1205, %v765
      %v1245 = vsel %vm1240, %v1207, %v767
      %v1248 = vsel %vm1240, %v1209, %v769
      %v1251 = vsel %vm1240, %v1211, %v771
      %v1254 = vsel %vm1240, %v1213, %v773
      %v1257 = vsel %vm1240, %v1215, %v775
      %v1260 = vsel %vm1240, %v1217, %v777
      %v1263 = vsel %vm1240, %v1219, %v779
      %v1266 = vsel %vm1240, %v1221, %v781
      %v1269 = vsel %vm1240, %v1223, %v783
      %v1272 = vsel %vm1240, %v1225, %v785
      %v1275 = vsel %vm1240, %v1227, %v787
      %v1278 = vsel %vm1240, %v1229, %v789
      %v1281 = vsel %vm1240, %v1231, %v791
      %v1284 = vsel %vm1240, %v1233, %v793
      %v1287 = vsel %vm1240, %v1235, %v795
      %v1290 = vsel %vm1240, %v1237, %v797
      %v1293 = vsel %vm1240, %v1239, %v799
      %v1297 = vsel %vm1166, %v807, %v925
      %v1300 = vsel %vm1166, %v811, %v927
      %v1303 = vsel %vm1166, %v815, %v929
      %v1306 = vsel %vm1166, %v819, %v931
      %v1309 = vsel %vm1166, %v823, %v933
      %v1312 = vsel %vm1166, %v827, %v935
      %v1315 = vsel %vm1166, %v831, %v937
      %v1318 = vsel %vm1166, %v835, %v939
      %v1321 = vsel %vm1166, %v839, %v941
      %v1324 = vsel %vm1166, %v843, %v943
      %v1327 = vsel %vm1166, %v847, %v945
      %v1330 = vsel %vm1166, %v851, %v947
      %v1333 = vsel %vm1166, %v855, %v949
      %v1336 = vsel %vm1166, %v859, %v951
      %v1339 = vsel %vm1166, %v863, %v953
      %v1342 = vsel %vm1166, %v867, %v955
      %v1345 = vsel %vm1166, %v876, %v957
      %v1348 = vsel %vm1166, %v885, %v959
      %v1350 = vsel %vm1203, %v1297, %v971
      %v1352 = vsel %vm1203, %v1300, %v973
      %v1354 = vsel %vm1203, %v1303, %v975
      %v1356 = vsel %vm1203, %v1306, %v977
      %v1358 = vsel %vm1203, %v1309, %v979
      %v1360 = vsel %vm1203, %v1312, %v981
      %v1362 = vsel %vm1203, %v1315, %v983
      %v1364 = vsel %vm1203, %v1318, %v985
      %v1366 = vsel %vm1203, %v1321, %v987
      %v1368 = vsel %vm1203, %v1324, %v989
      %v1370 = vsel %vm1203, %v1327, %v991
      %v1372 = vsel %vm1203, %v1330, %v993
      %v1374 = vsel %vm1203, %v1333, %v995
      %v1376 = vsel %vm1203, %v1336, %v997
      %v1378 = vsel %vm1203, %v1339, %v999
      %v1380 = vsel %vm1203, %v1342, %v1001
      %v1382 = vsel %vm1203, %v1345, %v1003
      %v1384 = vsel %vm1203, %v1348, %v1005
      %v1386 = vsel %vm1240, %v1350, %v1093
      %v1389 = vsel %vm1240, %v1352, %v1095
      %v1392 = vsel %vm1240, %v1354, %v1097
      %v1395 = vsel %vm1240, %v1356, %v1099
      %v1398 = vsel %vm1240, %v1358, %v1101
      %v1401 = vsel %vm1240, %v1360, %v1103
      %v1404 = vsel %vm1240, %v1362, %v1105
      %v1407 = vsel %vm1240, %v1364, %v1107
      %v1410 = vsel %vm1240, %v1366, %v1109
      %v1413 = vsel %vm1240, %v1368, %v1111
      %v1416 = vsel %vm1240, %v1370, %v1113
      %v1419 = vsel %vm1240, %v1372, %v1115
      %v1422 = vsel %vm1240, %v1374, %v1117
      %v1425 = vsel %vm1240, %v1376, %v1119
      %v1428 = vsel %vm1240, %v1378, %v1121
      %v1431 = vsel %vm1240, %v1380, %v1123
      %v1434 = vsel %vm1240, %v1382, %v1125
      %v1437 = vsel %vm1240, %v1384, %v1127
      %v1439 = vld [vmem:[%s2] sm:$0xf]
      %v1440 = vld [vmem:[%s2 + $0x4] sm:$0xf]
      %v1441 = vld [vmem:[%s2 + $0x8] sm:$0xf]
      %v1442 = vld [vmem:[%s2 + $0xc] sm:$0xf]
      %v1443 = vld [vmem:[%s2 + $0x10] sm:$0xf]
      %v1444 = vld [vmem:[%s2 + $0x14] sm:$0xf]
      %v1445 = vld [vmem:[%s2 + $0x18] sm:$0xf]
      %v1446 = vld [vmem:[%s2 + $0x1c] sm:$0xf]
      %v1447 = vld [vmem:[%s2 + $0x20] sm:$0xf]
      %v1448 = vld [vmem:[%s2 + $0x24] sm:$0xf]
      %v1449 = vld [vmem:[%s2 + $0x28] sm:$0xf]
      %v1450 = vld [vmem:[%s2 + $0x2c] sm:$0xf]
      %v1451 = vld [vmem:[%s2 + $0x30] sm:$0xf]
      %v1452 = vld [vmem:[%s2 + $0x34] sm:$0xf]
      %v1453 = vld [vmem:[%s2 + $0x38] sm:$0xf]
      %v1454 = vld [vmem:[%s2 + $0x3c] sm:$0xf]
      %v1455 = vld [vmem:[%s2 + $0x40] sm:$0xf]
      %v1456 = vld [vmem:[%s2 + $0x44] sm:$0xf]
      %v1457 = vld [vmem:[%s2 + $0x48] sm:$0xf]
      %v1458 = vld [vmem:[%s2 + $0x4c] sm:$0xf]
      %v1459 = vld [vmem:[%s2 + $0x50] sm:$0xf]
      %v1460 = vld [vmem:[%s2 + $0x54] sm:$0xf]
      %v1461 = vld [vmem:[%s2 + $0x58] sm:$0xf]
      %v1462 = vld [vmem:[%s2 + $0x5c] sm:$0xf]
      %v1463 = vld [vmem:[%s2 + $0x60] sm:$0xf]
      %v1464 = vld [vmem:[%s2 + $0x64] sm:$0xf]
      %v1465 = vld [vmem:[%s2 + $0x68] sm:$0xf]
      %v1466 = vld [vmem:[%s2 + $0x6c] sm:$0xf]
      %v1467 = vld [vmem:[%s2 + $0x70] sm:$0xf]
      %v1468 = vld [vmem:[%s2 + $0x74] sm:$0xf]
      %v1469 = vld [vmem:[%s2 + $0x78] sm:$0xf]
      %v1470 = vld [vmem:[%s2 + $0x7c] sm:$0xf]
      %v1471 = vld [vmem:[%s2 + $0x80] sm:$0xf]
      %v1472 = vld [vmem:[%s2 + $0x84] sm:$0xf]
      %v1473 = vld [vmem:[%s2 + $0x88] sm:$0xf]
      %v1474 = vld [vmem:[%s2 + $0x8c] sm:$0xf]
      %v1511 = vunpack.c.l.b16 %v1439
      %v1512 = vunpack.c.l.b16 %v1440
      %v1513 = vunpack.c.l.b16 %v1441
      %v1514 = vunpack.c.l.b16 %v1442
      %v1515 = vunpack.c.l.b16 %v1443
      %v1516 = vunpack.c.l.b16 %v1444
      %v1517 = vunpack.c.l.b16 %v1445
      %v1518 = vunpack.c.l.b16 %v1446
      %v1519 = vunpack.c.l.b16 %v1447
      %v1520 = vunpack.c.l.b16 %v1448
      %v1521 = vunpack.c.l.b16 %v1449
      %v1522 = vunpack.c.l.b16 %v1450
      %v1523 = vunpack.c.l.b16 %v1451
      %v1524 = vunpack.c.l.b16 %v1452
      %v1525 = vunpack.c.l.b16 %v1453
      %v1526 = vunpack.c.l.b16 %v1454
      %v1527 = vunpack.c.l.b16 %v1455
      %v1528 = vunpack.c.l.b16 %v1456
      %v1529 = vunpack.c.l.b16 %v1457
      %v1530 = vunpack.c.l.b16 %v1458
      %v1531 = vunpack.c.l.b16 %v1459
      %v1532 = vunpack.c.l.b16 %v1460
      %v1533 = vunpack.c.l.b16 %v1461
      %v1534 = vunpack.c.l.b16 %v1462
      %v1535 = vunpack.c.l.b16 %v1463
      %v1536 = vunpack.c.l.b16 %v1464
      %v1537 = vunpack.c.l.b16 %v1465
      %v1538 = vunpack.c.l.b16 %v1466
      %v1539 = vunpack.c.l.b16 %v1467
      %v1540 = vunpack.c.l.b16 %v1468
      %v1541 = vunpack.c.l.b16 %v1469
      %v1542 = vunpack.c.l.b16 %v1470
      %v1543 = vunpack.c.l.b16 %v1471
      %v1544 = vunpack.c.l.b16 %v1472
      %v1545 = vunpack.c.l.b16 %v1473
      %v1546 = vunpack.c.l.b16 %v1474
      %v1547 = vpack.c.b16 %v1512, %v1511
      %v1548 = vpack.c.b16 %v1514, %v1513
      %v1549 = vpack.c.b16 %v1516, %v1515
      %v1550 = vpack.c.b16 %v1518, %v1517
      %v1551 = vpack.c.b16 %v1520, %v1519
      %v1552 = vpack.c.b16 %v1522, %v1521
      %v1553 = vpack.c.b16 %v1524, %v1523
      %v1554 = vpack.c.b16 %v1526, %v1525
      %v1555 = vpack.c.b16 %v1528, %v1527
      %v1556 = vpack.c.b16 %v1530, %v1529
      %v1557 = vpack.c.b16 %v1532, %v1531
      %v1558 = vpack.c.b16 %v1534, %v1533
      %v1559 = vpack.c.b16 %v1536, %v1535
      %v1560 = vpack.c.b16 %v1538, %v1537
      %v1561 = vpack.c.b16 %v1540, %v1539
      %v1562 = vpack.c.b16 %v1542, %v1541
      %v1563 = vpack.c.b16 %v1544, %v1543
      %v1564 = vpack.c.b16 %v1546, %v1545
      %v1584 = vsel %vm1166, %v1131, 0
      %v1587 = vsel %vm1166, %v1133, 0
      %v1590 = vsel %vm1166, %v1135, 0
      %v1593 = vsel %vm1166, %v1137, 0
      %v1596 = vsel %vm1166, %v1139, 0
      %v1599 = vsel %vm1166, %v1141, 0
      %v1602 = vsel %vm1166, %v1143, 0
      %v1605 = vsel %vm1166, %v1145, 0
      %v1608 = vsel %vm1166, %v1147, 0
      %v1611 = vsel %vm1166, %v1149, 0
      %v1614 = vsel %vm1166, %v1151, 0
      %v1617 = vsel %vm1166, %v1153, 0
      %v1620 = vsel %vm1166, %v1155, 0
      %v1623 = vsel %vm1166, %v1157, 0
      %v1626 = vsel %vm1166, %v1159, 0
      %v1629 = vsel %vm1166, %v1161, 0
      %v1632 = vsel %vm1166, %v1163, 0
      %v1635 = vsel %vm1166, %v1165, 0
      %1637 = vmatprep.subr.bf16.mxu0 0
      %1638 = vmatpush1.bf16.msra.mxu0 %v1547
      %1639 = vmatprep.subr.bf16.mxu0 0
      %1640 = vmatpush1.bf16.msra.mxu0 %v1548
      %1641 = vmatprep.subr.bf16.mxu0 0
      %1642 = vmatpush1.bf16.msra.mxu0 %v1549
      %1643 = vmatprep.subr.bf16.mxu0 0
      %1644 = vmatpush1.bf16.msra.mxu0 %v1550
      %1645 = vmatprep.subr.bf16.mxu0 0
      %1646 = vmatpush1.bf16.msra.mxu0 %v1551
      %1647 = vmatprep.subr.bf16.mxu0 0
      %1648 = vmatpush1.bf16.msra.mxu0 %v1552
      %1649 = vmatprep.subr.bf16.mxu0 0
      %1650 = vmatpush1.bf16.msra.mxu0 %v1553
      %1651 = vmatprep.subr.bf16.mxu0 0
      %1652 = vmatpush1.bf16.msra.mxu0 %v1554
      %1653 = vmatprep.subr.bf16.mxu0 0
      %1654 = vmatpush1.bf16.msra.mxu0 %v1555
      %1655 = vmatprep.subr.bf16.mxu0 0
      %1656 = vmatpush1.bf16.msra.mxu0 %v1556
      %1657 = vmatprep.subr.bf16.mxu0 0
      %1658 = vmatpush1.bf16.msra.mxu0 %v1557
      %1659 = vmatprep.subr.bf16.mxu0 0
      %1660 = vmatpush1.bf16.msra.mxu0 %v1558
      %1661 = vmatprep.subr.bf16.mxu0 0
      %1662 = vmatpush1.bf16.msra.mxu0 %v1559
      %1663 = vmatprep.subr.bf16.mxu0 0
      %1664 = vmatpush1.bf16.msra.mxu0 %v1560
      %1665 = vmatprep.subr.bf16.mxu0 0
      %1666 = vmatpush1.bf16.msra.mxu0 %v1561
      %1667 = vmatprep.subr.bf16.mxu0 0
      %1668 = vmatpush1.bf16.msra.mxu0 %v1562
      %1669 = vmatprep.mubr.bf16.mxu0 %v1386
      %1670 = vmatmul.mubr.bf16.gmra.mrb[0].mxu0 %v1242
      %v1671 = vpop.f32.mrb[0].mxu0
      %v1672 = vadd.f32 0.0, %v1671
      %v1673 = vpop.f32.mrb[0].mxu0
      %v1674 = vpop.f32.mrb[0].mxu0
      %v1675 = vadd.f32 0.0, %v1674
      %v1676 = vpop.f32.mrb[0].mxu0
      %1677 = vmatprep.mubr.bf16.mxu0 %v1389
      %1678 = vmatmul.mubr.bf16.gmra.mrb[0].mxu0 %v1245
      %v1679 = vpop.f32.mrb[0].mxu0
      %v1680 = vadd.f32 0.0, %v1679
      %v1681 = vpop.f32.mrb[0].mxu0
      %v1682 = vpop.f32.mrb[0].mxu0
      %v1683 = vadd.f32 0.0, %v1682
      %v1684 = vpop.f32.mrb[0].mxu0
      %1685 = vmatprep.mubr.bf16.mxu0 %v1392
      %1686 = vmatmul.mubr.bf16.gmra.mrb[0].mxu0 %v1248
      %v1687 = vpop.f32.mrb[0].mxu0
      %v1688 = vadd.f32 0.0, %v1687
      %v1689 = vpop.f32.mrb[0].mxu0
      %v1690 = vpop.f32.mrb[0].mxu0
      %v1691 = vadd.f32 0.0, %v1690
      %v1692 = vpop.f32.mrb[0].mxu0
      %1693 = vmatprep.mubr.bf16.mxu0 %v1395
      %1694 = vmatmul.mubr.bf16.gmra.mrb[0].mxu0 %v1251
      %v1695 = vpop.f32.mrb[0].mxu0
      %v1696 = vadd.f32 0.0, %v1695
      %v1697 = vpop.f32.mrb[0].mxu0
      %v1698 = vpop.f32.mrb[0].mxu0
      %v1699 = vadd.f32 0.0, %v1698
      %v1700 = vpop.f32.mrb[0].mxu0
      %1701 = vmatprep.mubr.bf16.mxu0 %v1398
      %1702 = vmatmul.mubr.bf16.gmra.mrb[0].mxu0 %v1254
      %v1703 = vpop.f32.mrb[0].mxu0
      %v1704 = vadd.f32 0.0, %v1703
      %v1705 = vpop.f32.mrb[0].mxu0
      %v1706 = vpop.f32.mrb[0].mxu0
      %v1707 = vadd.f32 0.0, %v1706
      %v1708 = vpop.f32.mrb[0].mxu0
      %1709 = vmatprep.mubr.bf16.mxu0 %v1401
      %1710 = vmatmul.mubr.bf16.gmra.mrb[0].mxu0 %v1257
      %v1711 = vpop.f32.mrb[0].mxu0
      %v1712 = vadd.f32 0.0, %v1711
      %v1713 = vpop.f32.mrb[0].mxu0
      %v1714 = vpop.f32.mrb[0].mxu0
      %v1715 = vadd.f32 0.0, %v1714
      %v1716 = vpop.f32.mrb[0].mxu0
      %1717 = vmatprep.mubr.bf16.mxu0 %v1404
      %1718 = vmatmul.mubr.bf16.gmra.mrb[0].mxu0 %v1260
      %v1719 = vpop.f32.mrb[0].mxu0
      %v1720 = vadd.f32 0.0, %v1719
      %v1721 = vpop.f32.mrb[0].mxu0
      %v1722 = vpop.f32.mrb[0].mxu0
      %v1723 = vadd.f32 0.0, %v1722
      %v1724 = vpop.f32.mrb[0].mxu0
      %1725 = vmatprep.mubr.bf16.mxu0 %v1407
      %1726 = vmatmul.mubr.bf16.gmra.mrb[0].mxu0 %v1263
      %v1727 = vpop.f32.mrb[0].mxu0
      %v1728 = vadd.f32 0.0, %v1727
      %v1729 = vpop.f32.mrb[0].mxu0
      %v1730 = vpop.f32.mrb[0].mxu0
      %v1731 = vadd.f32 0.0, %v1730
      %v1732 = vpop.f32.mrb[0].mxu0
      %1733 = vmatprep.mubr.bf16.mxu0 %v1410
      %1734 = vmatmul.mubr.bf16.gmra.mrb[0].mxu0 %v1266
      %v1735 = vpop.f32.mrb[0].mxu0
      %v1736 = vadd.f32 0.0, %v1735
      %v1737 = vpop.f32.mrb[0].mxu0
      %v1738 = vpop.f32.mrb[0].mxu0
      %v1739 = vadd.f32 0.0, %v1738
      %v1740 = vpop.f32.mrb[0].mxu0
      %1741 = vmatprep.mubr.bf16.mxu0 %v1413
      %1742 = vmatmul.mubr.bf16.gmra.mrb[0].mxu0 %v1269
      %v1743 = vpop.f32.mrb[0].mxu0
      %v1744 = vadd.f32 0.0, %v1743
      %v1745 = vpop.f32.mrb[0].mxu0
      %v1746 = vpop.f32.mrb[0].mxu0
      %v1747 = vadd.f32 0.0, %v1746
      %v1748 = vpop.f32.mrb[0].mxu0
      %1749 = vmatprep.mubr.bf16.mxu0 %v1416
      %1750 = vmatmul.mubr.bf16.gmra.mrb[0].mxu0 %v1272
      %v1751 = vpop.f32.mrb[0].mxu0
      %v1752 = vadd.f32 0.0, %v1751
      %v1753 = vpop.f32.mrb[0].mxu0
      %v1754 = vpop.f32.mrb[0].mxu0
      %v1755 = vadd.f32 0.0, %v1754
      %v1756 = vpop.f32.mrb[0].mxu0
      %1757 = vmatprep.mubr.bf16.mxu0 %v1419
      %1758 = vmatmul.mubr.bf16.gmra.mrb[0].mxu0 %v1275
      %v1759 = vpop.f32.mrb[0].mxu0
      %v1760 = vadd.f32 0.0, %v1759
      %v1761 = vpop.f32.mrb[0].mxu0
      %v1762 = vpop.f32.mrb[0].mxu0
      %v1763 = vadd.f32 0.0, %v1762
      %v1764 = vpop.f32.mrb[0].mxu0
      %1765 = vmatprep.mubr.bf16.mxu0 %v1422
      %1766 = vmatmul.mubr.bf16.gmra.mrb[0].mxu0 %v1278
      %v1767 = vpop.f32.mrb[0].mxu0
      %v1768 = vadd.f32 0.0, %v1767
      %v1769 = vpop.f32.mrb[0].mxu0
      %v1770 = vpop.f32.mrb[0].mxu0
      %v1771 = vadd.f32 0.0, %v1770
      %v1772 = vpop.f32.mrb[0].mxu0
      %1773 = vmatprep.mubr.bf16.mxu0 %v1425
      %1774 = vmatmul.mubr.bf16.gmra.mrb[0].mxu0 %v1281
      %v1775 = vpop.f32.mrb[0].mxu0
      %v1776 = vadd.f32 0.0, %v1775
      %v1777 = vpop.f32.mrb[0].mxu0
      %v1778 = vpop.f32.mrb[0].mxu0
      %v1779 = vadd.f32 0.0, %v1778
      %v1780 = vpop.f32.mrb[0].mxu0
      %1781 = vmatprep.mubr.bf16.mxu0 %v1428
      %1782 = vmatmul.mubr.bf16.gmra.mrb[0].mxu0 %v1284
      %v1783 = vpop.f32.mrb[0].mxu0
      %v1784 = vadd.f32 0.0, %v1783
      %v1785 = vpop.f32.mrb[0].mxu0
      %v1786 = vpop.f32.mrb[0].mxu0
      %v1787 = vadd.f32 0.0, %v1786
      %v1788 = vpop.f32.mrb[0].mxu0
      %1789 = vmatprep.mubr.bf16.mxu0 %v1431
      %1790 = vmatmul.mubr.bf16.gmra.mrb[0].mxu0 %v1287
      %v1791 = vpop.f32.mrb[0].mxu0
      %v1792 = vadd.f32 0.0, %v1791
      %v1793 = vpop.f32.mrb[0].mxu0
      %v1794 = vpop.f32.mrb[0].mxu0
      %v1795 = vadd.f32 0.0, %v1794
      %v1796 = vpop.f32.mrb[0].mxu0
      %1797 = vmatprep.mubr.bf16.mxu0 %v1434
      %1798 = vmatmul.mubr.bf16.gmra.mrb[0].mxu0 %v1290
      %v1799 = vpop.f32.mrb[0].mxu0
      %v1800 = vadd.f32 0.0, %v1799
      %v1801 = vpop.f32.mrb[0].mxu0
      %v1802 = vpop.f32.mrb[0].mxu0
      %v1803 = vadd.f32 0.0, %v1802
      %v1804 = vpop.f32.mrb[0].mxu0
      %1805 = vmatprep.mubr.bf16.mxu0 %v1437
      %1806 = vmatmul.mubr.bf16.gmra.mrb[0].mxu0 %v1293
      %v1807 = vpop.f32.mrb[0].mxu0
      %v1808 = vadd.f32 0.0, %v1807
      %v1809 = vpop.f32.mrb[0].mxu0
      %v1810 = vpop.f32.mrb[0].mxu0
      %v1811 = vadd.f32 0.0, %v1810
      %v1812 = vpop.f32.mrb[0].mxu0
      %1813 = vdwg.mxu0
      %1814 = vmatprep.subr.bf16.mxu0 0
      %1815 = vmatpush1.bf16.msra.mxu0 %v1563
      %1816 = vmatprep.subr.bf16.mxu0 0
      %1817 = vmatpush1.bf16.msra.mxu0 %v1564
      %1818 = vmatprep.subr.bf16.mxu0 0
      %1819 = vmatpush1.bf16.msra.mxu0 0
      %1820 = vmatprep.subr.bf16.mxu0 0
      %1821 = vmatpush1.bf16.msra.mxu0 0
      %1822 = vmatprep.subr.bf16.mxu0 0
      %1823 = vmatpush1.bf16.msra.mxu0 0
      %1824 = vmatprep.subr.bf16.mxu0 0
      %1825 = vmatpush1.bf16.msra.mxu0 0
      %1826 = vmatprep.subr.bf16.mxu0 0
      %1827 = vmatpush1.bf16.msra.mxu0 0
      %1828 = vmatprep.subr.bf16.mxu0 0
      %1829 = vmatpush1.bf16.msra.mxu0 0
      %1830 = vmatprep.subr.bf16.mxu0 0
      %1831 = vmatpush1.bf16.msra.mxu0 0
      %1832 = vmatprep.subr.bf16.mxu0 0
      %1833 = vmatpush1.bf16.msra.mxu0 0
      %1834 = vmatprep.subr.bf16.mxu0 0
      %1835 = vmatpush1.bf16.msra.mxu0 0
      %1836 = vmatprep.subr.bf16.mxu0 0
      %1837 = vmatpush1.bf16.msra.mxu0 0
      %1838 = vmatprep.subr.bf16.mxu0 0
      %1839 = vmatpush1.bf16.msra.mxu0 0
      %1840 = vmatprep.subr.bf16.mxu0 0
      %1841 = vmatpush1.bf16.msra.mxu0 0
      %1842 = vmatprep.subr.bf16.mxu0 0
      %1843 = vmatpush1.bf16.msra.mxu0 0
      %1844 = vmatprep.subr.bf16.mxu0 0
      %1845 = vmatpush1.bf16.msra.mxu0 0
      %1846 = vmatprep.mubr.bf16.mxu0 0
      %1847 = vmatmul.mubr.bf16.gmra.mrb[0].mxu0 %v1584
      %v1848 = vpop.f32.mrb[0].mxu0
      %v1849 = vadd.f32 %v1672, %v1848
      %v1850 = vpop.f32.mrb[0].mxu0
      %v1851 = vpop.f32.mrb[0].mxu0
      %v1852 = vadd.f32 %v1675, %v1851
      %v1853 = vpop.f32.mrb[0].mxu0
      %1854 = vmatprep.mubr.bf16.mxu0 0
      %1855 = vmatmul.mubr.bf16.gmra.mrb[0].mxu0 %v1587
      %v1856 = vpop.f32.mrb[0].mxu0
      %v1857 = vadd.f32 %v1680, %v1856
      %v1858 = vpop.f32.mrb[0].mxu0
      %v1859 = vpop.f32.mrb[0].mxu0
      %v1860 = vadd.f32 %v1683, %v1859
      %v1861 = vpop.f32.mrb[0].mxu0
      %1862 = vmatprep.mubr.bf16.mxu0 0
      %1863 = vmatmul.mubr.bf16.gmra.mrb[0].mxu0 %v1590
      %v1864 = vpop.f32.mrb[0].mxu0
      %v1865 = vadd.f32 %v1688, %v1864
      %v1866 = vpop.f32.mrb[0].mxu0
      %v1867 = vpop.f32.mrb[0].mxu0
      %v1868 = vadd.f32 %v1691, %v1867
      %v1869 = vpop.f32.mrb[0].mxu0
      %1870 = vmatprep.mubr.bf16.mxu0 0
      %1871 = vmatmul.mubr.bf16.gmra.mrb[0].mxu0 %v1593
      %v1872 = vpop.f32.mrb[0].mxu0
      %v1873 = vadd.f32 %v1696, %v1872
      %v1874 = vpop.f32.mrb[0].mxu0
      %v1875 = vpop.f32.mrb[0].mxu0
      %v1876 = vadd.f32 %v1699, %v1875
      %v1877 = vpop.f32.mrb[0].mxu0
      %1878 = vmatprep.mubr.bf16.mxu0 0
      %1879 = vmatmul.mubr.bf16.gmra.mrb[0].mxu0 %v1596
      %v1880 = vpop.f32.mrb[0].mxu0
      %v1881 = vadd.f32 %v1704, %v1880
      %v1882 = vpop.f32.mrb[0].mxu0
      %v1883 = vpop.f32.mrb[0].mxu0
      %v1884 = vadd.f32 %v1707, %v1883
      %v1885 = vpop.f32.mrb[0].mxu0
      %1886 = vmatprep.mubr.bf16.mxu0 0
      %1887 = vmatmul.mubr.bf16.gmra.mrb[0].mxu0 %v1599
      %v1888 = vpop.f32.mrb[0].mxu0
      %v1889 = vadd.f32 %v1712, %v1888
      %v1890 = vpop.f32.mrb[0].mxu0
      %v1891 = vpop.f32.mrb[0].mxu0
      %v1892 = vadd.f32 %v1715, %v1891
      %v1893 = vpop.f32.mrb[0].mxu0
      %1894 = vmatprep.mubr.bf16.mxu0 0
      %1895 = vmatmul.mubr.bf16.gmra.mrb[0].mxu0 %v1602
      %v1896 = vpop.f32.mrb[0].mxu0
      %v1897 = vadd.f32 %v1720, %v1896
      %v1898 = vpop.f32.mrb[0].mxu0
      %v1899 = vpop.f32.mrb[0].mxu0
      %v1900 = vadd.f32 %v1723, %v1899
      %v1901 = vpop.f32.mrb[0].mxu0
      %1902 = vmatprep.mubr.bf16.mxu0 0
      %1903 = vmatmul.mubr.bf16.gmra.mrb[0].mxu0 %v1605
      %v1904 = vpop.f32.mrb[0].mxu0
      %v1905 = vadd.f32 %v1728, %v1904
      %v1906 = vpop.f32.mrb[0].mxu0
      %v1907 = vpop.f32.mrb[0].mxu0
      %v1908 = vadd.f32 %v1731, %v1907
      %v1909 = vpop.f32.mrb[0].mxu0
      %1910 = vmatprep.mubr.bf16.mxu0 0
      %1911 = vmatmul.mubr.bf16.gmra.mrb[0].mxu0 %v1608
      %v1912 = vpop.f32.mrb[0].mxu0
      %v1913 = vadd.f32 %v1736, %v1912
      %v1914 = vpop.f32.mrb[0].mxu0
      %v1915 = vpop.f32.mrb[0].mxu0
      %v1916 = vadd.f32 %v1739, %v1915
      %v1917 = vpop.f32.mrb[0].mxu0
      %1918 = vmatprep.mubr.bf16.mxu0 0
      %1919 = vmatmul.mubr.bf16.gmra.mrb[0].mxu0 %v1611
      %v1920 = vpop.f32.mrb[0].mxu0
      %v1921 = vadd.f32 %v1744, %v1920
      %v1922 = vpop.f32.mrb[0].mxu0
      %v1923 = vpop.f32.mrb[0].mxu0
      %v1924 = vadd.f32 %v1747, %v1923
      %v1925 = vpop.f32.mrb[0].mxu0
      %1926 = vmatprep.mubr.bf16.mxu0 0
      %1927 = vmatmul.mubr.bf16.gmra.mrb[0].mxu0 %v1614
      %v1928 = vpop.f32.mrb[0].mxu0
      %v1929 = vadd.f32 %v1752, %v1928
      %v1930 = vpop.f32.mrb[0].mxu0
      %v1931 = vpop.f32.mrb[0].mxu0
      %v1932 = vadd.f32 %v1755, %v1931
      %v1933 = vpop.f32.mrb[0].mxu0
      %1934 = vmatprep.mubr.bf16.mxu0 0
      %1935 = vmatmul.mubr.bf16.gmra.mrb[0].mxu0 %v1617
      %v1936 = vpop.f32.mrb[0].mxu0
      %v1937 = vadd.f32 %v1760, %v1936
      %v1938 = vpop.f32.mrb[0].mxu0
      %v1939 = vpop.f32.mrb[0].mxu0
      %v1940 = vadd.f32 %v1763, %v1939
      %v1941 = vpop.f32.mrb[0].mxu0
      %1942 = vmatprep.mubr.bf16.mxu0 0
      %1943 = vmatmul.mubr.bf16.gmra.mrb[0].mxu0 %v1620
      %v1944 = vpop.f32.mrb[0].mxu0
      %v1945 = vadd.f32 %v1768, %v1944
      %v1946 = vpop.f32.mrb[0].mxu0
      %v1947 = vpop.f32.mrb[0].mxu0
      %v1948 = vadd.f32 %v1771, %v1947
      %v1949 = vpop.f32.mrb[0].mxu0
      %1950 = vmatprep.mubr.bf16.mxu0 0
      %1951 = vmatmul.mubr.bf16.gmra.mrb[0].mxu0 %v1623
      %v1952 = vpop.f32.mrb[0].mxu0
      %v1953 = vadd.f32 %v1776, %v1952
      %v1954 = vpop.f32.mrb[0].mxu0
      %v1955 = vpop.f32.mrb[0].mxu0
      %v1956 = vadd.f32 %v1779, %v1955
      %v1957 = vpop.f32.mrb[0].mxu0
      %1958 = vmatprep.mubr.bf16.mxu0 0
      %1959 = vmatmul.mubr.bf16.gmra.mrb[0].mxu0 %v1626
      %v1960 = vpop.f32.mrb[0].mxu0
      %v1961 = vadd.f32 %v1784, %v1960
      %v1962 = vpop.f32.mrb[0].mxu0
      %v1963 = vpop.f32.mrb[0].mxu0
      %v1964 = vadd.f32 %v1787, %v1963
      %v1965 = vpop.f32.mrb[0].mxu0
      %1966 = vmatprep.mubr.bf16.mxu0 0
      %1967 = vmatmul.mubr.bf16.gmra.mrb[0].mxu0 %v1629
      %v1968 = vpop.f32.mrb[0].mxu0
      %v1969 = vadd.f32 %v1792, %v1968
      %v1970 = vpop.f32.mrb[0].mxu0
      %v1971 = vpop.f32.mrb[0].mxu0
      %v1972 = vadd.f32 %v1795, %v1971
      %v1973 = vpop.f32.mrb[0].mxu0
      %1974 = vmatprep.mubr.bf16.mxu0 0
      %1975 = vmatmul.mubr.bf16.gmra.mrb[0].mxu0 %v1632
      %v1976 = vpop.f32.mrb[0].mxu0
      %v1977 = vadd.f32 %v1800, %v1976
      %v1978 = vpop.f32.mrb[0].mxu0
      %v1979 = vpop.f32.mrb[0].mxu0
      %v1980 = vadd.f32 %v1803, %v1979
      %v1981 = vpop.f32.mrb[0].mxu0
      %1982 = vmatprep.mubr.bf16.mxu0 0
      %1983 = vmatmul.mubr.bf16.gmra.mrb[0].mxu0 %v1635
      %v1984 = vpop.f32.mrb[0].mxu0
      %v1985 = vadd.f32 %v1808, %v1984
      %v1986 = vpop.f32.mrb[0].mxu0
      %v1987 = vpop.f32.mrb[0].mxu0
      %v1988 = vadd.f32 %v1811, %v1987
      %v1989 = vpop.f32.mrb[0].mxu0
      %1990 = vdwg.mxu0
      %v1991 = vld [vmem:[%s3] sm:$0x1]
      %v1993 = vlaneseq
      %v1994 = vshrl.u32 %v1993, 7
      %v1995 = vsub.s32 0, %v1994
      %v1996 = vrot.slane %v1991, %v1995
      %v1998 = vmul.f32 %v1849, %v1996
      %v1999 = vmul.f32 %v1852, %v1996
      %v2000 = vmul.f32 %v1857, %v1996
      %v2001 = vmul.f32 %v1860, %v1996
      %v2002 = vmul.f32 %v1865, %v1996
      %v2003 = vmul.f32 %v1868, %v1996
      %v2004 = vmul.f32 %v1873, %v1996
      %v2005 = vmul.f32 %v1876, %v1996
      %v2006 = vmul.f32 %v1881, %v1996
      %v2007 = vmul.f32 %v1884, %v1996
      %v2008 = vmul.f32 %v1889, %v1996
      %v2009 = vmul.f32 %v1892, %v1996
      %v2010 = vmul.f32 %v1897, %v1996
      %v2011 = vmul.f32 %v1900, %v1996
      %v2012 = vmul.f32 %v1905, %v1996
      %v2013 = vmul.f32 %v1908, %v1996
      %v2014 = vmul.f32 %v1913, %v1996
      %v2015 = vmul.f32 %v1916, %v1996
      %v2016 = vmul.f32 %v1921, %v1996
      %v2017 = vmul.f32 %v1924, %v1996
      %v2018 = vmul.f32 %v1929, %v1996
      %v2019 = vmul.f32 %v1932, %v1996
      %v2020 = vmul.f32 %v1937, %v1996
      %v2021 = vmul.f32 %v1940, %v1996
      %v2022 = vmul.f32 %v1945, %v1996
      %v2023 = vmul.f32 %v1948, %v1996
      %v2024 = vmul.f32 %v1953, %v1996
      %v2025 = vmul.f32 %v1956, %v1996
      %v2026 = vmul.f32 %v1961, %v1996
      %v2027 = vmul.f32 %v1964, %v1996
      %v2028 = vmul.f32 %v1969, %v1996
      %v2029 = vmul.f32 %v1972, %v1996
      %v2030 = vmul.f32 %v1977, %v1996
      %v2031 = vmul.f32 %v1980, %v1996
      %v2032 = vmul.f32 %v1985, %v1996
      %v2033 = vmul.f32 %v1988, %v1996
      %v2034 = vld [vmem:[%s4] sm:$0x1]
      %v2036 = vlaneseq
      %v2037 = vshrl.u32 %v2036, 7
      %v2038 = vsub.s32 0, %v2037
      %v2039 = vrot.slane %v2034, %v2038
      %v2041 = vadd.f32 %v1998, %v2039
      %v2042 = vadd.f32 %v1999, %v2039
      %v2043 = vadd.f32 %v2000, %v2039
      %v2044 = vadd.f32 %v2001, %v2039
      %v2045 = vadd.f32 %v2002, %v2039
      %v2046 = vadd.f32 %v2003, %v2039
      %v2047 = vadd.f32 %v2004, %v2039
      %v2048 = vadd.f32 %v2005, %v2039
      %v2049 = vadd.f32 %v2006, %v2039
      %v2050 = vadd.f32 %v2007, %v2039
      %v2051 = vadd.f32 %v2008, %v2039
      %v2052 = vadd.f32 %v2009, %v2039
      %v2053 = vadd.f32 %v2010, %v2039
      %v2054 = vadd.f32 %v2011, %v2039
      %v2055 = vadd.f32 %v2012, %v2039
      %v2056 = vadd.f32 %v2013, %v2039
      %v2057 = vadd.f32 %v2014, %v2039
      %v2058 = vadd.f32 %v2015, %v2039
      %v2059 = vadd.f32 %v2016, %v2039
      %v2060 = vadd.f32 %v2017, %v2039
      %v2061 = vadd.f32 %v2018, %v2039
      %v2062 = vadd.f32 %v2019, %v2039
      %v2063 = vadd.f32 %v2020, %v2039
      %v2064 = vadd.f32 %v2021, %v2039
      %v2065 = vadd.f32 %v2022, %v2039
      %v2066 = vadd.f32 %v2023, %v2039
      %v2067 = vadd.f32 %v2024, %v2039
      %v2068 = vadd.f32 %v2025, %v2039
      %v2069 = vadd.f32 %v2026, %v2039
      %v2070 = vadd.f32 %v2027, %v2039
      %v2071 = vadd.f32 %v2028, %v2039
      %v2072 = vadd.f32 %v2029, %v2039
      %v2073 = vadd.f32 %v2030, %v2039
      %v2074 = vadd.f32 %v2031, %v2039
      %v2075 = vadd.f32 %v2032, %v2039
      %v2076 = vadd.f32 %v2033, %v2039
      %v2077 = vmax.f32 %v2041, 0.0
      %v2078 = vmax.f32 %v2042, 0.0
      %v2079 = vmax.f32 %v2043, 0.0
      %v2080 = vmax.f32 %v2044, 0.0
      %v2081 = vmax.f32 %v2045, 0.0
      %v2082 = vmax.f32 %v2046, 0.0
      %v2083 = vmax.f32 %v2047, 0.0
      %v2084 = vmax.f32 %v2048, 0.0
      %v2085 = vmax.f32 %v2049, 0.0
      %v2086 = vmax.f32 %v2050, 0.0
      %v2087 = vmax.f32 %v2051, 0.0
      %v2088 = vmax.f32 %v2052, 0.0
      %v2089 = vmax.f32 %v2053, 0.0
      %v2090 = vmax.f32 %v2054, 0.0
      %v2091 = vmax.f32 %v2055, 0.0
      %v2092 = vmax.f32 %v2056, 0.0
      %v2093 = vmax.f32 %v2057, 0.0
      %v2094 = vmax.f32 %v2058, 0.0
      %v2095 = vmax.f32 %v2059, 0.0
      %v2096 = vmax.f32 %v2060, 0.0
      %v2097 = vmax.f32 %v2061, 0.0
      %v2098 = vmax.f32 %v2062, 0.0
      %v2099 = vmax.f32 %v2063, 0.0
      %v2100 = vmax.f32 %v2064, 0.0
      %v2101 = vmax.f32 %v2065, 0.0
      %v2102 = vmax.f32 %v2066, 0.0
      %v2103 = vmax.f32 %v2067, 0.0
      %v2104 = vmax.f32 %v2068, 0.0
      %v2105 = vmax.f32 %v2069, 0.0
      %v2106 = vmax.f32 %v2070, 0.0
      %v2107 = vmax.f32 %v2071, 0.0
      %v2108 = vmax.f32 %v2072, 0.0
      %v2109 = vmax.f32 %v2073, 0.0
      %v2110 = vmax.f32 %v2074, 0.0
      %v2111 = vmax.f32 %v2075, 0.0
      %v2112 = vmax.f32 %v2076, 0.0
      %v2113 = vld [vmem:[%s1] sm:$0xff]
      %v2114 = vld [vmem:[%s1 + $0x8] sm:$0xff]
      %v2115 = vld [vmem:[%s1 + $0x10] sm:$0xff]
      %v2116 = vld [vmem:[%s1 + $0x18] sm:$0xff]
      %v2117 = vld [vmem:[%s1 + $0x20] sm:$0xff]
      %v2118 = vld [vmem:[%s1 + $0x28] sm:$0xff]
      %v2119 = vld [vmem:[%s1 + $0x30] sm:$0xff]
      %v2120 = vld [vmem:[%s1 + $0x38] sm:$0xff]
      %v2121 = vld [vmem:[%s1 + $0x40] sm:$0xff]
      %v2122 = vld [vmem:[%s1 + $0x48] sm:$0xff]
      %v2123 = vld [vmem:[%s1 + $0x50] sm:$0xff]
      %v2124 = vld [vmem:[%s1 + $0x58] sm:$0xff]
      %v2125 = vld [vmem:[%s1 + $0x60] sm:$0xff]
      %v2126 = vld [vmem:[%s1 + $0x68] sm:$0xff]
      %v2127 = vld [vmem:[%s1 + $0x70] sm:$0xff]
      %v2128 = vld [vmem:[%s1 + $0x78] sm:$0xff]
      %v2129 = vld [vmem:[%s1 + $0x80] sm:$0xff]
      %v2130 = vld [vmem:[%s1 + $0x88] sm:$0xff]
      %v2131 = vld [vmem:[%s1 + $0x90] sm:$0xff]
      %v2132 = vld [vmem:[%s1 + $0x98] sm:$0xff]
      %v2133 = vld [vmem:[%s1 + $0xa0] sm:$0xff]
      %v2134 = vld [vmem:[%s1 + $0xa8] sm:$0xff]
      %v2135 = vld [vmem:[%s1 + $0xb0] sm:$0xff]
      %v2136 = vld [vmem:[%s1 + $0xb8] sm:$0xff]
      %v2137 = vld [vmem:[%s1 + $0xc0] sm:$0xff]
      %v2138 = vld [vmem:[%s1 + $0xc8] sm:$0xff]
      %v2139 = vld [vmem:[%s1 + $0xd0] sm:$0xff]
      %v2140 = vld [vmem:[%s1 + $0xd8] sm:$0xff]
      %v2141 = vld [vmem:[%s1 + $0xe0] sm:$0xff]
      %v2142 = vld [vmem:[%s1 + $0xe8] sm:$0xff]
      %v2143 = vld [vmem:[%s1 + $0xf0] sm:$0xff]
      %v2144 = vld [vmem:[%s1 + $0xf8] sm:$0xff]
      %v2145 = vld [vmem:[%s1 + $0x100] sm:$0xff]
      %v2146 = vld [vmem:[%s1 + $0x108] sm:$0xff]
      %v2147 = vld [vmem:[%s1 + $0x110] sm:$0xff]
      %v2148 = vld [vmem:[%s1 + $0x118] sm:$0xff]
      %2150 = vset.pattern.permute.xlu0 0
      %2151 = vperm.xlu0 %2150, %v2113
      %v2152 = vpop.permute.xlu0 %2151
      %2155 = vset.pattern.permute.xlu0 0
      %2156 = vperm.xlu0 %2155, %v2114
      %v2157 = vpop.permute.xlu0 %2156
      %2160 = vset.pattern.permute.xlu0 0
      %2161 = vperm.xlu0 %2160, %v2115
      %v2162 = vpop.permute.xlu0 %2161
      %2165 = vset.pattern.permute.xlu0 0
      %2166 = vperm.xlu0 %2165, %v2116
      %v2167 = vpop.permute.xlu0 %2166
      %2170 = vset.pattern.permute.xlu0 0
      %2171 = vperm.xlu0 %2170, %v2117
      %v2172 = vpop.permute.xlu0 %2171
      %2175 = vset.pattern.permute.xlu0 0
      %2176 = vperm.xlu0 %2175, %v2118
      %v2177 = vpop.permute.xlu0 %2176
      %2180 = vset.pattern.permute.xlu0 0
      %2181 = vperm.xlu0 %2180, %v2119
      %v2182 = vpop.permute.xlu0 %2181
      %2185 = vset.pattern.permute.xlu0 0
      %2186 = vperm.xlu0 %2185, %v2120
      %v2187 = vpop.permute.xlu0 %2186
      %2190 = vset.pattern.permute.xlu0 0
      %2191 = vperm.xlu0 %2190, %v2121
      %v2192 = vpop.permute.xlu0 %2191
      %2195 = vset.pattern.permute.xlu0 0
      %2196 = vperm.xlu0 %2195, %v2122
      %v2197 = vpop.permute.xlu0 %2196
      %2200 = vset.pattern.permute.xlu0 0
      %2201 = vperm.xlu0 %2200, %v2123
      %v2202 = vpop.permute.xlu0 %2201
      %2205 = vset.pattern.permute.xlu0 0
      %2206 = vperm.xlu0 %2205, %v2124
      %v2207 = vpop.permute.xlu0 %2206
      %2210 = vset.pattern.permute.xlu0 0
      %2211 = vperm.xlu0 %2210, %v2125
      %v2212 = vpop.permute.xlu0 %2211
      %2215 = vset.pattern.permute.xlu0 0
      %2216 = vperm.xlu0 %2215, %v2126
      %v2217 = vpop.permute.xlu0 %2216
      %2220 = vset.pattern.permute.xlu0 0
      %2221 = vperm.xlu0 %2220, %v2127
      %v2222 = vpop.permute.xlu0 %2221
      %2225 = vset.pattern.permute.xlu0 0
      %2226 = vperm.xlu0 %2225, %v2128
      %v2227 = vpop.permute.xlu0 %2226
      %2230 = vset.pattern.permute.xlu0 0
      %2231 = vperm.xlu0 %2230, %v2129
      %v2232 = vpop.permute.xlu0 %2231
      %2235 = vset.pattern.permute.xlu0 0
      %2236 = vperm.xlu0 %2235, %v2130
      %v2237 = vpop.permute.xlu0 %2236
      %2240 = vset.pattern.permute.xlu0 0
      %2241 = vperm.xlu0 %2240, %v2131
      %v2242 = vpop.permute.xlu0 %2241
      %2245 = vset.pattern.permute.xlu0 0
      %2246 = vperm.xlu0 %2245, %v2132
      %v2247 = vpop.permute.xlu0 %2246
      %2250 = vset.pattern.permute.xlu0 0
      %2251 = vperm.xlu0 %2250, %v2133
      %v2252 = vpop.permute.xlu0 %2251
      %2255 = vset.pattern.permute.xlu0 0
      %2256 = vperm.xlu0 %2255, %v2134
      %v2257 = vpop.permute.xlu0 %2256
      %2260 = vset.pattern.permute.xlu0 0
      %2261 = vperm.xlu0 %2260, %v2135
      %v2262 = vpop.permute.xlu0 %2261
      %2265 = vset.pattern.permute.xlu0 0
      %2266 = vperm.xlu0 %2265, %v2136
      %v2267 = vpop.permute.xlu0 %2266
      %2270 = vset.pattern.permute.xlu0 0
      %2271 = vperm.xlu0 %2270, %v2137
      %v2272 = vpop.permute.xlu0 %2271
      %2275 = vset.pattern.permute.xlu0 0
      %2276 = vperm.xlu0 %2275, %v2138
      %v2277 = vpop.permute.xlu0 %2276
      %2280 = vset.pattern.permute.xlu0 0
      %2281 = vperm.xlu0 %2280, %v2139
      %v2282 = vpop.permute.xlu0 %2281
      %2285 = vset.pattern.permute.xlu0 0
      %2286 = vperm.xlu0 %2285, %v2140
      %v2287 = vpop.permute.xlu0 %2286
      %2290 = vset.pattern.permute.xlu0 0
      %2291 = vperm.xlu0 %2290, %v2141
      %v2292 = vpop.permute.xlu0 %2291
      %2295 = vset.pattern.permute.xlu0 0
      %2296 = vperm.xlu0 %2295, %v2142
      %v2297 = vpop.permute.xlu0 %2296
      %2300 = vset.pattern.permute.xlu0 0
      %2301 = vperm.xlu0 %2300, %v2143
      %v2302 = vpop.permute.xlu0 %2301
      %2305 = vset.pattern.permute.xlu0 0
      %2306 = vperm.xlu0 %2305, %v2144
      %v2307 = vpop.permute.xlu0 %2306
      %2310 = vset.pattern.permute.xlu0 0
      %2311 = vperm.xlu0 %2310, %v2145
      %v2312 = vpop.permute.xlu0 %2311
      %2315 = vset.pattern.permute.xlu0 0
      %2316 = vperm.xlu0 %2315, %v2146
      %v2317 = vpop.permute.xlu0 %2316
      %2320 = vset.pattern.permute.xlu0 0
      %2321 = vperm.xlu0 %2320, %v2147
      %v2322 = vpop.permute.xlu0 %2321
      %2325 = vset.pattern.permute.xlu0 0
      %2326 = vperm.xlu0 %2325, %v2148
      %v2327 = vpop.permute.xlu0 %2326
      %v2329 = vmul.f32 %v2077, %v2152
      %v2330 = vmul.f32 %v2078, %v2157
      %v2331 = vmul.f32 %v2079, %v2162
      %v2332 = vmul.f32 %v2080, %v2167
      %v2333 = vmul.f32 %v2081, %v2172
      %v2334 = vmul.f32 %v2082, %v2177
      %v2335 = vmul.f32 %v2083, %v2182
      %v2336 = vmul.f32 %v2084, %v2187
      %v2337 = vmul.f32 %v2085, %v2192
      %v2338 = vmul.f32 %v2086, %v2197
      %v2339 = vmul.f32 %v2087, %v2202
      %v2340 = vmul.f32 %v2088, %v2207
      %v2341 = vmul.f32 %v2089, %v2212
      %v2342 = vmul.f32 %v2090, %v2217
      %v2343 = vmul.f32 %v2091, %v2222
      %v2344 = vmul.f32 %v2092, %v2227
      %v2345 = vmul.f32 %v2093, %v2232
      %v2346 = vmul.f32 %v2094, %v2237
      %v2347 = vmul.f32 %v2095, %v2242
      %v2348 = vmul.f32 %v2096, %v2247
      %v2349 = vmul.f32 %v2097, %v2252
      %v2350 = vmul.f32 %v2098, %v2257
      %v2351 = vmul.f32 %v2099, %v2262
      %v2352 = vmul.f32 %v2100, %v2267
      %v2353 = vmul.f32 %v2101, %v2272
      %v2354 = vmul.f32 %v2102, %v2277
      %v2355 = vmul.f32 %v2103, %v2282
      %v2356 = vmul.f32 %v2104, %v2287
      %v2357 = vmul.f32 %v2105, %v2292
      %v2358 = vmul.f32 %v2106, %v2297
      %v2359 = vmul.f32 %v2107, %v2302
      %v2360 = vmul.f32 %v2108, %v2307
      %v2361 = vmul.f32 %v2109, %v2312
      %v2362 = vmul.f32 %v2110, %v2317
      %v2363 = vmul.f32 %v2111, %v2322
      %v2364 = vmul.f32 %v2112, %v2327
      %vm2365 = vcmask 519168
      %2366 = vst.msk [vmem:[#allocation2] sm:$0xf] %vm2365, 0
      %2367 = vst.msk [vmem:[#allocation2 + $0x4] sm:$0xf] %vm2365, 0
      %vm2368 = vcmask 517120
      %vm2369 = vsmask.f32 1280
      %vm2370 = vmand %vm2368, %vm2369
      %v2371 = vld [vmem:[#allocation2 + $0x8] sm:$0x3]
      %v2372 = vsel %vm2370, 0, %v2371
      %2373 = vst [vmem:[#allocation2 + $0x8] sm:$0x3] %v2372
      %vm2374 = vcmask 519169
      %vm2375 = vsmask.f32 7942
      %vm2376 = vmand %vm2374, %vm2375
      %v2377 = vld [vmem:[#allocation2 + $0x98] sm:$0xe]
      %v2378 = vsel %vm2376, 0, %v2377
      %2379 = vst [vmem:[#allocation2 + $0x98] sm:$0xe] %v2378
      %2380 = vst.msk [vmem:[#allocation2 + $0x9c] sm:$0xf] %vm2365, 0
      %2381 = vst.msk [vmem:[#allocation2 + $0xa0] sm:$0xf] %vm2365, 0
      %2382 = vst.msk [vmem:[#allocation2 + $0xa4] sm:$0xf] %vm2365, 0
      %vm2383 = vcmask 518144
      %2384 = vst.msk [vmem:[#allocation2 + $0xa8] sm:$0x7] %vm2383, 0
      %v2385 = vpack.c.bf16 %v2330, %v2329
      %v2386 = vpack.c.bf16 %v2332, %v2331
      %v2387 = vpack.c.bf16 %v2334, %v2333
      %v2388 = vpack.c.bf16 %v2336, %v2335
      %v2389 = vpack.c.bf16 %v2338, %v2337
      %v2390 = vpack.c.bf16 %v2340, %v2339
      %v2391 = vpack.c.bf16 %v2342, %v2341
      %v2392 = vpack.c.bf16 %v2344, %v2343
      %v2393 = vpack.c.bf16 %v2346, %v2345
      %v2394 = vpack.c.bf16 %v2348, %v2347
      %v2395 = vpack.c.bf16 %v2350, %v2349
      %v2396 = vpack.c.bf16 %v2352, %v2351
      %v2397 = vpack.c.bf16 %v2354, %v2353
      %v2398 = vpack.c.bf16 %v2356, %v2355
      %v2399 = vpack.c.bf16 %v2358, %v2357
      %v2400 = vpack.c.bf16 %v2360, %v2359
      %v2401 = vpack.c.bf16 %v2362, %v2361
      %v2402 = vpack.c.bf16 %v2364, %v2363
      %v2421 = vunpack.c.l.b16 %v2385
      %v2422 = vunpack.c.h.b16 %v2385
      %v2423 = vunpack.c.l.b16 %v2386
      %v2424 = vunpack.c.h.b16 %v2386
      %v2425 = vunpack.c.l.b16 %v2387
      %v2426 = vunpack.c.h.b16 %v2387
      %v2427 = vunpack.c.l.b16 %v2388
      %v2428 = vunpack.c.h.b16 %v2388
      %v2429 = vunpack.c.l.b16 %v2389
      %v2430 = vunpack.c.h.b16 %v2389
      %v2431 = vunpack.c.l.b16 %v2390
      %v2432 = vunpack.c.h.b16 %v2390
      %v2433 = vunpack.c.l.b16 %v2391
      %v2434 = vunpack.c.h.b16 %v2391
      %v2435 = vunpack.c.l.b16 %v2392
      %v2436 = vunpack.c.h.b16 %v2392
      %v2437 = vunpack.c.l.b16 %v2393
      %v2438 = vunpack.c.h.b16 %v2393
      %v2439 = vunpack.c.l.b16 %v2394
      %v2440 = vunpack.c.h.b16 %v2394
      %v2441 = vunpack.c.l.b16 %v2395
      %v2442 = vunpack.c.h.b16 %v2395
      %v2443 = vunpack.c.l.b16 %v2396
      %v2444 = vunpack.c.h.b16 %v2396
      %v2445 = vunpack.c.l.b16 %v2397
      %v2446 = vunpack.c.h.b16 %v2397
      %v2447 = vunpack.c.l.b16 %v2398
      %v2448 = vunpack.c.h.b16 %v2398
      %v2449 = vunpack.c.l.b16 %v2399
      %v2450 = vunpack.c.h.b16 %v2399
      %v2451 = vunpack.c.l.b16 %v2400
      %v2452 = vunpack.c.h.b16 %v2400
      %v2453 = vunpack.c.l.b16 %v2401
      %v2454 = vunpack.c.h.b16 %v2401
      %v2455 = vunpack.c.l.b16 %v2402
      %v2456 = vunpack.c.h.b16 %v2402
      %v2457 = vpack.c.b16 %v2421, %v2421
      %v2458 = vpack.c.b16 %v2422, %v2422
      %v2459 = vpack.c.b16 %v2423, %v2423
      %v2460 = vpack.c.b16 %v2424, %v2424
      %v2461 = vpack.c.b16 %v2425, %v2425
      %v2462 = vpack.c.b16 %v2426, %v2426
      %v2463 = vpack.c.b16 %v2427, %v2427
      %v2464 = vpack.c.b16 %v2428, %v2428
      %v2465 = vpack.c.b16 %v2429, %v2429
      %v2466 = vpack.c.b16 %v2430, %v2430
      %v2467 = vpack.c.b16 %v2431, %v2431
      %v2468 = vpack.c.b16 %v2432, %v2432
      %v2469 = vpack.c.b16 %v2433, %v2433
      %v2470 = vpack.c.b16 %v2434, %v2434
      %v2471 = vpack.c.b16 %v2435, %v2435
      %v2472 = vpack.c.b16 %v2436, %v2436
      %v2473 = vpack.c.b16 %v2437, %v2437
      %v2474 = vpack.c.b16 %v2438, %v2438
      %v2475 = vpack.c.b16 %v2439, %v2439
      %v2476 = vpack.c.b16 %v2440, %v2440
      %v2477 = vpack.c.b16 %v2441, %v2441
      %v2478 = vpack.c.b16 %v2442, %v2442
      %v2479 = vpack.c.b16 %v2443, %v2443
      %v2480 = vpack.c.b16 %v2444, %v2444
      %v2481 = vpack.c.b16 %v2445, %v2445
      %v2482 = vpack.c.b16 %v2446, %v2446
      %v2483 = vpack.c.b16 %v2447, %v2447
      %v2484 = vpack.c.b16 %v2448, %v2448
      %v2485 = vpack.c.b16 %v2449, %v2449
      %v2486 = vpack.c.b16 %v2450, %v2450
      %v2487 = vpack.c.b16 %v2451, %v2451
      %v2488 = vpack.c.b16 %v2452, %v2452
      %v2489 = vpack.c.b16 %v2453, %v2453
      %v2490 = vpack.c.b16 %v2454, %v2454
      %v2491 = vpack.c.b16 %v2455, %v2455
      %v2492 = vpack.c.b16 %v2456, %v2456
      %vm2493 = vsmask.f32 5392
      %vm2494 = vmor %vm2369, %vm2493
      %v2496 = vshrl.u32 %v2457, 16
      %v2498 = vrot.slane %v2496, 6
      %v2499 = vshll.u32 %v2457, 16
      %v2501 = vrot.slane %v2499, 7
      %v2502 = vor.u32 %v2498, %v2501
      %v2503 = vrot.slane %v2502, 4
      %v2505 = vshrl.u32 %v2458, 16
      %v2507 = vrot.slane %v2505, 6
      %v2508 = vshll.u32 %v2458, 16
      %v2510 = vrot.slane %v2508, 7
      %v2511 = vor.u32 %v2507, %v2510
      %v2512 = vsel %vm2494, %v2503, %v2511
      %v2513 = vrot.slane %v2511, 4
      %v2515 = vshrl.u32 %v2459, 16
      %v2517 = vrot.slane %v2515, 6
      %v2518 = vshll.u32 %v2459, 16
      %v2520 = vrot.slane %v2518, 7
      %v2521 = vor.u32 %v2517, %v2520
      %v2522 = vsel %vm2494, %v2513, %v2521
      %v2523 = vrot.slane %v2521, 4
      %v2525 = vshrl.u32 %v2460, 16
      %v2527 = vrot.slane %v2525, 6
      %v2528 = vshll.u32 %v2460, 16
      %v2530 = vrot.slane %v2528, 7
      %v2531 = vor.u32 %v2527, %v2530
      %v2532 = vsel %vm2494, %v2523, %v2531
      %v2533 = vrot.slane %v2531, 4
      %v2535 = vshrl.u32 %v2461, 16
      %v2537 = vrot.slane %v2535, 6
      %v2538 = vshll.u32 %v2461, 16
      %v2540 = vrot.slane %v2538, 7
      %v2541 = vor.u32 %v2537, %v2540
      %v2542 = vsel %vm2494, %v2533, %v2541
      %v2543 = vrot.slane %v2541, 4
      %v2545 = vshrl.u32 %v2462, 16
      %v2547 = vrot.slane %v2545, 6
      %v2548 = vshll.u32 %v2462, 16
      %v2550 = vrot.slane %v2548, 7
      %v2551 = vor.u32 %v2547, %v2550
      %v2552 = vsel %vm2494, %v2543, %v2551
      %v2553 = vrot.slane %v2551, 4
      %v2555 = vshrl.u32 %v2463, 16
      %v2557 = vrot.slane %v2555, 6
      %v2558 = vshll.u32 %v2463, 16
      %v2560 = vrot.slane %v2558, 7
      %v2561 = vor.u32 %v2557, %v2560
      %v2562 = vsel %vm2494, %v2553, %v2561
      %v2563 = vrot.slane %v2561, 4
      %v2565 = vshrl.u32 %v2464, 16
      %v2567 = vrot.slane %v2565, 6
      %v2568 = vshll.u32 %v2464, 16
      %v2570 = vrot.slane %v2568, 7
      %v2571 = vor.u32 %v2567, %v2570
      %v2572 = vsel %vm2494, %v2563, %v2571
      %v2573 = vrot.slane %v2571, 4
      %v2575 = vshrl.u32 %v2465, 16
      %v2577 = vrot.slane %v2575, 6
      %v2578 = vshll.u32 %v2465, 16
      %v2580 = vrot.slane %v2578, 7
      %v2581 = vor.u32 %v2577, %v2580
      %v2582 = vsel %vm2494, %v2573, %v2581
      %v2583 = vrot.slane %v2581, 4
      %v2585 = vshrl.u32 %v2466, 16
      %v2587 = vrot.slane %v2585, 6
      %v2588 = vshll.u32 %v2466, 16
      %v2590 = vrot.slane %v2588, 7
      %v2591 = vor.u32 %v2587, %v2590
      %v2592 = vsel %vm2494, %v2583, %v2591
      %v2593 = vrot.slane %v2591, 4
      %v2595 = vshrl.u32 %v2467, 16
      %v2597 = vrot.slane %v2595, 6
      %v2598 = vshll.u32 %v2467, 16
      %v2600 = vrot.slane %v2598, 7
      %v2601 = vor.u32 %v2597, %v2600
      %v2602 = vsel %vm2494, %v2593, %v2601
      %v2603 = vrot.slane %v2601, 4
      %v2605 = vshrl.u32 %v2468, 16
      %v2607 = vrot.slane %v2605, 6
      %v2608 = vshll.u32 %v2468, 16
      %v2610 = vrot.slane %v2608, 7
      %v2611 = vor.u32 %v2607, %v2610
      %v2612 = vsel %vm2494, %v2603, %v2611
      %v2613 = vrot.slane %v2611, 4
      %v2615 = vshrl.u32 %v2469, 16
      %v2617 = vrot.slane %v2615, 6
      %v2618 = vshll.u32 %v2469, 16
      %v2620 = vrot.slane %v2618, 7
      %v2621 = vor.u32 %v2617, %v2620
      %v2622 = vsel %vm2494, %v2613, %v2621
      %v2623 = vrot.slane %v2621, 4
      %v2625 = vshrl.u32 %v2470, 16
      %v2627 = vrot.slane %v2625, 6
      %v2628 = vshll.u32 %v2470, 16
      %v2630 = vrot.slane %v2628, 7
      %v2631 = vor.u32 %v2627, %v2630
      %v2632 = vsel %vm2494, %v2623, %v2631
      %v2633 = vrot.slane %v2631, 4
      %v2635 = vshrl.u32 %v2471, 16
      %v2637 = vrot.slane %v2635, 6
      %v2638 = vshll.u32 %v2471, 16
      %v2640 = vrot.slane %v2638, 7
      %v2641 = vor.u32 %v2637, %v2640
      %v2642 = vsel %vm2494, %v2633, %v2641
      %v2643 = vrot.slane %v2641, 4
      %v2645 = vshrl.u32 %v2472, 16
      %v2647 = vrot.slane %v2645, 6
      %v2648 = vshll.u32 %v2472, 16
      %v2650 = vrot.slane %v2648, 7
      %v2651 = vor.u32 %v2647, %v2650
      %v2652 = vsel %vm2494, %v2643, %v2651
      %v2653 = vrot.slane %v2651, 4
      %v2655 = vshrl.u32 %v2473, 16
      %v2657 = vrot.slane %v2655, 6
      %v2658 = vshll.u32 %v2473, 16
      %v2660 = vrot.slane %v2658, 7
      %v2661 = vor.u32 %v2657, %v2660
      %v2662 = vsel %vm2494, %v2653, %v2661
      %v2663 = vrot.slane %v2661, 4
      %v2665 = vshrl.u32 %v2474, 16
      %v2667 = vrot.slane %v2665, 6
      %v2668 = vshll.u32 %v2474, 16
      %v2670 = vrot.slane %v2668, 7
      %v2671 = vor.u32 %v2667, %v2670
      %v2672 = vsel %vm2494, %v2663, %v2671
      %v2673 = vrot.slane %v2671, 4
      %v2675 = vshrl.u32 %v2475, 16
      %v2677 = vrot.slane %v2675, 6
      %v2678 = vshll.u32 %v2475, 16
      %v2680 = vrot.slane %v2678, 7
      %v2681 = vor.u32 %v2677, %v2680
      %v2682 = vsel %vm2494, %v2673, %v2681
      %v2683 = vrot.slane %v2681, 4
      %v2685 = vshrl.u32 %v2476, 16
      %v2687 = vrot.slane %v2685, 6
      %v2688 = vshll.u32 %v2476, 16
      %v2690 = vrot.slane %v2688, 7
      %v2691 = vor.u32 %v2687, %v2690
      %v2692 = vsel %vm2494, %v2683, %v2691
      %v2693 = vrot.slane %v2691, 4
      %v2695 = vshrl.u32 %v2477, 16
      %v2697 = vrot.slane %v2695, 6
      %v2698 = vshll.u32 %v2477, 16
      %v2700 = vrot.slane %v2698, 7
      %v2701 = vor.u32 %v2697, %v2700
      %v2702 = vsel %vm2494, %v2693, %v2701
      %v2703 = vrot.slane %v2701, 4
      %v2705 = vshrl.u32 %v2478, 16
      %v2707 = vrot.slane %v2705, 6
      %v2708 = vshll.u32 %v2478, 16
      %v2710 = vrot.slane %v2708, 7
      %v2711 = vor.u32 %v2707, %v2710
      %v2712 = vsel %vm2494, %v2703, %v2711
      %v2713 = vrot.slane %v2711, 4
      %v2715 = vshrl.u32 %v2479, 16
      %v2717 = vrot.slane %v2715, 6
      %v2718 = vshll.u32 %v2479, 16
      %v2720 = vrot.slane %v2718, 7
      %v2721 = vor.u32 %v2717, %v2720
      %v2722 = vsel %vm2494, %v2713, %v2721
      %v2723 = vrot.slane %v2721, 4
      %v2725 = vshrl.u32 %v2480, 16
      %v2727 = vrot.slane %v2725, 6
      %v2728 = vshll.u32 %v2480, 16
      %v2730 = vrot.slane %v2728, 7
      %v2731 = vor.u32 %v2727, %v2730
      %v2732 = vsel %vm2494, %v2723, %v2731
      %v2733 = vrot.slane %v2731, 4
      %v2735 = vshrl.u32 %v2481, 16
      %v2737 = vrot.slane %v2735, 6
      %v2738 = vshll.u32 %v2481, 16
      %v2740 = vrot.slane %v2738, 7
      %v2741 = vor.u32 %v2737, %v2740
      %v2742 = vsel %vm2494, %v2733, %v2741
      %v2743 = vrot.slane %v2741, 4
      %v2745 = vshrl.u32 %v2482, 16
      %v2747 = vrot.slane %v2745, 6
      %v2748 = vshll.u32 %v2482, 16
      %v2750 = vrot.slane %v2748, 7
      %v2751 = vor.u32 %v2747, %v2750
      %v2752 = vsel %vm2494, %v2743, %v2751
      %v2753 = vrot.slane %v2751, 4
      %v2755 = vshrl.u32 %v2483, 16
      %v2757 = vrot.slane %v2755, 6
      %v2758 = vshll.u32 %v2483, 16
      %v2760 = vrot.slane %v2758, 7
      %v2761 = vor.u32 %v2757, %v2760
      %v2762 = vsel %vm2494, %v2753, %v2761
      %v2763 = vrot.slane %v2761, 4
      %v2765 = vshrl.u32 %v2484, 16
      %v2767 = vrot.slane %v2765, 6
      %v2768 = vshll.u32 %v2484, 16
      %v2770 = vrot.slane %v2768, 7
      %v2771 = vor.u32 %v2767, %v2770
      %v2772 = vsel %vm2494, %v2763, %v2771
      %v2773 = vrot.slane %v2771, 4
      %v2775 = vshrl.u32 %v2485, 16
      %v2777 = vrot.slane %v2775, 6
      %v2778 = vshll.u32 %v2485, 16
      %v2780 = vrot.slane %v2778, 7
      %v2781 = vor.u32 %v2777, %v2780
      %v2782 = vsel %vm2494, %v2773, %v2781
      %v2783 = vrot.slane %v2781, 4
      %v2785 = vshrl.u32 %v2486, 16
      %v2787 = vrot.slane %v2785, 6
      %v2788 = vshll.u32 %v2486, 16
      %v2790 = vrot.slane %v2788, 7
      %v2791 = vor.u32 %v2787, %v2790
      %v2792 = vsel %vm2494, %v2783, %v2791
      %v2793 = vrot.slane %v2791, 4
      %v2795 = vshrl.u32 %v2487, 16
      %v2797 = vrot.slane %v2795, 6
      %v2798 = vshll.u32 %v2487, 16
      %v2800 = vrot.slane %v2798, 7
      %v2801 = vor.u32 %v2797, %v2800
      %v2802 = vsel %vm2494, %v2793, %v2801
      %v2803 = vrot.slane %v2801, 4
      %v2805 = vshrl.u32 %v2488, 16
      %v2807 = vrot.slane %v2805, 6
      %v2808 = vshll.u32 %v2488, 16
      %v2810 = vrot.slane %v2808, 7
      %v2811 = vor.u32 %v2807, %v2810
      %v2812 = vsel %vm2494, %v2803, %v2811
      %v2813 = vrot.slane %v2811, 4
      %v2815 = vshrl.u32 %v2489, 16
      %v2817 = vrot.slane %v2815, 6
      %v2818 = vshll.u32 %v2489, 16
      %v2820 = vrot.slane %v2818, 7
      %v2821 = vor.u32 %v2817, %v2820
      %v2822 = vsel %vm2494, %v2813, %v2821
      %v2823 = vrot.slane %v2821, 4
      %v2825 = vshrl.u32 %v2490, 16
      %v2827 = vrot.slane %v2825, 6
      %v2828 = vshll.u32 %v2490, 16
      %v2830 = vrot.slane %v2828, 7
      %v2831 = vor.u32 %v2827, %v2830
      %v2832 = vsel %vm2494, %v2823, %v2831
      %v2833 = vrot.slane %v2831, 4
      %v2835 = vshrl.u32 %v2491, 16
      %v2837 = vrot.slane %v2835, 6
      %v2838 = vshll.u32 %v2491, 16
      %v2840 = vrot.slane %v2838, 7
      %v2841 = vor.u32 %v2837, %v2840
      %v2842 = vsel %vm2494, %v2833, %v2841
      %v2843 = vrot.slane %v2841, 4
      %v2845 = vshrl.u32 %v2492, 16
      %v2847 = vrot.slane %v2845, 6
      %v2848 = vshll.u32 %v2492, 16
      %v2850 = vrot.slane %v2848, 7
      %v2851 = vor.u32 %v2847, %v2850
      %v2852 = vsel %vm2494, %v2843, %v2851
      %v2853 = vrot.slane %v2851, 4
      %v2891 = vld [vmem:[#allocation2 + $0x8] sm:$0xe]
      %v2892 = vsel %vm2376, %v2502, %v2891
      %2893 = vst [vmem:[#allocation2 + $0x8] sm:$0xe] %v2892
      %2894 = vst.msk [vmem:[#allocation2 + $0xc] sm:$0xf] %vm2365, %v2512
      %2895 = vst.msk [vmem:[#allocation2 + $0x10] sm:$0xf] %vm2365, %v2522
      %2896 = vst.msk [vmem:[#allocation2 + $0x14] sm:$0xf] %vm2365, %v2532
      %2897 = vst.msk [vmem:[#allocation2 + $0x18] sm:$0xf] %vm2365, %v2542
      %2898 = vst.msk [vmem:[#allocation2 + $0x1c] sm:$0xf] %vm2365, %v2552
      %2899 = vst.msk [vmem:[#allocation2 + $0x20] sm:$0xf] %vm2365, %v2562
      %2900 = vst.msk [vmem:[#allocation2 + $0x24] sm:$0xf] %vm2365, %v2572
      %2901 = vst.msk [vmem:[#allocation2 + $0x28] sm:$0xf] %vm2365, %v2582
      %2902 = vst.msk [vmem:[#allocation2 + $0x2c] sm:$0xf] %vm2365, %v2592
      %2903 = vst.msk [vmem:[#allocation2 + $0x30] sm:$0xf] %vm2365, %v2602
      %2904 = vst.msk [vmem:[#allocation2 + $0x34] sm:$0xf] %vm2365, %v2612
      %2905 = vst.msk [vmem:[#allocation2 + $0x38] sm:$0xf] %vm2365, %v2622
      %2906 = vst.msk [vmem:[#allocation2 + $0x3c] sm:$0xf] %vm2365, %v2632
      %2907 = vst.msk [vmem:[#allocation2 + $0x40] sm:$0xf] %vm2365, %v2642
      %2908 = vst.msk [vmem:[#allocation2 + $0x44] sm:$0xf] %vm2365, %v2652
      %2909 = vst.msk [vmem:[#allocation2 + $0x48] sm:$0xf] %vm2365, %v2662
      %2910 = vst.msk [vmem:[#allocation2 + $0x4c] sm:$0xf] %vm2365, %v2672
      %2911 = vst.msk [vmem:[#allocation2 + $0x50] sm:$0xf] %vm2365, %v2682
      %2912 = vst.msk [vmem:[#allocation2 + $0x54] sm:$0xf] %vm2365, %v2692
      %2913 = vst.msk [vmem:[#allocation2 + $0x58] sm:$0xf] %vm2365, %v2702
      %2914 = vst.msk [vmem:[#allocation2 + $0x5c] sm:$0xf] %vm2365, %v2712
      %2915 = vst.msk [vmem:[#allocation2 + $0x60] sm:$0xf] %vm2365, %v2722
      %2916 = vst.msk [vmem:[#allocation2 + $0x64] sm:$0xf] %vm2365, %v2732
      %2917 = vst.msk [vmem:[#allocation2 + $0x68] sm:$0xf] %vm2365, %v2742
      %2918 = vst.msk [vmem:[#allocation2 + $0x6c] sm:$0xf] %vm2365, %v2752
      %2919 = vst.msk [vmem:[#allocation2 + $0x70] sm:$0xf] %vm2365, %v2762
      %2920 = vst.msk [vmem:[#allocation2 + $0x74] sm:$0xf] %vm2365, %v2772
      %2921 = vst.msk [vmem:[#allocation2 + $0x78] sm:$0xf] %vm2365, %v2782
      %2922 = vst.msk [vmem:[#allocation2 + $0x7c] sm:$0xf] %vm2365, %v2792
      %2923 = vst.msk [vmem:[#allocation2 + $0x80] sm:$0xf] %vm2365, %v2802
      %2924 = vst.msk [vmem:[#allocation2 + $0x84] sm:$0xf] %vm2365, %v2812
      %2925 = vst.msk [vmem:[#allocation2 + $0x88] sm:$0xf] %vm2365, %v2822
      %2926 = vst.msk [vmem:[#allocation2 + $0x8c] sm:$0xf] %vm2365, %v2832
      %2927 = vst.msk [vmem:[#allocation2 + $0x90] sm:$0xf] %vm2365, %v2842
      %2928 = vst.msk [vmem:[#allocation2 + $0x94] sm:$0xf] %vm2365, %v2852
      %v2929 = vld [vmem:[#allocation2 + $0x98] sm:$0x3]
      %v2930 = vsel %vm2370, %v2853, %v2929
      %2931 = vst [vmem:[#allocation2 + $0x98] sm:$0x3] %v2930
      %v2932 = vld [vmem:[#allocation2] sm:$0xf]
      %v2933 = vld [vmem:[#allocation2 + $0x4] sm:$0xf]
      %v2934 = vld [vmem:[#allocation2 + $0x8] sm:$0xf]
      %v2935 = vld [vmem:[#allocation2 + $0xc] sm:$0xf]
      %v2936 = vld [vmem:[#allocation2 + $0x10] sm:$0xf]
      %v2937 = vld [vmem:[#allocation2 + $0x14] sm:$0xf]
      %v2938 = vld [vmem:[#allocation2 + $0x18] sm:$0xf]
      %v2939 = vld [vmem:[#allocation2 + $0x1c] sm:$0xf]
      %v2940 = vld [vmem:[#allocation2 + $0x20] sm:$0xf]
      %v2941 = vld [vmem:[#allocation2 + $0x24] sm:$0xf]
      %v2942 = vld [vmem:[#allocation2 + $0x28] sm:$0xf]
      %v2943 = vld [vmem:[#allocation2 + $0x2c] sm:$0xf]
      %v2944 = vld [vmem:[#allocation2 + $0x30] sm:$0xf]
      %v2945 = vld [vmem:[#allocation2 + $0x34] sm:$0xf]
      %v2946 = vld [vmem:[#allocation2 + $0x38] sm:$0xf]
      %v2947 = vld [vmem:[#allocation2 + $0x3c] sm:$0xf]
      %v2948 = vld [vmem:[#allocation2 + $0x40] sm:$0xf]
      %v2949 = vld [vmem:[#allocation2 + $0x44] sm:$0xf]
      %v2950 = vld [vmem:[#allocation2 + $0x48] sm:$0xf]
      %v2951 = vld [vmem:[#allocation2 + $0x4c] sm:$0xf]
      %v2952 = vld [vmem:[#allocation2 + $0x50] sm:$0xf]
      %v2953 = vld [vmem:[#allocation2 + $0x54] sm:$0xf]
      %v2954 = vld [vmem:[#allocation2 + $0x58] sm:$0xf]
      %v2955 = vld [vmem:[#allocation2 + $0x5c] sm:$0xf]
      %v2956 = vld [vmem:[#allocation2 + $0x60] sm:$0xf]
      %v2957 = vld [vmem:[#allocation2 + $0x64] sm:$0xf]
      %v2958 = vld [vmem:[#allocation2 + $0x68] sm:$0xf]
      %v2959 = vld [vmem:[#allocation2 + $0x6c] sm:$0xf]
      %v2960 = vld [vmem:[#allocation2 + $0x70] sm:$0xf]
      %v2961 = vld [vmem:[#allocation2 + $0x74] sm:$0xf]
      %v2962 = vld [vmem:[#allocation2 + $0x78] sm:$0xf]
      %v2963 = vld [vmem:[#allocation2 + $0x7c] sm:$0xf]
      %v2964 = vld [vmem:[#allocation2 + $0x80] sm:$0xf]
      %v2965 = vld [vmem:[#allocation2 + $0x84] sm:$0xf]
      %v2966 = vld [vmem:[#allocation2 + $0x88] sm:$0xf]
      %v2967 = vld [vmem:[#allocation2 + $0x8c] sm:$0xf]
      %v2968 = vld [vmem:[#allocation2 + $0x90] sm:$0xf]
      %v2969 = vld [vmem:[#allocation2 + $0x94] sm:$0xf]
      %v2970 = vld [vmem:[#allocation2 + $0x98] sm:$0xf]
      %v2971 = vld [vmem:[#allocation2 + $0x9c] sm:$0xf]
      %v2972 = vld [vmem:[#allocation2 + $0xa0] sm:$0xf]
      %v3009 = vunpack.c.l.b16 %v2932
      %v3010 = vunpack.c.l.b16 %v2933
      %v3011 = vunpack.c.l.b16 %v2934
      %v3012 = vunpack.c.l.b16 %v2935
      %v3013 = vunpack.c.l.b16 %v2936
      %v3014 = vunpack.c.l.b16 %v2937
      %v3015 = vunpack.c.l.b16 %v2938
      %v3016 = vunpack.c.l.b16 %v2939
      %v3017 = vunpack.c.l.b16 %v2940
      %v3018 = vunpack.c.l.b16 %v2941
      %v3019 = vunpack.c.l.b16 %v2942
      %v3020 = vunpack.c.l.b16 %v2943
      %v3021 = vunpack.c.l.b16 %v2944
      %v3022 = vunpack.c.l.b16 %v2945
      %v3023 = vunpack.c.l.b16 %v2946
      %v3024 = vunpack.c.l.b16 %v2947
      %v3025 = vunpack.c.l.b16 %v2948
      %v3026 = vunpack.c.l.b16 %v2949
      %v3027 = vunpack.c.l.b16 %v2950
      %v3028 = vunpack.c.l.b16 %v2951
      %v3029 = vunpack.c.l.b16 %v2952
      %v3030 = vunpack.c.l.b16 %v2953
      %v3031 = vunpack.c.l.b16 %v2954
      %v3032 = vunpack.c.l.b16 %v2955
      %v3033 = vunpack.c.l.b16 %v2956
      %v3034 = vunpack.c.l.b16 %v2957
      %v3035 = vunpack.c.l.b16 %v2958
      %v3036 = vunpack.c.l.b16 %v2959
      %v3037 = vunpack.c.l.b16 %v2960
      %v3038 = vunpack.c.l.b16 %v2961
      %v3039 = vunpack.c.l.b16 %v2962
      %v3040 = vunpack.c.l.b16 %v2963
      %v3041 = vunpack.c.l.b16 %v2964
      %v3042 = vunpack.c.l.b16 %v2965
      %v3043 = vunpack.c.l.b16 %v2966
      %v3044 = vunpack.c.l.b16 %v2967
      %v3045 = vpack.c.b16 %v3010, %v3009
      %v3046 = vpack.c.b16 %v3012, %v3011
      %v3047 = vpack.c.b16 %v3014, %v3013
      %v3048 = vpack.c.b16 %v3016, %v3015
      %v3049 = vpack.c.b16 %v3018, %v3017
      %v3050 = vpack.c.b16 %v3020, %v3019
      %v3051 = vpack.c.b16 %v3022, %v3021
      %v3052 = vpack.c.b16 %v3024, %v3023
      %v3053 = vpack.c.b16 %v3026, %v3025
      %v3054 = vpack.c.b16 %v3028, %v3027
      %v3055 = vpack.c.b16 %v3030, %v3029
      %v3056 = vpack.c.b16 %v3032, %v3031
      %v3057 = vpack.c.b16 %v3034, %v3033
      %v3058 = vpack.c.b16 %v3036, %v3035
      %v3059 = vpack.c.b16 %v3038, %v3037
      %v3060 = vpack.c.b16 %v3040, %v3039
      %v3061 = vpack.c.b16 %v3042, %v3041
      %v3062 = vpack.c.b16 %v3044, %v3043
      %v3064 = vunpack.c.l.b16 %v2968
      %v3065 = vpack.c.b16 %v3064, %v3064
      %v3067 = vshrl.u32 %v3045, 16
      %v3069 = vshll.u32 %v3045, 16
      %v3071 = vrot.slane %v3069, 1
      %v3072 = vor.u32 %v3067, %v3071
      %v3074 = vshll.u32 %v3046, 16
      %v3076 = vrot.slane %v3074, 1
      %v3077 = vsel %vm495, %v3072, %v3076
      %v3078 = vshrl.u32 %v3046, 16
      %v3080 = vor.u32 %v3078, %v3076
      %v3082 = vshll.u32 %v3047, 16
      %v3084 = vrot.slane %v3082, 1
      %v3085 = vsel %vm495, %v3080, %v3084
      %v3086 = vshrl.u32 %v3047, 16
      %v3088 = vor.u32 %v3086, %v3084
      %v3090 = vshll.u32 %v3048, 16
      %v3092 = vrot.slane %v3090, 1
      %v3093 = vsel %vm495, %v3088, %v3092
      %v3094 = vshrl.u32 %v3048, 16
      %v3096 = vor.u32 %v3094, %v3092
      %v3098 = vshll.u32 %v3049, 16
      %v3100 = vrot.slane %v3098, 1
      %v3101 = vsel %vm495, %v3096, %v3100
      %v3102 = vshrl.u32 %v3049, 16
      %v3104 = vor.u32 %v3102, %v3100
      %v3106 = vshll.u32 %v3050, 16
      %v3108 = vrot.slane %v3106, 1
      %v3109 = vsel %vm495, %v3104, %v3108
      %v3110 = vshrl.u32 %v3050, 16
      %v3112 = vor.u32 %v3110, %v3108
      %v3114 = vshll.u32 %v3051, 16
      %v3116 = vrot.slane %v3114, 1
      %v3117 = vsel %vm495, %v3112, %v3116
      %v3118 = vshrl.u32 %v3051, 16
      %v3120 = vor.u32 %v3118, %v3116
      %v3122 = vshll.u32 %v3052, 16
      %v3124 = vrot.slane %v3122, 1
      %v3125 = vsel %vm495, %v3120, %v3124
      %v3126 = vshrl.u32 %v3052, 16
      %v3128 = vor.u32 %v3126, %v3124
      %v3130 = vshll.u32 %v3053, 16
      %v3132 = vrot.slane %v3130, 1
      %v3133 = vsel %vm495, %v3128, %v3132
      %v3134 = vshrl.u32 %v3053, 16
      %v3136 = vor.u32 %v3134, %v3132
      %v3138 = vshll.u32 %v3054, 16
      %v3140 = vrot.slane %v3138, 1
      %v3141 = vsel %vm495, %v3136, %v3140
      %v3142 = vshrl.u32 %v3054, 16
      %v3144 = vor.u32 %v3142, %v3140
      %v3146 = vshll.u32 %v3055, 16
      %v3148 = vrot.slane %v3146, 1
      %v3149 = vsel %vm495, %v3144, %v3148
      %v3150 = vshrl.u32 %v3055, 16
      %v3152 = vor.u32 %v3150, %v3148
      %v3154 = vshll.u32 %v3056, 16
      %v3156 = vrot.slane %v3154, 1
      %v3157 = vsel %vm495, %v3152, %v3156
      %v3158 = vshrl.u32 %v3056, 16
      %v3160 = vor.u32 %v3158, %v3156
      %v3162 = vshll.u32 %v3057, 16
      %v3164 = vrot.slane %v3162, 1
      %v3165 = vsel %vm495, %v3160, %v3164
      %v3166 = vshrl.u32 %v3057, 16
      %v3168 = vor.u32 %v3166, %v3164
      %v3170 = vshll.u32 %v3058, 16
      %v3172 = vrot.slane %v3170, 1
      %v3173 = vsel %vm495, %v3168, %v3172
      %v3174 = vshrl.u32 %v3058, 16
      %v3176 = vor.u32 %v3174, %v3172
      %v3178 = vshll.u32 %v3059, 16
      %v3180 = vrot.slane %v3178, 1
      %v3181 = vsel %vm495, %v3176, %v3180
      %v3182 = vshrl.u32 %v3059, 16
      %v3184 = vor.u32 %v3182, %v3180
      %v3186 = vshll.u32 %v3060, 16
      %v3188 = vrot.slane %v3186, 1
      %v3189 = vsel %vm495, %v3184, %v3188
      %v3190 = vshrl.u32 %v3060, 16
      %v3192 = vor.u32 %v3190, %v3188
      %v3194 = vshll.u32 %v3061, 16
      %v3196 = vrot.slane %v3194, 1
      %v3197 = vsel %vm495, %v3192, %v3196
      %v3198 = vshrl.u32 %v3061, 16
      %v3200 = vor.u32 %v3198, %v3196
      %v3202 = vshll.u32 %v3062, 16
      %v3204 = vrot.slane %v3202, 1
      %v3205 = vsel %vm495, %v3200, %v3204
      %v3206 = vshrl.u32 %v3062, 16
      %v3208 = vor.u32 %v3206, %v3204
      %v3210 = vshll.u32 %v3065, 16
      %v3212 = vrot.slane %v3210, 1
      %v3213 = vsel %vm495, %v3208, %v3212
      %3214 = vrot.lane.b32.xlu0 %v3077, 64
      %v3215 = vpop.permute.xlu0 %3214
      %3216 = vrot.lane.b32.xlu0 %v3085, 64
      %v3217 = vpop.permute.xlu0 %3216
      %3218 = vrot.lane.b32.xlu0 %v3093, 64
      %v3219 = vpop.permute.xlu0 %3218
      %3220 = vrot.lane.b32.xlu0 %v3101, 64
      %v3221 = vpop.permute.xlu0 %3220
      %3222 = vrot.lane.b32.xlu0 %v3109, 64
      %v3223 = vpop.permute.xlu0 %3222
      %3224 = vrot.lane.b32.xlu0 %v3117, 64
      %v3225 = vpop.permute.xlu0 %3224
      %3226 = vrot.lane.b32.xlu0 %v3125, 64
      %v3227 = vpop.permute.xlu0 %3226
      %3228 = vrot.lane.b32.xlu0 %v3133, 64
      %v3229 = vpop.permute.xlu0 %3228
      %3230 = vrot.lane.b32.xlu0 %v3141, 64
      %v3231 = vpop.permute.xlu0 %3230
      %3232 = vrot.lane.b32.xlu0 %v3149, 64
      %v3233 = vpop.permute.xlu0 %3232
      %3234 = vrot.lane.b32.xlu0 %v3157, 64
      %v3235 = vpop.permute.xlu0 %3234
      %3236 = vrot.lane.b32.xlu0 %v3165, 64
      %v3237 = vpop.permute.xlu0 %3236
      %3238 = vrot.lane.b32.xlu0 %v3173, 64
      %v3239 = vpop.permute.xlu0 %3238
      %3240 = vrot.lane.b32.xlu0 %v3181, 64
      %v3241 = vpop.permute.xlu0 %3240
      %3242 = vrot.lane.b32.xlu0 %v3189, 64
      %v3243 = vpop.permute.xlu0 %3242
      %3244 = vrot.lane.b32.xlu0 %v3197, 64
      %v3245 = vpop.permute.xlu0 %3244
      %3246 = vrot.lane.b32.xlu0 %v3205, 64
      %v3247 = vpop.permute.xlu0 %3246
      %3248 = vrot.lane.b32.xlu0 %v3213, 64
      %v3249 = vpop.permute.xlu0 %3248
      %v3250 = vrot.slane %v3045, 1
      %v3251 = vrot.slane %v3046, 1
      %v3252 = vsel %vm680, %v3250, %v3251
      %v3253 = vrot.slane %v3047, 1
      %v3254 = vsel %vm680, %v3251, %v3253
      %v3255 = vrot.slane %v3048, 1
      %v3256 = vsel %vm680, %v3253, %v3255
      %v3257 = vrot.slane %v3049, 1
      %v3258 = vsel %vm680, %v3255, %v3257
      %v3259 = vrot.slane %v3050, 1
      %v3260 = vsel %vm680, %v3257, %v3259
      %v3261 = vrot.slane %v3051, 1
      %v3262 = vsel %vm680, %v3259, %v3261
      %v3263 = vrot.slane %v3052, 1
      %v3264 = vsel %vm680, %v3261, %v3263
      %v3265 = vrot.slane %v3053, 1
      %v3266 = vsel %vm680, %v3263, %v3265
      %v3267 = vrot.slane %v3054, 1
      %v3268 = vsel %vm680, %v3265, %v3267
      %v3269 = vrot.slane %v3055, 1
      %v3270 = vsel %vm680, %v3267, %v3269
      %v3271 = vrot.slane %v3056, 1
      %v3272 = vsel %vm680, %v3269, %v3271
      %v3273 = vrot.slane %v3057, 1
      %v3274 = vsel %vm680, %v3271, %v3273
      %v3275 = vrot.slane %v3058, 1
      %v3276 = vsel %vm680, %v3273, %v3275
      %v3277 = vrot.slane %v3059, 1
      %v3278 = vsel %vm680, %v3275, %v3277
      %v3279 = vrot.slane %v3060, 1
      %v3280 = vsel %vm680, %v3277, %v3279
      %v3281 = vrot.slane %v3061, 1
      %v3282 = vsel %vm680, %v3279, %v3281
      %v3283 = vrot.slane %v3062, 1
      %v3284 = vsel %vm680, %v3281, %v3283
      %v3285 = vrot.slane %v3065, 1
      %v3286 = vsel %vm680, %v3283, %v3285
      %v3289 = vunpack.c.l.b16 %v2969
      %v3290 = vunpack.c.l.b16 %v2970
      %v3291 = vpack.c.b16 %v3289, %v3064
      %v3292 = vpack.c.b16 %v3290, %v3290
      %v3293 = vrot.slane %v3291, 1
      %v3294 = vsel %vm680, %v3283, %v3293
      %v3295 = vrot.slane %v3292, 1
      %v3296 = vsel %vm680, %v3293, %v3295
      %3297 = vrot.lane.b32.xlu0 %v3254, 64
      %v3298 = vpop.permute.xlu0 %3297
      %3299 = vrot.lane.b32.xlu0 %v3256, 64
      %v3300 = vpop.permute.xlu0 %3299
      %3301 = vrot.lane.b32.xlu0 %v3258, 64
      %v3302 = vpop.permute.xlu0 %3301
      %3303 = vrot.lane.b32.xlu0 %v3260, 64
      %v3304 = vpop.permute.xlu0 %3303
      %3305 = vrot.lane.b32.xlu0 %v3262, 64
      %v3306 = vpop.permute.xlu0 %3305
      %3307 = vrot.lane.b32.xlu0 %v3264, 64
      %v3308 = vpop.permute.xlu0 %3307
      %3309 = vrot.lane.b32.xlu0 %v3266, 64
      %v3310 = vpop.permute.xlu0 %3309
      %3311 = vrot.lane.b32.xlu0 %v3268, 64
      %v3312 = vpop.permute.xlu0 %3311
      %3313 = vrot.lane.b32.xlu0 %v3270, 64
      %v3314 = vpop.permute.xlu0 %3313
      %3315 = vrot.lane.b32.xlu0 %v3272, 64
      %v3316 = vpop.permute.xlu0 %3315
      %3317 = vrot.lane.b32.xlu0 %v3274, 64
      %v3318 = vpop.permute.xlu0 %3317
      %3319 = vrot.lane.b32.xlu0 %v3276, 64
      %v3320 = vpop.permute.xlu0 %3319
      %3321 = vrot.lane.b32.xlu0 %v3278, 64
      %v3322 = vpop.permute.xlu0 %3321
      %3323 = vrot.lane.b32.xlu0 %v3280, 64
      %v3324 = vpop.permute.xlu0 %3323
      %3325 = vrot.lane.b32.xlu0 %v3282, 64
      %v3326 = vpop.permute.xlu0 %3325
      %3327 = vrot.lane.b32.xlu0 %v3284, 64
      %v3328 = vpop.permute.xlu0 %3327
      %3329 = vrot.lane.b32.xlu0 %v3294, 64
      %v3330 = vpop.permute.xlu0 %3329
      %3331 = vrot.lane.b32.xlu0 %v3296, 64
      %v3332 = vpop.permute.xlu0 %3331
      %v3333 = vrot.slane %v3078, 1
      %v3334 = vrot.slane %v3074, 2
      %v3335 = vor.u32 %v3333, %v3334
      %v3336 = vrot.slane %v3086, 1
      %v3337 = vrot.slane %v3082, 2
      %v3338 = vor.u32 %v3336, %v3337
      %v3339 = vsel %vm800, %v3335, %v3338
      %v3340 = vrot.slane %v3094, 1
      %v3341 = vrot.slane %v3090, 2
      %v3342 = vor.u32 %v3340, %v3341
      %v3343 = vsel %vm800, %v3338, %v3342
      %v3344 = vrot.slane %v3102, 1
      %v3345 = vrot.slane %v3098, 2
      %v3346 = vor.u32 %v3344, %v3345
      %v3347 = vsel %vm800, %v3342, %v3346
      %v3348 = vrot.slane %v3110, 1
      %v3349 = vrot.slane %v3106, 2
      %v3350 = vor.u32 %v3348, %v3349
      %v3351 = vsel %vm800, %v3346, %v3350
      %v3352 = vrot.slane %v3118, 1
      %v3353 = vrot.slane %v3114, 2
      %v3354 = vor.u32 %v3352, %v3353
      %v3355 = vsel %vm800, %v3350, %v3354
      %v3356 = vrot.slane %v3126, 1
      %v3357 = vrot.slane %v3122, 2
      %v3358 = vor.u32 %v3356, %v3357
      %v3359 = vsel %vm800, %v3354, %v3358
      %v3360 = vrot.slane %v3134, 1
      %v3361 = vrot.slane %v3130, 2
      %v3362 = vor.u32 %v3360, %v3361
      %v3363 = vsel %vm800, %v3358, %v3362
      %v3364 = vrot.slane %v3142, 1
      %v3365 = vrot.slane %v3138, 2
      %v3366 = vor.u32 %v3364, %v3365
      %v3367 = vsel %vm800, %v3362, %v3366
      %v3368 = vrot.slane %v3150, 1
      %v3369 = vrot.slane %v3146, 2
      %v3370 = vor.u32 %v3368, %v3369
      %v3371 = vsel %vm800, %v3366, %v3370
      %v3372 = vrot.slane %v3158, 1
      %v3373 = vrot.slane %v3154, 2
      %v3374 = vor.u32 %v3372, %v3373
      %v3375 = vsel %vm800, %v3370, %v3374
      %v3376 = vrot.slane %v3166, 1
      %v3377 = vrot.slane %v3162, 2
      %v3378 = vor.u32 %v3376, %v3377
      %v3379 = vsel %vm800, %v3374, %v3378
      %v3380 = vrot.slane %v3174, 1
      %v3381 = vrot.slane %v3170, 2
      %v3382 = vor.u32 %v3380, %v3381
      %v3383 = vsel %vm800, %v3378, %v3382
      %v3384 = vrot.slane %v3182, 1
      %v3385 = vrot.slane %v3178, 2
      %v3386 = vor.u32 %v3384, %v3385
      %v3387 = vsel %vm800, %v3382, %v3386
      %v3388 = vrot.slane %v3190, 1
      %v3389 = vrot.slane %v3186, 2
      %v3390 = vor.u32 %v3388, %v3389
      %v3391 = vsel %vm800, %v3386, %v3390
      %v3392 = vrot.slane %v3198, 1
      %v3393 = vrot.slane %v3194, 2
      %v3394 = vor.u32 %v3392, %v3393
      %v3395 = vsel %vm800, %v3390, %v3394
      %v3396 = vrot.slane %v3206, 1
      %v3397 = vrot.slane %v3202, 2
      %v3398 = vor.u32 %v3396, %v3397
      %v3399 = vsel %vm800, %v3394, %v3398
      %v3401 = vshrl.u32 %v3291, 16
      %v3403 = vrot.slane %v3401, 1
      %v3404 = vshll.u32 %v3291, 16
      %v3406 = vrot.slane %v3404, 2
      %v3407 = vor.u32 %v3403, %v3406
      %v3408 = vsel %vm800, %v3398, %v3407
      %v3410 = vshrl.u32 %v3292, 16
      %v3412 = vrot.slane %v3410, 1
      %v3413 = vshll.u32 %v3292, 16
      %v3415 = vrot.slane %v3413, 2
      %v3416 = vor.u32 %v3412, %v3415
      %v3417 = vsel %vm800, %v3407, %v3416
      %v3418 = vrot.slane %v3046, 2
      %v3419 = vrot.slane %v3047, 2
      %v3420 = vsel %vm886, %v3418, %v3419
      %v3421 = vrot.slane %v3048, 2
      %v3422 = vsel %vm886, %v3419, %v3421
      %v3423 = vrot.slane %v3049, 2
      %v3424 = vsel %vm886, %v3421, %v3423
      %v3425 = vrot.slane %v3050, 2
      %v3426 = vsel %vm886, %v3423, %v3425
      %v3427 = vrot.slane %v3051, 2
      %v3428 = vsel %vm886, %v3425, %v3427
      %v3429 = vrot.slane %v3052, 2
      %v3430 = vsel %vm886, %v3427, %v3429
      %v3431 = vrot.slane %v3053, 2
      %v3432 = vsel %vm886, %v3429, %v3431
      %v3433 = vrot.slane %v3054, 2
      %v3434 = vsel %vm886, %v3431, %v3433
      %v3435 = vrot.slane %v3055, 2
      %v3436 = vsel %vm886, %v3433, %v3435
      %v3437 = vrot.slane %v3056, 2
      %v3438 = vsel %vm886, %v3435, %v3437
      %v3439 = vrot.slane %v3057, 2
      %v3440 = vsel %vm886, %v3437, %v3439
      %v3441 = vrot.slane %v3058, 2
      %v3442 = vsel %vm886, %v3439, %v3441
      %v3443 = vrot.slane %v3059, 2
      %v3444 = vsel %vm886, %v3441, %v3443
      %v3445 = vrot.slane %v3060, 2
      %v3446 = vsel %vm886, %v3443, %v3445
      %v3447 = vrot.slane %v3061, 2
      %v3448 = vsel %vm886, %v3445, %v3447
      %v3449 = vrot.slane %v3062, 2
      %v3450 = vsel %vm886, %v3447, %v3449
      %v3451 = vrot.slane %v3291, 2
      %v3452 = vsel %vm886, %v3449, %v3451
      %v3453 = vrot.slane %v3292, 2
      %v3454 = vsel %vm886, %v3451, %v3453
      %3455 = vrot.lane.b32.xlu0 %v3420, 64
      %v3456 = vpop.permute.xlu0 %3455
      %3457 = vrot.lane.b32.xlu0 %v3422, 64
      %v3458 = vpop.permute.xlu0 %3457
      %3459 = vrot.lane.b32.xlu0 %v3424, 64
      %v3460 = vpop.permute.xlu0 %3459
      %3461 = vrot.lane.b32.xlu0 %v3426, 64
      %v3462 = vpop.permute.xlu0 %3461
      %3463 = vrot.lane.b32.xlu0 %v3428, 64
      %v3464 = vpop.permute.xlu0 %3463
      %3465 = vrot.lane.b32.xlu0 %v3430, 64
      %v3466 = vpop.permute.xlu0 %3465
      %3467 = vrot.lane.b32.xlu0 %v3432, 64
      %v3468 = vpop.permute.xlu0 %3467
      %3469 = vrot.lane.b32.xlu0 %v3434, 64
      %v3470 = vpop.permute.xlu0 %3469
      %3471 = vrot.lane.b32.xlu0 %v3436, 64
      %v3472 = vpop.permute.xlu0 %3471
      %3473 = vrot.lane.b32.xlu0 %v3438, 64
      %v3474 = vpop.permute.xlu0 %3473
      %3475 = vrot.lane.b32.xlu0 %v3440, 64
      %v3476 = vpop.permute.xlu0 %3475
      %3477 = vrot.lane.b32.xlu0 %v3442, 64
      %v3478 = vpop.permute.xlu0 %3477
      %3479 = vrot.lane.b32.xlu0 %v3444, 64
      %v3480 = vpop.permute.xlu0 %3479
      %3481 = vrot.lane.b32.xlu0 %v3446, 64
      %v3482 = vpop.permute.xlu0 %3481
      %3483 = vrot.lane.b32.xlu0 %v3448, 64
      %v3484 = vpop.permute.xlu0 %3483
      %3485 = vrot.lane.b32.xlu0 %v3450, 64
      %v3486 = vpop.permute.xlu0 %3485
      %3487 = vrot.lane.b32.xlu0 %v3452, 64
      %v3488 = vpop.permute.xlu0 %3487
      %3489 = vrot.lane.b32.xlu0 %v3454, 64
      %v3490 = vpop.permute.xlu0 %3489
      %v3493 = vunpack.c.l.b16 %v2971
      %v3494 = vunpack.c.l.b16 %v2972
      %v3495 = vpack.c.b16 %v3493, %v3290
      %v3496 = vpack.c.b16 %v3494, %v3494
      %v3497 = vrot.slane %v3495, 2
      %v3498 = vsel %vm886, %v3451, %v3497
      %v3499 = vrot.slane %v3496, 2
      %v3500 = vsel %vm886, %v3497, %v3499
      %v3501 = vrot.slane %v3086, 2
      %v3502 = vrot.slane %v3082, 3
      %v3503 = vor.u32 %v3501, %v3502
      %v3504 = vrot.slane %v3094, 2
      %v3505 = vrot.slane %v3090, 3
      %v3506 = vor.u32 %v3504, %v3505
      %v3507 = vsel %vm1006, %v3503, %v3506
      %v3508 = vrot.slane %v3102, 2
      %v3509 = vrot.slane %v3098, 3
      %v3510 = vor.u32 %v3508, %v3509
      %v3511 = vsel %vm1006, %v3506, %v3510
      %v3512 = vrot.slane %v3110, 2
      %v3513 = vrot.slane %v3106, 3
      %v3514 = vor.u32 %v3512, %v3513
      %v3515 = vsel %vm1006, %v3510, %v3514
      %v3516 = vrot.slane %v3118, 2
      %v3517 = vrot.slane %v3114, 3
      %v3518 = vor.u32 %v3516, %v3517
      %v3519 = vsel %vm1006, %v3514, %v3518
      %v3520 = vrot.slane %v3126, 2
      %v3521 = vrot.slane %v3122, 3
      %v3522 = vor.u32 %v3520, %v3521
      %v3523 = vsel %vm1006, %v3518, %v3522
      %v3524 = vrot.slane %v3134, 2
      %v3525 = vrot.slane %v3130, 3
      %v3526 = vor.u32 %v3524, %v3525
      %v3527 = vsel %vm1006, %v3522, %v3526
      %v3528 = vrot.slane %v3142, 2
      %v3529 = vrot.slane %v3138, 3
      %v3530 = vor.u32 %v3528, %v3529
      %v3531 = vsel %vm1006, %v3526, %v3530
      %v3532 = vrot.slane %v3150, 2
      %v3533 = vrot.slane %v3146, 3
      %v3534 = vor.u32 %v3532, %v3533
      %v3535 = vsel %vm1006, %v3530, %v3534
      %v3536 = vrot.slane %v3158, 2
      %v3537 = vrot.slane %v3154, 3
      %v3538 = vor.u32 %v3536, %v3537
      %v3539 = vsel %vm1006, %v3534, %v3538
      %v3540 = vrot.slane %v3166, 2
      %v3541 = vrot.slane %v3162, 3
      %v3542 = vor.u32 %v3540, %v3541
      %v3543 = vsel %vm1006, %v3538, %v3542
      %v3544 = vrot.slane %v3174, 2
      %v3545 = vrot.slane %v3170, 3
      %v3546 = vor.u32 %v3544, %v3545
      %v3547 = vsel %vm1006, %v3542, %v3546
      %v3548 = vrot.slane %v3182, 2
      %v3549 = vrot.slane %v3178, 3
      %v3550 = vor.u32 %v3548, %v3549
      %v3551 = vsel %vm1006, %v3546, %v3550
      %v3552 = vrot.slane %v3190, 2
      %v3553 = vrot.slane %v3186, 3
      %v3554 = vor.u32 %v3552, %v3553
      %v3555 = vsel %vm1006, %v3550, %v3554
      %v3556 = vrot.slane %v3198, 2
      %v3557 = vrot.slane %v3194, 3
      %v3558 = vor.u32 %v3556, %v3557
      %v3559 = vsel %vm1006, %v3554, %v3558
      %v3560 = vrot.slane %v3206, 2
      %v3561 = vrot.slane %v3202, 3
      %v3562 = vor.u32 %v3560, %v3561
      %v3563 = vsel %vm1006, %v3558, %v3562
      %v3564 = vrot.slane %v3401, 2
      %v3565 = vrot.slane %v3404, 3
      %v3566 = vor.u32 %v3564, %v3565
      %v3567 = vsel %vm1006, %v3562, %v3566
      %v3569 = vshrl.u32 %v3495, 16
      %v3571 = vrot.slane %v3569, 2
      %v3572 = vshll.u32 %v3495, 16
      %v3574 = vrot.slane %v3572, 3
      %v3575 = vor.u32 %v3571, %v3574
      %v3576 = vsel %vm1006, %v3566, %v3575
      %v3578 = vshrl.u32 %v3496, 16
      %v3580 = vrot.slane %v3578, 2
      %v3581 = vshll.u32 %v3496, 16
      %v3583 = vrot.slane %v3581, 3
      %v3584 = vor.u32 %v3580, %v3583
      %v3585 = vsel %vm1006, %v3575, %v3584
      %3586 = vrot.lane.b32.xlu0 %v3507, 64
      %v3587 = vpop.permute.xlu0 %3586
      %3588 = vrot.lane.b32.xlu0 %v3511, 64
      %v3589 = vpop.permute.xlu0 %3588
      %3590 = vrot.lane.b32.xlu0 %v3515, 64
      %v3591 = vpop.permute.xlu0 %3590
      %3592 = vrot.lane.b32.xlu0 %v3519, 64
      %v3593 = vpop.permute.xlu0 %3592
      %3594 = vrot.lane.b32.xlu0 %v3523, 64
      %v3595 = vpop.permute.xlu0 %3594
      %3596 = vrot.lane.b32.xlu0 %v3527, 64
      %v3597 = vpop.permute.xlu0 %3596
      %3598 = vrot.lane.b32.xlu0 %v3531, 64
      %v3599 = vpop.permute.xlu0 %3598
      %3600 = vrot.lane.b32.xlu0 %v3535, 64
      %v3601 = vpop.permute.xlu0 %3600
      %3602 = vrot.lane.b32.xlu0 %v3539, 64
      %v3603 = vpop.permute.xlu0 %3602
      %3604 = vrot.lane.b32.xlu0 %v3543, 64
      %v3605 = vpop.permute.xlu0 %3604
      %3606 = vrot.lane.b32.xlu0 %v3547, 64
      %v3607 = vpop.permute.xlu0 %3606
      %3608 = vrot.lane.b32.xlu0 %v3551, 64
      %v3609 = vpop.permute.xlu0 %3608
      %3610 = vrot.lane.b32.xlu0 %v3555, 64
      %v3611 = vpop.permute.xlu0 %3610
      %3612 = vrot.lane.b32.xlu0 %v3559, 64
      %v3613 = vpop.permute.xlu0 %3612
      %3614 = vrot.lane.b32.xlu0 %v3563, 64
      %v3615 = vpop.permute.xlu0 %3614
      %3616 = vrot.lane.b32.xlu0 %v3567, 64
      %v3617 = vpop.permute.xlu0 %3616
      %3618 = vrot.lane.b32.xlu0 %v3576, 64
      %v3619 = vpop.permute.xlu0 %3618
      %3620 = vrot.lane.b32.xlu0 %v3585, 64
      %v3621 = vpop.permute.xlu0 %3620
      %v3622 = vrot.slane %v3047, 3
      %v3623 = vrot.slane %v3048, 3
      %v3624 = vsel %vm1128, %v3622, %v3623
      %v3625 = vrot.slane %v3049, 3
      %v3626 = vsel %vm1128, %v3623, %v3625
      %v3627 = vrot.slane %v3050, 3
      %v3628 = vsel %vm1128, %v3625, %v3627
      %v3629 = vrot.slane %v3051, 3
      %v3630 = vsel %vm1128, %v3627, %v3629
      %v3631 = vrot.slane %v3052, 3
      %v3632 = vsel %vm1128, %v3629, %v3631
      %v3633 = vrot.slane %v3053, 3
      %v3634 = vsel %vm1128, %v3631, %v3633
      %v3635 = vrot.slane %v3054, 3
      %v3636 = vsel %vm1128, %v3633, %v3635
      %v3637 = vrot.slane %v3055, 3
      %v3638 = vsel %vm1128, %v3635, %v3637
      %v3639 = vrot.slane %v3056, 3
      %v3640 = vsel %vm1128, %v3637, %v3639
      %v3641 = vrot.slane %v3057, 3
      %v3642 = vsel %vm1128, %v3639, %v3641
      %v3643 = vrot.slane %v3058, 3
      %v3644 = vsel %vm1128, %v3641, %v3643
      %v3645 = vrot.slane %v3059, 3
      %v3646 = vsel %vm1128, %v3643, %v3645
      %v3647 = vrot.slane %v3060, 3
      %v3648 = vsel %vm1128, %v3645, %v3647
      %v3649 = vrot.slane %v3061, 3
      %v3650 = vsel %vm1128, %v3647, %v3649
      %v3651 = vrot.slane %v3062, 3
      %v3652 = vsel %vm1128, %v3649, %v3651
      %v3653 = vrot.slane %v3291, 3
      %v3654 = vsel %vm1128, %v3651, %v3653
      %v3655 = vrot.slane %v3495, 3
      %v3656 = vsel %vm1128, %v3653, %v3655
      %v3657 = vrot.slane %v3496, 3
      %v3658 = vsel %vm1128, %v3655, %v3657
      %v3660 = vsel %vm1203, %v3045, %v3215
      %v3663 = vsel %vm1203, %v3046, %v3217
      %v3666 = vsel %vm1203, %v3047, %v3219
      %v3669 = vsel %vm1203, %v3048, %v3221
      %v3672 = vsel %vm1203, %v3049, %v3223
      %v3675 = vsel %vm1203, %v3050, %v3225
      %v3678 = vsel %vm1203, %v3051, %v3227
      %v3681 = vsel %vm1203, %v3052, %v3229
      %v3684 = vsel %vm1203, %v3053, %v3231
      %v3687 = vsel %vm1203, %v3054, %v3233
      %v3690 = vsel %vm1203, %v3055, %v3235
      %v3693 = vsel %vm1203, %v3056, %v3237
      %v3696 = vsel %vm1203, %v3057, %v3239
      %v3699 = vsel %vm1203, %v3058, %v3241
      %v3702 = vsel %vm1203, %v3059, %v3243
      %v3705 = vsel %vm1203, %v3060, %v3245
      %v3708 = vsel %vm1203, %v3061, %v3247
      %v3711 = vsel %vm1203, %v3062, %v3249
      %v3715 = vsel %vm1203, %v3252, %v3298
      %v3719 = vsel %vm1203, %v3254, %v3300
      %v3723 = vsel %vm1203, %v3256, %v3302
      %v3727 = vsel %vm1203, %v3258, %v3304
      %v3731 = vsel %vm1203, %v3260, %v3306
      %v3735 = vsel %vm1203, %v3262, %v3308
      %v3739 = vsel %vm1203, %v3264, %v3310
      %v3743 = vsel %vm1203, %v3266, %v3312
      %v3747 = vsel %vm1203, %v3268, %v3314
      %v3751 = vsel %vm1203, %v3270, %v3316
      %v3755 = vsel %vm1203, %v3272, %v3318
      %v3759 = vsel %vm1203, %v3274, %v3320
      %v3763 = vsel %vm1203, %v3276, %v3322
      %v3767 = vsel %vm1203, %v3278, %v3324
      %v3771 = vsel %vm1203, %v3280, %v3326
      %v3775 = vsel %vm1203, %v3282, %v3328
      %v3779 = vsel %vm1203, %v3284, %v3330
      %v3783 = vsel %vm1203, %v3286, %v3332
      %v3787 = vsel %vm1203, %v3339, %v3456
      %v3791 = vsel %vm1203, %v3343, %v3458
      %v3795 = vsel %vm1203, %v3347, %v3460
      %v3799 = vsel %vm1203, %v3351, %v3462
      %v3803 = vsel %vm1203, %v3355, %v3464
      %v3807 = vsel %vm1203, %v3359, %v3466
      %v3811 = vsel %vm1203, %v3363, %v3468
      %v3815 = vsel %vm1203, %v3367, %v3470
      %v3819 = vsel %vm1203, %v3371, %v3472
      %v3823 = vsel %vm1203, %v3375, %v3474
      %v3827 = vsel %vm1203, %v3379, %v3476
      %v3831 = vsel %vm1203, %v3383, %v3478
      %v3835 = vsel %vm1203, %v3387, %v3480
      %v3839 = vsel %vm1203, %v3391, %v3482
      %v3843 = vsel %vm1203, %v3395, %v3484
      %v3847 = vsel %vm1203, %v3399, %v3486
      %v3851 = vsel %vm1203, %v3408, %v3488
      %v3855 = vsel %vm1203, %v3417, %v3490
      %v3859 = vsel %vm1203, %v3422, %v3587
      %v3863 = vsel %vm1203, %v3424, %v3589
      %v3867 = vsel %vm1203, %v3426, %v3591
      %v3871 = vsel %vm1203, %v3428, %v3593
      %v3875 = vsel %vm1203, %v3430, %v3595
      %v3879 = vsel %vm1203, %v3432, %v3597
      %v3883 = vsel %vm1203, %v3434, %v3599
      %v3887 = vsel %vm1203, %v3436, %v3601
      %v3891 = vsel %vm1203, %v3438, %v3603
      %v3895 = vsel %vm1203, %v3440, %v3605
      %v3899 = vsel %vm1203, %v3442, %v3607
      %v3903 = vsel %vm1203, %v3444, %v3609
      %v3907 = vsel %vm1203, %v3446, %v3611
      %v3911 = vsel %vm1203, %v3448, %v3613
      %v3915 = vsel %vm1203, %v3450, %v3615
      %v3919 = vsel %vm1203, %v3452, %v3617
      %v3923 = vsel %vm1203, %v3498, %v3619
      %v3927 = vsel %vm1203, %v3500, %v3621
      %v3929 = vld [vmem:[%s5] sm:$0xf]
      %v3930 = vld [vmem:[%s5 + $0x4] sm:$0xf]
      %v3931 = vld [vmem:[%s5 + $0x8] sm:$0xf]
      %v3932 = vld [vmem:[%s5 + $0xc] sm:$0xf]
      %v3933 = vld [vmem:[%s5 + $0x10] sm:$0xf]
      %v3934 = vld [vmem:[%s5 + $0x14] sm:$0xf]
      %v3935 = vld [vmem:[%s5 + $0x18] sm:$0xf]
      %v3936 = vld [vmem:[%s5 + $0x1c] sm:$0xf]
      %v3937 = vld [vmem:[%s5 + $0x20] sm:$0xf]
      %v3938 = vld [vmem:[%s5 + $0x24] sm:$0xf]
      %v3939 = vld [vmem:[%s5 + $0x28] sm:$0xf]
      %v3940 = vld [vmem:[%s5 + $0x2c] sm:$0xf]
      %v3941 = vld [vmem:[%s5 + $0x30] sm:$0xf]
      %v3942 = vld [vmem:[%s5 + $0x34] sm:$0xf]
      %v3943 = vld [vmem:[%s5 + $0x38] sm:$0xf]
      %v3944 = vld [vmem:[%s5 + $0x3c] sm:$0xf]
      %v3945 = vld [vmem:[%s5 + $0x40] sm:$0xf]
      %v3946 = vld [vmem:[%s5 + $0x44] sm:$0xf]
      %v3947 = vld [vmem:[%s5 + $0x48] sm:$0xf]
      %v3948 = vld [vmem:[%s5 + $0x4c] sm:$0xf]
      %v3949 = vld [vmem:[%s5 + $0x50] sm:$0xf]
      %v3950 = vld [vmem:[%s5 + $0x54] sm:$0xf]
      %v3951 = vld [vmem:[%s5 + $0x58] sm:$0xf]
      %v3952 = vld [vmem:[%s5 + $0x5c] sm:$0xf]
      %v3953 = vld [vmem:[%s5 + $0x60] sm:$0xf]
      %v3954 = vld [vmem:[%s5 + $0x64] sm:$0xf]
      %v3955 = vld [vmem:[%s5 + $0x68] sm:$0xf]
      %v3956 = vld [vmem:[%s5 + $0x6c] sm:$0xf]
      %v3957 = vld [vmem:[%s5 + $0x70] sm:$0xf]
      %v3958 = vld [vmem:[%s5 + $0x74] sm:$0xf]
      %v3959 = vld [vmem:[%s5 + $0x78] sm:$0xf]
      %v3960 = vld [vmem:[%s5 + $0x7c] sm:$0xf]
      %v3961 = vld [vmem:[%s5 + $0x80] sm:$0xf]
      %v3962 = vld [vmem:[%s5 + $0x84] sm:$0xf]
      %v3963 = vld [vmem:[%s5 + $0x88] sm:$0xf]
      %v3964 = vld [vmem:[%s5 + $0x8c] sm:$0xf]
      %v3965 = vld [vmem:[%s5 + $0x90] sm:$0xf]
      %v3966 = vld [vmem:[%s5 + $0x94] sm:$0xf]
      %v3967 = vld [vmem:[%s5 + $0x98] sm:$0xf]
      %v3968 = vld [vmem:[%s5 + $0x9c] sm:$0xf]
      %v3969 = vld [vmem:[%s5 + $0xa0] sm:$0xf]
      %v3970 = vld [vmem:[%s5 + $0xa4] sm:$0xf]
      %v3971 = vld [vmem:[%s5 + $0xa8] sm:$0xf]
      %v3972 = vld [vmem:[%s5 + $0xac] sm:$0xf]
      %v3973 = vld [vmem:[%s5 + $0xb0] sm:$0xf]
      %v3974 = vld [vmem:[%s5 + $0xb4] sm:$0xf]
      %v3975 = vld [vmem:[%s5 + $0xb8] sm:$0xf]
      %v3976 = vld [vmem:[%s5 + $0xbc] sm:$0xf]
      %v3977 = vld [vmem:[%s5 + $0xc0] sm:$0xf]
      %v3978 = vld [vmem:[%s5 + $0xc4] sm:$0xf]
      %v3979 = vld [vmem:[%s5 + $0xc8] sm:$0xf]
      %v3980 = vld [vmem:[%s5 + $0xcc] sm:$0xf]
      %v3981 = vld [vmem:[%s5 + $0xd0] sm:$0xf]
      %v3982 = vld [vmem:[%s5 + $0xd4] sm:$0xf]
      %v3983 = vld [vmem:[%s5 + $0xd8] sm:$0xf]
      %v3984 = vld [vmem:[%s5 + $0xdc] sm:$0xf]
      %v3985 = vld [vmem:[%s5 + $0xe0] sm:$0xf]
      %v3986 = vld [vmem:[%s5 + $0xe4] sm:$0xf]
      %v3987 = vld [vmem:[%s5 + $0xe8] sm:$0xf]
      %v3988 = vld [vmem:[%s5 + $0xec] sm:$0xf]
      %v3989 = vld [vmem:[%s5 + $0xf0] sm:$0xf]
      %v3990 = vld [vmem:[%s5 + $0xf4] sm:$0xf]
      %v3991 = vld [vmem:[%s5 + $0xf8] sm:$0xf]
      %v3992 = vld [vmem:[%s5 + $0xfc] sm:$0xf]
      %v3993 = vld [vmem:[%s5 + $0x100] sm:$0xf]
      %v3994 = vld [vmem:[%s5 + $0x104] sm:$0xf]
      %v3995 = vld [vmem:[%s5 + $0x108] sm:$0xf]
      %v3996 = vld [vmem:[%s5 + $0x10c] sm:$0xf]
      %v3997 = vld [vmem:[%s5 + $0x110] sm:$0xf]
      %v3998 = vld [vmem:[%s5 + $0x114] sm:$0xf]
      %v3999 = vld [vmem:[%s5 + $0x118] sm:$0xf]
      %v4000 = vld [vmem:[%s5 + $0x11c] sm:$0xf]
      %v4073 = vunpack.c.l.b16 %v3929
      %v4074 = vunpack.c.l.b16 %v3930
      %v4075 = vunpack.c.l.b16 %v3931
      %v4076 = vunpack.c.l.b16 %v3932
      %v4077 = vunpack.c.l.b16 %v3933
      %v4078 = vunpack.c.l.b16 %v3934
      %v4079 = vunpack.c.l.b16 %v3935
      %v4080 = vunpack.c.l.b16 %v3936
      %v4081 = vunpack.c.l.b16 %v3937
      %v4082 = vunpack.c.l.b16 %v3938
      %v4083 = vunpack.c.l.b16 %v3939
      %v4084 = vunpack.c.l.b16 %v3940
      %v4085 = vunpack.c.l.b16 %v3941
      %v4086 = vunpack.c.l.b16 %v3942
      %v4087 = vunpack.c.l.b16 %v3943
      %v4088 = vunpack.c.l.b16 %v3944
      %v4089 = vunpack.c.l.b16 %v3945
      %v4090 = vunpack.c.l.b16 %v3946
      %v4091 = vunpack.c.l.b16 %v3947
      %v4092 = vunpack.c.l.b16 %v3948
      %v4093 = vunpack.c.l.b16 %v3949
      %v4094 = vunpack.c.l.b16 %v3950
      %v4095 = vunpack.c.l.b16 %v3951
      %v4096 = vunpack.c.l.b16 %v3952
      %v4097 = vunpack.c.l.b16 %v3953
      %v4098 = vunpack.c.l.b16 %v3954
      %v4099 = vunpack.c.l.b16 %v3955
      %v4100 = vunpack.c.l.b16 %v3956
      %v4101 = vunpack.c.l.b16 %v3957
      %v4102 = vunpack.c.l.b16 %v3958
      %v4103 = vunpack.c.l.b16 %v3959
      %v4104 = vunpack.c.l.b16 %v3960
      %v4105 = vunpack.c.l.b16 %v3961
      %v4106 = vunpack.c.l.b16 %v3962
      %v4107 = vunpack.c.l.b16 %v3963
      %v4108 = vunpack.c.l.b16 %v3964
      %v4109 = vunpack.c.l.b16 %v3965
      %v4110 = vunpack.c.l.b16 %v3966
      %v4111 = vunpack.c.l.b16 %v3967
      %v4112 = vunpack.c.l.b16 %v3968
      %v4113 = vunpack.c.l.b16 %v3969
      %v4114 = vunpack.c.l.b16 %v3970
      %v4115 = vunpack.c.l.b16 %v3971
      %v4116 = vunpack.c.l.b16 %v3972
      %v4117 = vunpack.c.l.b16 %v3973
      %v4118 = vunpack.c.l.b16 %v3974
      %v4119 = vunpack.c.l.b16 %v3975
      %v4120 = vunpack.c.l.b16 %v3976
      %v4121 = vunpack.c.l.b16 %v3977
      %v4122 = vunpack.c.l.b16 %v3978
      %v4123 = vunpack.c.l.b16 %v3979
      %v4124 = vunpack.c.l.b16 %v3980
      %v4125 = vunpack.c.l.b16 %v3981
      %v4126 = vunpack.c.l.b16 %v3982
      %v4127 = vunpack.c.l.b16 %v3983
      %v4128 = vunpack.c.l.b16 %v3984
      %v4129 = vunpack.c.l.b16 %v3985
      %v4130 = vunpack.c.l.b16 %v3986
      %v4131 = vunpack.c.l.b16 %v3987
      %v4132 = vunpack.c.l.b16 %v3988
      %v4133 = vunpack.c.l.b16 %v3989
      %v4134 = vunpack.c.l.b16 %v3990
      %v4135 = vunpack.c.l.b16 %v3991
      %v4136 = vunpack.c.l.b16 %v3992
      %v4137 = vunpack.c.l.b16 %v3993
      %v4138 = vunpack.c.l.b16 %v3994
      %v4139 = vunpack.c.l.b16 %v3995
      %v4140 = vunpack.c.l.b16 %v3996
      %v4141 = vunpack.c.l.b16 %v3997
      %v4142 = vunpack.c.l.b16 %v3998
      %v4143 = vunpack.c.l.b16 %v3999
      %v4144 = vunpack.c.l.b16 %v4000
      %v4145 = vpack.c.b16 %v4074, %v4073
      %v4146 = vpack.c.b16 %v4076, %v4075
      %v4147 = vpack.c.b16 %v4078, %v4077
      %v4148 = vpack.c.b16 %v4080, %v4079
      %v4149 = vpack.c.b16 %v4082, %v4081
      %v4150 = vpack.c.b16 %v4084, %v4083
      %v4151 = vpack.c.b16 %v4086, %v4085
      %v4152 = vpack.c.b16 %v4088, %v4087
      %v4153 = vpack.c.b16 %v4090, %v4089
      %v4154 = vpack.c.b16 %v4092, %v4091
      %v4155 = vpack.c.b16 %v4094, %v4093
      %v4156 = vpack.c.b16 %v4096, %v4095
      %v4157 = vpack.c.b16 %v4098, %v4097
      %v4158 = vpack.c.b16 %v4100, %v4099
      %v4159 = vpack.c.b16 %v4102, %v4101
      %v4160 = vpack.c.b16 %v4104, %v4103
      %v4161 = vpack.c.b16 %v4106, %v4105
      %v4162 = vpack.c.b16 %v4108, %v4107
      %v4163 = vpack.c.b16 %v4110, %v4109
      %v4164 = vpack.c.b16 %v4112, %v4111
      %v4165 = vpack.c.b16 %v4114, %v4113
      %v4166 = vpack.c.b16 %v4116, %v4115
      %v4167 = vpack.c.b16 %v4118, %v4117
      %v4168 = vpack.c.b16 %v4120, %v4119
      %v4169 = vpack.c.b16 %v4122, %v4121
      %v4170 = vpack.c.b16 %v4124, %v4123
      %v4171 = vpack.c.b16 %v4126, %v4125
      %v4172 = vpack.c.b16 %v4128, %v4127
      %v4173 = vpack.c.b16 %v4130, %v4129
      %v4174 = vpack.c.b16 %v4132, %v4131
      %v4175 = vpack.c.b16 %v4134, %v4133
      %v4176 = vpack.c.b16 %v4136, %v4135
      %v4177 = vpack.c.b16 %v4138, %v4137
      %v4178 = vpack.c.b16 %v4140, %v4139
      %v4179 = vpack.c.b16 %v4142, %v4141
      %v4180 = vpack.c.b16 %v4144, %v4143
      %v4218 = vsel %vm1203, %v3624, 0
      %v4221 = vsel %vm1203, %v3626, 0
      %v4224 = vsel %vm1203, %v3628, 0
      %v4227 = vsel %vm1203, %v3630, 0
      %v4230 = vsel %vm1203, %v3632, 0
      %v4233 = vsel %vm1203, %v3634, 0
      %v4236 = vsel %vm1203, %v3636, 0
      %v4239 = vsel %vm1203, %v3638, 0
      %v4242 = vsel %vm1203, %v3640, 0
      %v4245 = vsel %vm1203, %v3642, 0
      %v4248 = vsel %vm1203, %v3644, 0
      %v4251 = vsel %vm1203, %v3646, 0
      %v4254 = vsel %vm1203, %v3648, 0
      %v4257 = vsel %vm1203, %v3650, 0
      %v4260 = vsel %vm1203, %v3652, 0
      %v4263 = vsel %vm1203, %v3654, 0
      %v4266 = vsel %vm1203, %v3656, 0
      %v4269 = vsel %vm1203, %v3658, 0
      %4271 = vmatprep.subr.bf16.mxu0 0
      %4272 = vmatpush1.bf16.msra.mxu0 %v4145
      %4273 = vmatprep.subr.bf16.mxu0 0
      %4274 = vmatpush1.bf16.msra.mxu0 %v4146
      %4275 = vmatprep.subr.bf16.mxu0 0
      %4276 = vmatpush1.bf16.msra.mxu0 %v4147
      %4277 = vmatprep.subr.bf16.mxu0 0
      %4278 = vmatpush1.bf16.msra.mxu0 %v4148
      %4279 = vmatprep.subr.bf16.mxu0 0
      %4280 = vmatpush1.bf16.msra.mxu0 %v4149
      %4281 = vmatprep.subr.bf16.mxu0 0
      %4282 = vmatpush1.bf16.msra.mxu0 %v4150
      %4283 = vmatprep.subr.bf16.mxu0 0
      %4284 = vmatpush1.bf16.msra.mxu0 %v4151
      %4285 = vmatprep.subr.bf16.mxu0 0
      %4286 = vmatpush1.bf16.msra.mxu0 %v4152
      %4287 = vmatprep.subr.bf16.mxu0 0
      %4288 = vmatpush1.bf16.msra.mxu0 %v4153
      %4289 = vmatprep.subr.bf16.mxu0 0
      %4290 = vmatpush1.bf16.msra.mxu0 %v4154
      %4291 = vmatprep.subr.bf16.mxu0 0
      %4292 = vmatpush1.bf16.msra.mxu0 %v4155
      %4293 = vmatprep.subr.bf16.mxu0 0
      %4294 = vmatpush1.bf16.msra.mxu0 %v4156
      %4295 = vmatprep.subr.bf16.mxu0 0
      %4296 = vmatpush1.bf16.msra.mxu0 %v4157
      %4297 = vmatprep.subr.bf16.mxu0 0
      %4298 = vmatpush1.bf16.msra.mxu0 %v4158
      %4299 = vmatprep.subr.bf16.mxu0 0
      %4300 = vmatpush1.bf16.msra.mxu0 %v4159
      %4301 = vmatprep.subr.bf16.mxu0 0
      %4302 = vmatpush1.bf16.msra.mxu0 %v4160
      %4303 = vmatprep.mubr.bf16.mxu0 %v3715
      %4304 = vmatmul.mubr.bf16.gmra.mrb[0].mxu0 %v3660
      %v4305 = vpop.f32.mrb[0].mxu0
      %v4306 = vadd.f32 0.0, %v4305
      %v4307 = vpop.f32.mrb[0].mxu0
      %v4308 = vpop.f32.mrb[0].mxu0
      %v4309 = vadd.f32 0.0, %v4308
      %v4310 = vpop.f32.mrb[0].mxu0
      %4311 = vmatprep.mubr.bf16.mxu0 %v3719
      %4312 = vmatmul.mubr.bf16.gmra.mrb[0].mxu0 %v3663
      %v4313 = vpop.f32.mrb[0].mxu0
      %v4314 = vadd.f32 0.0, %v4313
      %v4315 = vpop.f32.mrb[0].mxu0
      %v4316 = vpop.f32.mrb[0].mxu0
      %v4317 = vadd.f32 0.0, %v4316
      %v4318 = vpop.f32.mrb[0].mxu0
      %4319 = vmatprep.mubr.bf16.mxu0 %v3723
      %4320 = vmatmul.mubr.bf16.gmra.mrb[0].mxu0 %v3666
      %v4321 = vpop.f32.mrb[0].mxu0
      %v4322 = vadd.f32 0.0, %v4321
      %v4323 = vpop.f32.mrb[0].mxu0
      %v4324 = vpop.f32.mrb[0].mxu0
      %v4325 = vadd.f32 0.0, %v4324
      %v4326 = vpop.f32.mrb[0].mxu0
      %4327 = vmatprep.mubr.bf16.mxu0 %v3727
      %4328 = vmatmul.mubr.bf16.gmra.mrb[0].mxu0 %v3669
      %v4329 = vpop.f32.mrb[0].mxu0
      %v4330 = vadd.f32 0.0, %v4329
      %v4331 = vpop.f32.mrb[0].mxu0
      %v4332 = vpop.f32.mrb[0].mxu0
      %v4333 = vadd.f32 0.0, %v4332
      %v4334 = vpop.f32.mrb[0].mxu0
      %4335 = vmatprep.mubr.bf16.mxu0 %v3731
      %4336 = vmatmul.mubr.bf16.gmra.mrb[0].mxu0 %v3672
      %v4337 = vpop.f32.mrb[0].mxu0
      %v4338 = vadd.f32 0.0, %v4337
      %v4339 = vpop.f32.mrb[0].mxu0
      %v4340 = vpop.f32.mrb[0].mxu0
      %v4341 = vadd.f32 0.0, %v4340
      %v4342 = vpop.f32.mrb[0].mxu0
      %4343 = vmatprep.mubr.bf16.mxu0 %v3735
      %4344 = vmatmul.mubr.bf16.gmra.mrb[0].mxu0 %v3675
      %v4345 = vpop.f32.mrb[0].mxu0
      %v4346 = vadd.f32 0.0, %v4345
      %v4347 = vpop.f32.mrb[0].mxu0
      %v4348 = vpop.f32.mrb[0].mxu0
      %v4349 = vadd.f32 0.0, %v4348
      %v4350 = vpop.f32.mrb[0].mxu0
      %4351 = vmatprep.mubr.bf16.mxu0 %v3739
      %4352 = vmatmul.mubr.bf16.gmra.mrb[0].mxu0 %v3678
      %v4353 = vpop.f32.mrb[0].mxu0
      %v4354 = vadd.f32 0.0, %v4353
      %v4355 = vpop.f32.mrb[0].mxu0
      %v4356 = vpop.f32.mrb[0].mxu0
      %v4357 = vadd.f32 0.0, %v4356
      %v4358 = vpop.f32.mrb[0].mxu0
      %4359 = vmatprep.mubr.bf16.mxu0 %v3743
      %4360 = vmatmul.mubr.bf16.gmra.mrb[0].mxu0 %v3681
      %v4361 = vpop.f32.mrb[0].mxu0
      %v4362 = vadd.f32 0.0, %v4361
      %v4363 = vpop.f32.mrb[0].mxu0
      %v4364 = vpop.f32.mrb[0].mxu0
      %v4365 = vadd.f32 0.0, %v4364
      %v4366 = vpop.f32.mrb[0].mxu0
      %4367 = vmatprep.mubr.bf16.mxu0 %v3747
      %4368 = vmatmul.mubr.bf16.gmra.mrb[0].mxu0 %v3684
      %v4369 = vpop.f32.mrb[0].mxu0
      %v4370 = vadd.f32 0.0, %v4369
      %v4371 = vpop.f32.mrb[0].mxu0
      %v4372 = vpop.f32.mrb[0].mxu0
      %v4373 = vadd.f32 0.0, %v4372
      %v4374 = vpop.f32.mrb[0].mxu0
      %4375 = vmatprep.mubr.bf16.mxu0 %v3751
      %4376 = vmatmul.mubr.bf16.gmra.mrb[0].mxu0 %v3687
      %v4377 = vpop.f32.mrb[0].mxu0
      %v4378 = vadd.f32 0.0, %v4377
      %v4379 = vpop.f32.mrb[0].mxu0
      %v4380 = vpop.f32.mrb[0].mxu0
      %v4381 = vadd.f32 0.0, %v4380
      %v4382 = vpop.f32.mrb[0].mxu0
      %4383 = vmatprep.mubr.bf16.mxu0 %v3755
      %4384 = vmatmul.mubr.bf16.gmra.mrb[0].mxu0 %v3690
      %v4385 = vpop.f32.mrb[0].mxu0
      %v4386 = vadd.f32 0.0, %v4385
      %v4387 = vpop.f32.mrb[0].mxu0
      %v4388 = vpop.f32.mrb[0].mxu0
      %v4389 = vadd.f32 0.0, %v4388
      %v4390 = vpop.f32.mrb[0].mxu0
      %4391 = vmatprep.mubr.bf16.mxu0 %v3759
      %4392 = vmatmul.mubr.bf16.gmra.mrb[0].mxu0 %v3693
      %v4393 = vpop.f32.mrb[0].mxu0
      %v4394 = vadd.f32 0.0, %v4393
      %v4395 = vpop.f32.mrb[0].mxu0
      %v4396 = vpop.f32.mrb[0].mxu0
      %v4397 = vadd.f32 0.0, %v4396
      %v4398 = vpop.f32.mrb[0].mxu0
      %4399 = vmatprep.mubr.bf16.mxu0 %v3763
      %4400 = vmatmul.mubr.bf16.gmra.mrb[0].mxu0 %v3696
      %v4401 = vpop.f32.mrb[0].mxu0
      %v4402 = vadd.f32 0.0, %v4401
      %v4403 = vpop.f32.mrb[0].mxu0
      %v4404 = vpop.f32.mrb[0].mxu0
      %v4405 = vadd.f32 0.0, %v4404
      %v4406 = vpop.f32.mrb[0].mxu0
      %4407 = vmatprep.mubr.bf16.mxu0 %v3767
      %4408 = vmatmul.mubr.bf16.gmra.mrb[0].mxu0 %v3699
      %v4409 = vpop.f32.mrb[0].mxu0
      %v4410 = vadd.f32 0.0, %v4409
      %v4411 = vpop.f32.mrb[0].mxu0
      %v4412 = vpop.f32.mrb[0].mxu0
      %v4413 = vadd.f32 0.0, %v4412
      %v4414 = vpop.f32.mrb[0].mxu0
      %4415 = vmatprep.mubr.bf16.mxu0 %v3771
      %4416 = vmatmul.mubr.bf16.gmra.mrb[0].mxu0 %v3702
      %v4417 = vpop.f32.mrb[0].mxu0
      %v4418 = vadd.f32 0.0, %v4417
      %v4419 = vpop.f32.mrb[0].mxu0
      %v4420 = vpop.f32.mrb[0].mxu0
      %v4421 = vadd.f32 0.0, %v4420
      %v4422 = vpop.f32.mrb[0].mxu0
      %4423 = vmatprep.mubr.bf16.mxu0 %v3775
      %4424 = vmatmul.mubr.bf16.gmra.mrb[0].mxu0 %v3705
      %v4425 = vpop.f32.mrb[0].mxu0
      %v4426 = vadd.f32 0.0, %v4425
      %v4427 = vpop.f32.mrb[0].mxu0
      %v4428 = vpop.f32.mrb[0].mxu0
      %v4429 = vadd.f32 0.0, %v4428
      %v4430 = vpop.f32.mrb[0].mxu0
      %4431 = vmatprep.mubr.bf16.mxu0 %v3779
      %4432 = vmatmul.mubr.bf16.gmra.mrb[0].mxu0 %v3708
      %v4433 = vpop.f32.mrb[0].mxu0
      %v4434 = vadd.f32 0.0, %v4433
      %v4435 = vpop.f32.mrb[0].mxu0
      %v4436 = vpop.f32.mrb[0].mxu0
      %v4437 = vadd.f32 0.0, %v4436
      %v4438 = vpop.f32.mrb[0].mxu0
      %4439 = vmatprep.mubr.bf16.mxu0 %v3783
      %4440 = vmatmul.mubr.bf16.gmra.mrb[0].mxu0 %v3711
      %v4441 = vpop.f32.mrb[0].mxu0
      %v4442 = vadd.f32 0.0, %v4441
      %v4443 = vpop.f32.mrb[0].mxu0
      %v4444 = vpop.f32.mrb[0].mxu0
      %v4445 = vadd.f32 0.0, %v4444
      %v4446 = vpop.f32.mrb[0].mxu0
      %4447 = vdwg.mxu0
      %4448 = vmatprep.subr.bf16.mxu0 0
      %4449 = vmatpush1.bf16.msra.mxu0 %v4161
      %4450 = vmatprep.subr.bf16.mxu0 0
      %4451 = vmatpush1.bf16.msra.mxu0 %v4162
      %4452 = vmatprep.subr.bf16.mxu0 0
      %4453 = vmatpush1.bf16.msra.mxu0 %v4163
      %4454 = vmatprep.subr.bf16.mxu0 0
      %4455 = vmatpush1.bf16.msra.mxu0 %v4164
      %4456 = vmatprep.subr.bf16.mxu0 0
      %4457 = vmatpush1.bf16.msra.mxu0 %v4165
      %4458 = vmatprep.subr.bf16.mxu0 0
      %4459 = vmatpush1.bf16.msra.mxu0 %v4166
      %4460 = vmatprep.subr.bf16.mxu0 0
      %4461 = vmatpush1.bf16.msra.mxu0 %v4167
      %4462 = vmatprep.subr.bf16.mxu0 0
      %4463 = vmatpush1.bf16.msra.mxu0 %v4168
      %4464 = vmatprep.subr.bf16.mxu0 0
      %4465 = vmatpush1.bf16.msra.mxu0 %v4169
      %4466 = vmatprep.subr.bf16.mxu0 0
      %4467 = vmatpush1.bf16.msra.mxu0 %v4170
      %4468 = vmatprep.subr.bf16.mxu0 0
      %4469 = vmatpush1.bf16.msra.mxu0 %v4171
      %4470 = vmatprep.subr.bf16.mxu0 0
      %4471 = vmatpush1.bf16.msra.mxu0 %v4172
      %4472 = vmatprep.subr.bf16.mxu0 0
      %4473 = vmatpush1.bf16.msra.mxu0 %v4173
      %4474 = vmatprep.subr.bf16.mxu0 0
      %4475 = vmatpush1.bf16.msra.mxu0 %v4174
      %4476 = vmatprep.subr.bf16.mxu0 0
      %4477 = vmatpush1.bf16.msra.mxu0 %v4175
      %4478 = vmatprep.subr.bf16.mxu0 0
      %4479 = vmatpush1.bf16.msra.mxu0 %v4176
      %4480 = vmatprep.mubr.bf16.mxu0 %v3859
      %4481 = vmatmul.mubr.bf16.gmra.mrb[0].mxu0 %v3787
      %v4482 = vpop.f32.mrb[0].mxu0
      %v4483 = vadd.f32 %v4306, %v4482
      %v4484 = vpop.f32.mrb[0].mxu0
      %v4485 = vpop.f32.mrb[0].mxu0
      %v4486 = vadd.f32 %v4309, %v4485
      %v4487 = vpop.f32.mrb[0].mxu0
      %4488 = vmatprep.mubr.bf16.mxu0 %v3863
      %4489 = vmatmul.mubr.bf16.gmra.mrb[0].mxu0 %v3791
      %v4490 = vpop.f32.mrb[0].mxu0
      %v4491 = vadd.f32 %v4314, %v4490
      %v4492 = vpop.f32.mrb[0].mxu0
      %v4493 = vpop.f32.mrb[0].mxu0
      %v4494 = vadd.f32 %v4317, %v4493
      %v4495 = vpop.f32.mrb[0].mxu0
      %4496 = vmatprep.mubr.bf16.mxu0 %v3867
      %4497 = vmatmul.mubr.bf16.gmra.mrb[0].mxu0 %v3795
      %v4498 = vpop.f32.mrb[0].mxu0
      %v4499 = vadd.f32 %v4322, %v4498
      %v4500 = vpop.f32.mrb[0].mxu0
      %v4501 = vpop.f32.mrb[0].mxu0
      %v4502 = vadd.f32 %v4325, %v4501
      %v4503 = vpop.f32.mrb[0].mxu0
      %4504 = vmatprep.mubr.bf16.mxu0 %v3871
      %4505 = vmatmul.mubr.bf16.gmra.mrb[0].mxu0 %v3799
      %v4506 = vpop.f32.mrb[0].mxu0
      %v4507 = vadd.f32 %v4330, %v4506
      %v4508 = vpop.f32.mrb[0].mxu0
      %v4509 = vpop.f32.mrb[0].mxu0
      %v4510 = vadd.f32 %v4333, %v4509
      %v4511 = vpop.f32.mrb[0].mxu0
      %4512 = vmatprep.mubr.bf16.mxu0 %v3875
      %4513 = vmatmul.mubr.bf16.gmra.mrb[0].mxu0 %v3803
      %v4514 = vpop.f32.mrb[0].mxu0
      %v4515 = vadd.f32 %v4338, %v4514
      %v4516 = vpop.f32.mrb[0].mxu0
      %v4517 = vpop.f32.mrb[0].mxu0
      %v4518 = vadd.f32 %v4341, %v4517
      %v4519 = vpop.f32.mrb[0].mxu0
      %4520 = vmatprep.mubr.bf16.mxu0 %v3879
      %4521 = vmatmul.mubr.bf16.gmra.mrb[0].mxu0 %v3807
      %v4522 = vpop.f32.mrb[0].mxu0
      %v4523 = vadd.f32 %v4346, %v4522
      %v4524 = vpop.f32.mrb[0].mxu0
      %v4525 = vpop.f32.mrb[0].mxu0
      %v4526 = vadd.f32 %v4349, %v4525
      %v4527 = vpop.f32.mrb[0].mxu0
      %4528 = vmatprep.mubr.bf16.mxu0 %v3883
      %4529 = vmatmul.mubr.bf16.gmra.mrb[0].mxu0 %v3811
      %v4530 = vpop.f32.mrb[0].mxu0
      %v4531 = vadd.f32 %v4354, %v4530
      %v4532 = vpop.f32.mrb[0].mxu0
      %v4533 = vpop.f32.mrb[0].mxu0
      %v4534 = vadd.f32 %v4357, %v4533
      %v4535 = vpop.f32.mrb[0].mxu0
      %4536 = vmatprep.mubr.bf16.mxu0 %v3887
      %4537 = vmatmul.mubr.bf16.gmra.mrb[0].mxu0 %v3815
      %v4538 = vpop.f32.mrb[0].mxu0
      %v4539 = vadd.f32 %v4362, %v4538
      %v4540 = vpop.f32.mrb[0].mxu0
      %v4541 = vpop.f32.mrb[0].mxu0
      %v4542 = vadd.f32 %v4365, %v4541
      %v4543 = vpop.f32.mrb[0].mxu0
      %4544 = vmatprep.mubr.bf16.mxu0 %v3891
      %4545 = vmatmul.mubr.bf16.gmra.mrb[0].mxu0 %v3819
      %v4546 = vpop.f32.mrb[0].mxu0
      %v4547 = vadd.f32 %v4370, %v4546
      %v4548 = vpop.f32.mrb[0].mxu0
      %v4549 = vpop.f32.mrb[0].mxu0
      %v4550 = vadd.f32 %v4373, %v4549
      %v4551 = vpop.f32.mrb[0].mxu0
      %4552 = vmatprep.mubr.bf16.mxu0 %v3895
      %4553 = vmatmul.mubr.bf16.gmra.mrb[0].mxu0 %v3823
      %v4554 = vpop.f32.mrb[0].mxu0
      %v4555 = vadd.f32 %v4378, %v4554
      %v4556 = vpop.f32.mrb[0].mxu0
      %v4557 = vpop.f32.mrb[0].mxu0
      %v4558 = vadd.f32 %v4381, %v4557
      %v4559 = vpop.f32.mrb[0].mxu0
      %4560 = vmatprep.mubr.bf16.mxu0 %v3899
      %4561 = vmatmul.mubr.bf16.gmra.mrb[0].mxu0 %v3827
      %v4562 = vpop.f32.mrb[0].mxu0
      %v4563 = vadd.f32 %v4386, %v4562
      %v4564 = vpop.f32.mrb[0].mxu0
      %v4565 = vpop.f32.mrb[0].mxu0
      %v4566 = vadd.f32 %v4389, %v4565
      %v4567 = vpop.f32.mrb[0].mxu0
      %4568 = vmatprep.mubr.bf16.mxu0 %v3903
      %4569 = vmatmul.mubr.bf16.gmra.mrb[0].mxu0 %v3831
      %v4570 = vpop.f32.mrb[0].mxu0
      %v4571 = vadd.f32 %v4394, %v4570
      %v4572 = vpop.f32.mrb[0].mxu0
      %v4573 = vpop.f32.mrb[0].mxu0
      %v4574 = vadd.f32 %v4397, %v4573
      %v4575 = vpop.f32.mrb[0].mxu0
      %4576 = vmatprep.mubr.bf16.mxu0 %v3907
      %4577 = vmatmul.mubr.bf16.gmra.mrb[0].mxu0 %v3835
      %v4578 = vpop.f32.mrb[0].mxu0
      %v4579 = vadd.f32 %v4402, %v4578
      %v4580 = vpop.f32.mrb[0].mxu0
      %v4581 = vpop.f32.mrb[0].mxu0
      %v4582 = vadd.f32 %v4405, %v4581
      %v4583 = vpop.f32.mrb[0].mxu0
      %4584 = vmatprep.mubr.bf16.mxu0 %v3911
      %4585 = vmatmul.mubr.bf16.gmra.mrb[0].mxu0 %v3839
      %v4586 = vpop.f32.mrb[0].mxu0
      %v4587 = vadd.f32 %v4410, %v4586
      %v4588 = vpop.f32.mrb[0].mxu0
      %v4589 = vpop.f32.mrb[0].mxu0
      %v4590 = vadd.f32 %v4413, %v4589
      %v4591 = vpop.f32.mrb[0].mxu0
      %4592 = vmatprep.mubr.bf16.mxu0 %v3915
      %4593 = vmatmul.mubr.bf16.gmra.mrb[0].mxu0 %v3843
      %v4594 = vpop.f32.mrb[0].mxu0
      %v4595 = vadd.f32 %v4418, %v4594
      %v4596 = vpop.f32.mrb[0].mxu0
      %v4597 = vpop.f32.mrb[0].mxu0
      %v4598 = vadd.f32 %v4421, %v4597
      %v4599 = vpop.f32.mrb[0].mxu0
      %4600 = vmatprep.mubr.bf16.mxu0 %v3919
      %4601 = vmatmul.mubr.bf16.gmra.mrb[0].mxu0 %v3847
      %v4602 = vpop.f32.mrb[0].mxu0
      %v4603 = vadd.f32 %v4426, %v4602
      %v4604 = vpop.f32.mrb[0].mxu0
      %v4605 = vpop.f32.mrb[0].mxu0
      %v4606 = vadd.f32 %v4429, %v4605
      %v4607 = vpop.f32.mrb[0].mxu0
      %4608 = vmatprep.mubr.bf16.mxu0 %v3923
      %4609 = vmatmul.mubr.bf16.gmra.mrb[0].mxu0 %v3851
      %v4610 = vpop.f32.mrb[0].mxu0
      %v4611 = vadd.f32 %v4434, %v4610
      %v4612 = vpop.f32.mrb[0].mxu0
      %v4613 = vpop.f32.mrb[0].mxu0
      %v4614 = vadd.f32 %v4437, %v4613
      %v4615 = vpop.f32.mrb[0].mxu0
      %4616 = vmatprep.mubr.bf16.mxu0 %v3927
      %4617 = vmatmul.mubr.bf16.gmra.mrb[0].mxu0 %v3855
      %v4618 = vpop.f32.mrb[0].mxu0
      %v4619 = vadd.f32 %v4442, %v4618
      %v4620 = vpop.f32.mrb[0].mxu0
      %v4621 = vpop.f32.mrb[0].mxu0
      %v4622 = vadd.f32 %v4445, %v4621
      %v4623 = vpop.f32.mrb[0].mxu0
      %4624 = vdwg.mxu0
      %4625 = vmatprep.subr.bf16.mxu0 0
      %4626 = vmatpush1.bf16.msra.mxu0 %v4177
      %4627 = vmatprep.subr.bf16.mxu0 0
      %4628 = vmatpush1.bf16.msra.mxu0 %v4178
      %4629 = vmatprep.subr.bf16.mxu0 0
      %4630 = vmatpush1.bf16.msra.mxu0 %v4179
      %4631 = vmatprep.subr.bf16.mxu0 0
      %4632 = vmatpush1.bf16.msra.mxu0 %v4180
      %4633 = vmatprep.subr.bf16.mxu0 0
      %4634 = vmatpush1.bf16.msra.mxu0 0
      %4635 = vmatprep.subr.bf16.mxu0 0
      %4636 = vmatpush1.bf16.msra.mxu0 0
      %4637 = vmatprep.subr.bf16.mxu0 0
      %4638 = vmatpush1.bf16.msra.mxu0 0
      %4639 = vmatprep.subr.bf16.mxu0 0
      %4640 = vmatpush1.bf16.msra.mxu0 0
      %4641 = vmatprep.subr.bf16.mxu0 0
      %4642 = vmatpush1.bf16.msra.mxu0 0
      %4643 = vmatprep.subr.bf16.mxu0 0
      %4644 = vmatpush1.bf16.msra.mxu0 0
      %4645 = vmatprep.subr.bf16.mxu0 0
      %4646 = vmatpush1.bf16.msra.mxu0 0
      %4647 = vmatprep.subr.bf16.mxu0 0
      %4648 = vmatpush1.bf16.msra.mxu0 0
      %4649 = vmatprep.subr.bf16.mxu0 0
      %4650 = vmatpush1.bf16.msra.mxu0 0
      %4651 = vmatprep.subr.bf16.mxu0 0
      %4652 = vmatpush1.bf16.msra.mxu0 0
      %4653 = vmatprep.subr.bf16.mxu0 0
      %4654 = vmatpush1.bf16.msra.mxu0 0
      %4655 = vmatprep.subr.bf16.mxu0 0
      %4656 = vmatpush1.bf16.msra.mxu0 0
      %4657 = vmatprep.mubr.bf16.mxu0 0
      %4658 = vmatmul.mubr.bf16.gmra.mrb[0].mxu0 %v4218
      %v4659 = vpop.f32.mrb[0].mxu0
      %v4660 = vadd.f32 %v4483, %v4659
      %v4661 = vpop.f32.mrb[0].mxu0
      %v4662 = vpop.f32.mrb[0].mxu0
      %v4663 = vadd.f32 %v4486, %v4662
      %v4664 = vpop.f32.mrb[0].mxu0
      %4665 = vmatprep.mubr.bf16.mxu0 0
      %4666 = vmatmul.mubr.bf16.gmra.mrb[0].mxu0 %v4221
      %v4667 = vpop.f32.mrb[0].mxu0
      %v4668 = vadd.f32 %v4491, %v4667
      %v4669 = vpop.f32.mrb[0].mxu0
      %v4670 = vpop.f32.mrb[0].mxu0
      %v4671 = vadd.f32 %v4494, %v4670
      %v4672 = vpop.f32.mrb[0].mxu0
      %4673 = vmatprep.mubr.bf16.mxu0 0
      %4674 = vmatmul.mubr.bf16.gmra.mrb[0].mxu0 %v4224
      %v4675 = vpop.f32.mrb[0].mxu0
      %v4676 = vadd.f32 %v4499, %v4675
      %v4677 = vpop.f32.mrb[0].mxu0
      %v4678 = vpop.f32.mrb[0].mxu0
      %v4679 = vadd.f32 %v4502, %v4678
      %v4680 = vpop.f32.mrb[0].mxu0
      %4681 = vmatprep.mubr.bf16.mxu0 0
      %4682 = vmatmul.mubr.bf16.gmra.mrb[0].mxu0 %v4227
      %v4683 = vpop.f32.mrb[0].mxu0
      %v4684 = vadd.f32 %v4507, %v4683
      %v4685 = vpop.f32.mrb[0].mxu0
      %v4686 = vpop.f32.mrb[0].mxu0
      %v4687 = vadd.f32 %v4510, %v4686
      %v4688 = vpop.f32.mrb[0].mxu0
      %4689 = vmatprep.mubr.bf16.mxu0 0
      %4690 = vmatmul.mubr.bf16.gmra.mrb[0].mxu0 %v4230
      %v4691 = vpop.f32.mrb[0].mxu0
      %v4692 = vadd.f32 %v4515, %v4691
      %v4693 = vpop.f32.mrb[0].mxu0
      %v4694 = vpop.f32.mrb[0].mxu0
      %v4695 = vadd.f32 %v4518, %v4694
      %v4696 = vpop.f32.mrb[0].mxu0
      %4697 = vmatprep.mubr.bf16.mxu0 0
      %4698 = vmatmul.mubr.bf16.gmra.mrb[0].mxu0 %v4233
      %v4699 = vpop.f32.mrb[0].mxu0
      %v4700 = vadd.f32 %v4523, %v4699
      %v4701 = vpop.f32.mrb[0].mxu0
      %v4702 = vpop.f32.mrb[0].mxu0
      %v4703 = vadd.f32 %v4526, %v4702
      %v4704 = vpop.f32.mrb[0].mxu0
      %4705 = vmatprep.mubr.bf16.mxu0 0
      %4706 = vmatmul.mubr.bf16.gmra.mrb[0].mxu0 %v4236
      %v4707 = vpop.f32.mrb[0].mxu0
      %v4708 = vadd.f32 %v4531, %v4707
      %v4709 = vpop.f32.mrb[0].mxu0
      %v4710 = vpop.f32.mrb[0].mxu0
      %v4711 = vadd.f32 %v4534, %v4710
      %v4712 = vpop.f32.mrb[0].mxu0
      %4713 = vmatprep.mubr.bf16.mxu0 0
      %4714 = vmatmul.mubr.bf16.gmra.mrb[0].mxu0 %v4239
      %v4715 = vpop.f32.mrb[0].mxu0
      %v4716 = vadd.f32 %v4539, %v4715
      %v4717 = vpop.f32.mrb[0].mxu0
      %v4718 = vpop.f32.mrb[0].mxu0
      %v4719 = vadd.f32 %v4542, %v4718
      %v4720 = vpop.f32.mrb[0].mxu0
      %4721 = vmatprep.mubr.bf16.mxu0 0
      %4722 = vmatmul.mubr.bf16.gmra.mrb[0].mxu0 %v4242
      %v4723 = vpop.f32.mrb[0].mxu0
      %v4724 = vadd.f32 %v4547, %v4723
      %v4725 = vpop.f32.mrb[0].mxu0
      %v4726 = vpop.f32.mrb[0].mxu0
      %v4727 = vadd.f32 %v4550, %v4726
      %v4728 = vpop.f32.mrb[0].mxu0
      %4729 = vmatprep.mubr.bf16.mxu0 0
      %4730 = vmatmul.mubr.bf16.gmra.mrb[0].mxu0 %v4245
      %v4731 = vpop.f32.mrb[0].mxu0
      %v4732 = vadd.f32 %v4555, %v4731
      %v4733 = vpop.f32.mrb[0].mxu0
      %v4734 = vpop.f32.mrb[0].mxu0
      %v4735 = vadd.f32 %v4558, %v4734
      %v4736 = vpop.f32.mrb[0].mxu0
      %4737 = vmatprep.mubr.bf16.mxu0 0
      %4738 = vmatmul.mubr.bf16.gmra.mrb[0].mxu0 %v4248
      %v4739 = vpop.f32.mrb[0].mxu0
      %v4740 = vadd.f32 %v4563, %v4739
      %v4741 = vpop.f32.mrb[0].mxu0
      %v4742 = vpop.f32.mrb[0].mxu0
      %v4743 = vadd.f32 %v4566, %v4742
      %v4744 = vpop.f32.mrb[0].mxu0
      %4745 = vmatprep.mubr.bf16.mxu0 0
      %4746 = vmatmul.mubr.bf16.gmra.mrb[0].mxu0 %v4251
      %v4747 = vpop.f32.mrb[0].mxu0
      %v4748 = vadd.f32 %v4571, %v4747
      %v4749 = vpop.f32.mrb[0].mxu0
      %v4750 = vpop.f32.mrb[0].mxu0
      %v4751 = vadd.f32 %v4574, %v4750
      %v4752 = vpop.f32.mrb[0].mxu0
      %4753 = vmatprep.mubr.bf16.mxu0 0
      %4754 = vmatmul.mubr.bf16.gmra.mrb[0].mxu0 %v4254
      %v4755 = vpop.f32.mrb[0].mxu0
      %v4756 = vadd.f32 %v4579, %v4755
      %v4757 = vpop.f32.mrb[0].mxu0
      %v4758 = vpop.f32.mrb[0].mxu0
      %v4759 = vadd.f32 %v4582, %v4758
      %v4760 = vpop.f32.mrb[0].mxu0
      %4761 = vmatprep.mubr.bf16.mxu0 0
      %4762 = vmatmul.mubr.bf16.gmra.mrb[0].mxu0 %v4257
      %v4763 = vpop.f32.mrb[0].mxu0
      %v4764 = vadd.f32 %v4587, %v4763
      %v4765 = vpop.f32.mrb[0].mxu0
      %v4766 = vpop.f32.mrb[0].mxu0
      %v4767 = vadd.f32 %v4590, %v4766
      %v4768 = vpop.f32.mrb[0].mxu0
      %4769 = vmatprep.mubr.bf16.mxu0 0
      %4770 = vmatmul.mubr.bf16.gmra.mrb[0].mxu0 %v4260
      %v4771 = vpop.f32.mrb[0].mxu0
      %v4772 = vadd.f32 %v4595, %v4771
      %v4773 = vpop.f32.mrb[0].mxu0
      %v4774 = vpop.f32.mrb[0].mxu0
      %v4775 = vadd.f32 %v4598, %v4774
      %v4776 = vpop.f32.mrb[0].mxu0
      %4777 = vmatprep.mubr.bf16.mxu0 0
      %4778 = vmatmul.mubr.bf16.gmra.mrb[0].mxu0 %v4263
      %v4779 = vpop.f32.mrb[0].mxu0
      %v4780 = vadd.f32 %v4603, %v4779
      %v4781 = vpop.f32.mrb[0].mxu0
      %v4782 = vpop.f32.mrb[0].mxu0
      %v4783 = vadd.f32 %v4606, %v4782
      %v4784 = vpop.f32.mrb[0].mxu0
      %4785 = vmatprep.mubr.bf16.mxu0 0
      %4786 = vmatmul.mubr.bf16.gmra.mrb[0].mxu0 %v4266
      %v4787 = vpop.f32.mrb[0].mxu0
      %v4788 = vadd.f32 %v4611, %v4787
      %v4789 = vpop.f32.mrb[0].mxu0
      %v4790 = vpop.f32.mrb[0].mxu0
      %v4791 = vadd.f32 %v4614, %v4790
      %v4792 = vpop.f32.mrb[0].mxu0
      %4793 = vmatprep.mubr.bf16.mxu0 0
      %4794 = vmatmul.mubr.bf16.gmra.mrb[0].mxu0 %v4269
      %v4795 = vpop.f32.mrb[0].mxu0
      %v4796 = vadd.f32 %v4619, %v4795
      %v4797 = vpop.f32.mrb[0].mxu0
      %v4798 = vpop.f32.mrb[0].mxu0
      %v4799 = vadd.f32 %v4622, %v4798
      %v4800 = vpop.f32.mrb[0].mxu0
      %4801 = vdwg.mxu0
      %v4802 = vld [vmem:[%s6] sm:$0x1]
      %v4804 = vlaneseq
      %v4805 = vshrl.u32 %v4804, 7
      %v4806 = vsub.s32 0, %v4805
      %v4807 = vrot.slane %v4802, %v4806
      %v4809 = vmul.f32 %v4660, %v4807
      %v4810 = vmul.f32 %v4663, %v4807
      %v4811 = vmul.f32 %v4668, %v4807
      %v4812 = vmul.f32 %v4671, %v4807
      %v4813 = vmul.f32 %v4676, %v4807
      %v4814 = vmul.f32 %v4679, %v4807
      %v4815 = vmul.f32 %v4684, %v4807
      %v4816 = vmul.f32 %v4687, %v4807
      %v4817 = vmul.f32 %v4692, %v4807
      %v4818 = vmul.f32 %v4695, %v4807
      %v4819 = vmul.f32 %v4700, %v4807
      %v4820 = vmul.f32 %v4703, %v4807
      %v4821 = vmul.f32 %v4708, %v4807
      %v4822 = vmul.f32 %v4711, %v4807
      %v4823 = vmul.f32 %v4716, %v4807
      %v4824 = vmul.f32 %v4719, %v4807
      %v4825 = vmul.f32 %v4724, %v4807
      %v4826 = vmul.f32 %v4727, %v4807
      %v4827 = vmul.f32 %v4732, %v4807
      %v4828 = vmul.f32 %v4735, %v4807
      %v4829 = vmul.f32 %v4740, %v4807
      %v4830 = vmul.f32 %v4743, %v4807
      %v4831 = vmul.f32 %v4748, %v4807
      %v4832 = vmul.f32 %v4751, %v4807
      %v4833 = vmul.f32 %v4756, %v4807
      %v4834 = vmul.f32 %v4759, %v4807
      %v4835 = vmul.f32 %v4764, %v4807
      %v4836 = vmul.f32 %v4767, %v4807
      %v4837 = vmul.f32 %v4772, %v4807
      %v4838 = vmul.f32 %v4775, %v4807
      %v4839 = vmul.f32 %v4780, %v4807
      %v4840 = vmul.f32 %v4783, %v4807
      %v4841 = vmul.f32 %v4788, %v4807
      %v4842 = vmul.f32 %v4791, %v4807
      %v4843 = vmul.f32 %v4796, %v4807
      %v4844 = vmul.f32 %v4799, %v4807
      %v4845 = vld [vmem:[%s7] sm:$0x1]
      %v4847 = vlaneseq
      %v4848 = vshrl.u32 %v4847, 7
      %v4849 = vsub.s32 0, %v4848
      %v4850 = vrot.slane %v4845, %v4849
      %v4852 = vadd.f32 %v4809, %v4850
      %v4853 = vadd.f32 %v4810, %v4850
      %v4854 = vadd.f32 %v4811, %v4850
      %v4855 = vadd.f32 %v4812, %v4850
      %v4856 = vadd.f32 %v4813, %v4850
      %v4857 = vadd.f32 %v4814, %v4850
      %v4858 = vadd.f32 %v4815, %v4850
      %v4859 = vadd.f32 %v4816, %v4850
      %v4860 = vadd.f32 %v4817, %v4850
      %v4861 = vadd.f32 %v4818, %v4850
      %v4862 = vadd.f32 %v4819, %v4850
      %v4863 = vadd.f32 %v4820, %v4850
      %v4864 = vadd.f32 %v4821, %v4850
      %v4865 = vadd.f32 %v4822, %v4850
      %v4866 = vadd.f32 %v4823, %v4850
      %v4867 = vadd.f32 %v4824, %v4850
      %v4868 = vadd.f32 %v4825, %v4850
      %v4869 = vadd.f32 %v4826, %v4850
      %v4870 = vadd.f32 %v4827, %v4850
      %v4871 = vadd.f32 %v4828, %v4850
      %v4872 = vadd.f32 %v4829, %v4850
      %v4873 = vadd.f32 %v4830, %v4850
      %v4874 = vadd.f32 %v4831, %v4850
      %v4875 = vadd.f32 %v4832, %v4850
      %v4876 = vadd.f32 %v4833, %v4850
      %v4877 = vadd.f32 %v4834, %v4850
      %v4878 = vadd.f32 %v4835, %v4850
      %v4879 = vadd.f32 %v4836, %v4850
      %v4880 = vadd.f32 %v4837, %v4850
      %v4881 = vadd.f32 %v4838, %v4850
      %v4882 = vadd.f32 %v4839, %v4850
      %v4883 = vadd.f32 %v4840, %v4850
      %v4884 = vadd.f32 %v4841, %v4850
      %v4885 = vadd.f32 %v4842, %v4850
      %v4886 = vadd.f32 %v4843, %v4850
      %v4887 = vadd.f32 %v4844, %v4850
      %v4888 = vmax.f32 %v4852, 0.0
      %v4889 = vmax.f32 %v4853, 0.0
      %v4890 = vmax.f32 %v4854, 0.0
      %v4891 = vmax.f32 %v4855, 0.0
      %v4892 = vmax.f32 %v4856, 0.0
      %v4893 = vmax.f32 %v4857, 0.0
      %v4894 = vmax.f32 %v4858, 0.0
      %v4895 = vmax.f32 %v4859, 0.0
      %v4896 = vmax.f32 %v4860, 0.0
      %v4897 = vmax.f32 %v4861, 0.0
      %v4898 = vmax.f32 %v4862, 0.0
      %v4899 = vmax.f32 %v4863, 0.0
      %v4900 = vmax.f32 %v4864, 0.0
      %v4901 = vmax.f32 %v4865, 0.0
      %v4902 = vmax.f32 %v4866, 0.0
      %v4903 = vmax.f32 %v4867, 0.0
      %v4904 = vmax.f32 %v4868, 0.0
      %v4905 = vmax.f32 %v4869, 0.0
      %v4906 = vmax.f32 %v4870, 0.0
      %v4907 = vmax.f32 %v4871, 0.0
      %v4908 = vmax.f32 %v4872, 0.0
      %v4909 = vmax.f32 %v4873, 0.0
      %v4910 = vmax.f32 %v4874, 0.0
      %v4911 = vmax.f32 %v4875, 0.0
      %v4912 = vmax.f32 %v4876, 0.0
      %v4913 = vmax.f32 %v4877, 0.0
      %v4914 = vmax.f32 %v4878, 0.0
      %v4915 = vmax.f32 %v4879, 0.0
      %v4916 = vmax.f32 %v4880, 0.0
      %v4917 = vmax.f32 %v4881, 0.0
      %v4918 = vmax.f32 %v4882, 0.0
      %v4919 = vmax.f32 %v4883, 0.0
      %v4920 = vmax.f32 %v4884, 0.0
      %v4921 = vmax.f32 %v4885, 0.0
      %v4922 = vmax.f32 %v4886, 0.0
      %v4923 = vmax.f32 %v4887, 0.0
      %v4924 = vpack.c.bf16 %v4889, %v4888
      %v4925 = vpack.c.bf16 %v4891, %v4890
      %v4926 = vpack.c.bf16 %v4893, %v4892
      %v4927 = vpack.c.bf16 %v4895, %v4894
      %v4928 = vpack.c.bf16 %v4897, %v4896
      %v4929 = vpack.c.bf16 %v4899, %v4898
      %v4930 = vpack.c.bf16 %v4901, %v4900
      %v4931 = vpack.c.bf16 %v4903, %v4902
      %v4932 = vpack.c.bf16 %v4905, %v4904
      %v4933 = vpack.c.bf16 %v4907, %v4906
      %v4934 = vpack.c.bf16 %v4909, %v4908
      %v4935 = vpack.c.bf16 %v4911, %v4910
      %v4936 = vpack.c.bf16 %v4913, %v4912
      %v4937 = vpack.c.bf16 %v4915, %v4914
      %v4938 = vpack.c.bf16 %v4917, %v4916
      %v4939 = vpack.c.bf16 %v4919, %v4918
      %v4940 = vpack.c.bf16 %v4921, %v4920
      %v4941 = vpack.c.bf16 %v4923, %v4922
      %v4942 = vld [vmem:[%s8] sm:$0xf]
      %v4943 = vld [vmem:[%s8 + $0x4] sm:$0xf]
      %v4944 = vld [vmem:[%s8 + $0x8] sm:$0xf]
      %v4945 = vld [vmem:[%s8 + $0xc] sm:$0xf]
      %v4946 = vld [vmem:[%s8 + $0x10] sm:$0xf]
      %v4947 = vld [vmem:[%s8 + $0x14] sm:$0xf]
      %v4948 = vld [vmem:[%s8 + $0x18] sm:$0xf]
      %v4949 = vld [vmem:[%s8 + $0x1c] sm:$0xf]
      %v4950 = vld [vmem:[%s9] sm:$0x1]
      %v4952 = vlaneseq
      %v4953 = vshrl.u32 %v4952, 7
      %v4954 = vsub.s32 0, %v4953
      %v4955 = vrot.slane %v4950, %v4954
      %v4965 = vunpack.c.l.b16 %v4942
      %v4966 = vunpack.c.l.b16 %v4943
      %v4967 = vunpack.c.l.b16 %v4944
      %v4968 = vunpack.c.l.b16 %v4945
      %v4969 = vunpack.c.l.b16 %v4946
      %v4970 = vunpack.c.l.b16 %v4947
      %v4971 = vunpack.c.l.b16 %v4948
      %v4972 = vunpack.c.l.b16 %v4949
      %v4973 = vpack.c.b16 %v4966, %v4965
      %v4974 = vpack.c.b16 %v4968, %v4967
      %v4975 = vpack.c.b16 %v4970, %v4969
      %v4976 = vpack.c.b16 %v4972, %v4971
      %v4982 = vsel %vm1203, %v4924, 0
      %v4985 = vsel %vm1203, %v4925, 0
      %v4988 = vsel %vm1203, %v4926, 0
      %v4991 = vsel %vm1203, %v4927, 0
      %v4994 = vsel %vm1203, %v4928, 0
      %v4997 = vsel %vm1203, %v4929, 0
      %v5000 = vsel %vm1203, %v4930, 0
      %v5003 = vsel %vm1203, %v4931, 0
      %v5006 = vsel %vm1203, %v4932, 0
      %v5009 = vsel %vm1203, %v4933, 0
      %v5012 = vsel %vm1203, %v4934, 0
      %v5015 = vsel %vm1203, %v4935, 0
      %v5018 = vsel %vm1203, %v4936, 0
      %v5021 = vsel %vm1203, %v4937, 0
      %v5024 = vsel %vm1203, %v4938, 0
      %v5027 = vsel %vm1203, %v4939, 0
      %v5030 = vsel %vm1203, %v4940, 0
      %v5033 = vsel %vm1203, %v4941, 0
      %5035 = vmatprep.subr.bf16.mxu0 0
      %5036 = vmatpush1.bf16.msra.mxu0 %v4973
      %5037 = vmatprep.subr.bf16.mxu0 0
      %5038 = vmatpush1.bf16.msra.mxu0 %v4974
      %5039 = vmatprep.subr.bf16.mxu0 0
      %5040 = vmatpush1.bf16.msra.mxu0 %v4975
      %5041 = vmatprep.subr.bf16.mxu0 0
      %5042 = vmatpush1.bf16.msra.mxu0 %v4976
      %5043 = vmatprep.subr.bf16.mxu0 0
      %5044 = vmatpush1.bf16.msra.mxu0 0
      %5045 = vmatprep.subr.bf16.mxu0 0
      %5046 = vmatpush1.bf16.msra.mxu0 0
      %5047 = vmatprep.subr.bf16.mxu0 0
      %5048 = vmatpush1.bf16.msra.mxu0 0
      %5049 = vmatprep.subr.bf16.mxu0 0
      %5050 = vmatpush1.bf16.msra.mxu0 0
      %5051 = vmatprep.subr.bf16.mxu0 0
      %5052 = vmatpush1.bf16.msra.mxu0 0
      %5053 = vmatprep.subr.bf16.mxu0 0
      %5054 = vmatpush1.bf16.msra.mxu0 0
      %5055 = vmatprep.subr.bf16.mxu0 0
      %5056 = vmatpush1.bf16.msra.mxu0 0
      %5057 = vmatprep.subr.bf16.mxu0 0
      %5058 = vmatpush1.bf16.msra.mxu0 0
      %5059 = vmatprep.subr.bf16.mxu0 0
      %5060 = vmatpush1.bf16.msra.mxu0 0
      %5061 = vmatprep.subr.bf16.mxu0 0
      %5062 = vmatpush1.bf16.msra.mxu0 0
      %5063 = vmatprep.subr.bf16.mxu0 0
      %5064 = vmatpush1.bf16.msra.mxu0 0
      %5065 = vmatprep.subr.bf16.mxu0 0
      %5066 = vmatpush1.bf16.msra.mxu0 0
      %5067 = vmatprep.mubr.bf16.mxu0 0
      %5068 = vmatmul.mubr.bf16.gmra.mrb[0].mxu0 %v4982
      %v5069 = vpop.f32.mrb[0].mxu0
      %v5070 = vadd.f32 %v4955, %v5069
      %v5071 = vpop.f32.mrb[0].mxu0
      %v5072 = vpop.f32.mrb[0].mxu0
      %v5073 = vadd.f32 %v4955, %v5072
      %v5074 = vpop.f32.mrb[0].mxu0
      %5075 = vmatprep.mubr.bf16.mxu0 0
      %5076 = vmatmul.mubr.bf16.gmra.mrb[0].mxu0 %v4985
      %v5077 = vpop.f32.mrb[0].mxu0
      %v5078 = vadd.f32 %v4955, %v5077
      %v5079 = vpop.f32.mrb[0].mxu0
      %v5080 = vpop.f32.mrb[0].mxu0
      %v5081 = vadd.f32 %v4955, %v5080
      %v5082 = vpop.f32.mrb[0].mxu0
      %5083 = vmatprep.mubr.bf16.mxu0 0
      %5084 = vmatmul.mubr.bf16.gmra.mrb[0].mxu0 %v4988
      %v5085 = vpop.f32.mrb[0].mxu0
      %v5086 = vadd.f32 %v4955, %v5085
      %v5087 = vpop.f32.mrb[0].mxu0
      %v5088 = vpop.f32.mrb[0].mxu0
      %v5089 = vadd.f32 %v4955, %v5088
      %v5090 = vpop.f32.mrb[0].mxu0
      %5091 = vmatprep.mubr.bf16.mxu0 0
      %5092 = vmatmul.mubr.bf16.gmra.mrb[0].mxu0 %v4991
      %v5093 = vpop.f32.mrb[0].mxu0
      %v5094 = vadd.f32 %v4955, %v5093
      %v5095 = vpop.f32.mrb[0].mxu0
      %v5096 = vpop.f32.mrb[0].mxu0
      %v5097 = vadd.f32 %v4955, %v5096
      %v5098 = vpop.f32.mrb[0].mxu0
      %5099 = vmatprep.mubr.bf16.mxu0 0
      %5100 = vmatmul.mubr.bf16.gmra.mrb[0].mxu0 %v4994
      %v5101 = vpop.f32.mrb[0].mxu0
      %v5102 = vadd.f32 %v4955, %v5101
      %v5103 = vpop.f32.mrb[0].mxu0
      %v5104 = vpop.f32.mrb[0].mxu0
      %v5105 = vadd.f32 %v4955, %v5104
      %v5106 = vpop.f32.mrb[0].mxu0
      %5107 = vmatprep.mubr.bf16.mxu0 0
      %5108 = vmatmul.mubr.bf16.gmra.mrb[0].mxu0 %v4997
      %v5109 = vpop.f32.mrb[0].mxu0
      %v5110 = vadd.f32 %v4955, %v5109
      %v5111 = vpop.f32.mrb[0].mxu0
      %v5112 = vpop.f32.mrb[0].mxu0
      %v5113 = vadd.f32 %v4955, %v5112
      %v5114 = vpop.f32.mrb[0].mxu0
      %5115 = vmatprep.mubr.bf16.mxu0 0
      %5116 = vmatmul.mubr.bf16.gmra.mrb[0].mxu0 %v5000
      %v5117 = vpop.f32.mrb[0].mxu0
      %v5118 = vadd.f32 %v4955, %v5117
      %v5119 = vpop.f32.mrb[0].mxu0
      %v5120 = vpop.f32.mrb[0].mxu0
      %v5121 = vadd.f32 %v4955, %v5120
      %v5122 = vpop.f32.mrb[0].mxu0
      %5123 = vmatprep.mubr.bf16.mxu0 0
      %5124 = vmatmul.mubr.bf16.gmra.mrb[0].mxu0 %v5003
      %v5125 = vpop.f32.mrb[0].mxu0
      %v5126 = vadd.f32 %v4955, %v5125
      %v5127 = vpop.f32.mrb[0].mxu0
      %v5128 = vpop.f32.mrb[0].mxu0
      %v5129 = vadd.f32 %v4955, %v5128
      %v5130 = vpop.f32.mrb[0].mxu0
      %5131 = vmatprep.mubr.bf16.mxu0 0
      %5132 = vmatmul.mubr.bf16.gmra.mrb[0].mxu0 %v5006
      %v5133 = vpop.f32.mrb[0].mxu0
      %v5134 = vadd.f32 %v4955, %v5133
      %v5135 = vpop.f32.mrb[0].mxu0
      %v5136 = vpop.f32.mrb[0].mxu0
      %v5137 = vadd.f32 %v4955, %v5136
      %v5138 = vpop.f32.mrb[0].mxu0
      %5139 = vmatprep.mubr.bf16.mxu0 0
      %5140 = vmatmul.mubr.bf16.gmra.mrb[0].mxu0 %v5009
      %v5141 = vpop.f32.mrb[0].mxu0
      %v5142 = vadd.f32 %v4955, %v5141
      %v5143 = vpop.f32.mrb[0].mxu0
      %v5144 = vpop.f32.mrb[0].mxu0
      %v5145 = vadd.f32 %v4955, %v5144
      %v5146 = vpop.f32.mrb[0].mxu0
      %5147 = vmatprep.mubr.bf16.mxu0 0
      %5148 = vmatmul.mubr.bf16.gmra.mrb[0].mxu0 %v5012
      %v5149 = vpop.f32.mrb[0].mxu0
      %v5150 = vadd.f32 %v4955, %v5149
      %v5151 = vpop.f32.mrb[0].mxu0
      %v5152 = vpop.f32.mrb[0].mxu0
      %v5153 = vadd.f32 %v4955, %v5152
      %v5154 = vpop.f32.mrb[0].mxu0
      %5155 = vmatprep.mubr.bf16.mxu0 0
      %5156 = vmatmul.mubr.bf16.gmra.mrb[0].mxu0 %v5015
      %v5157 = vpop.f32.mrb[0].mxu0
      %v5158 = vadd.f32 %v4955, %v5157
      %v5159 = vpop.f32.mrb[0].mxu0
      %v5160 = vpop.f32.mrb[0].mxu0
      %v5161 = vadd.f32 %v4955, %v5160
      %v5162 = vpop.f32.mrb[0].mxu0
      %5163 = vmatprep.mubr.bf16.mxu0 0
      %5164 = vmatmul.mubr.bf16.gmra.mrb[0].mxu0 %v5018
      %v5165 = vpop.f32.mrb[0].mxu0
      %v5166 = vadd.f32 %v4955, %v5165
      %v5167 = vpop.f32.mrb[0].mxu0
      %v5168 = vpop.f32.mrb[0].mxu0
      %v5169 = vadd.f32 %v4955, %v5168
      %v5170 = vpop.f32.mrb[0].mxu0
      %5171 = vmatprep.mubr.bf16.mxu0 0
      %5172 = vmatmul.mubr.bf16.gmra.mrb[0].mxu0 %v5021
      %v5173 = vpop.f32.mrb[0].mxu0
      %v5174 = vadd.f32 %v4955, %v5173
      %v5175 = vpop.f32.mrb[0].mxu0
      %v5176 = vpop.f32.mrb[0].mxu0
      %v5177 = vadd.f32 %v4955, %v5176
      %v5178 = vpop.f32.mrb[0].mxu0
      %5179 = vmatprep.mubr.bf16.mxu0 0
      %5180 = vmatmul.mubr.bf16.gmra.mrb[0].mxu0 %v5024
      %v5181 = vpop.f32.mrb[0].mxu0
      %v5182 = vadd.f32 %v4955, %v5181
      %v5183 = vpop.f32.mrb[0].mxu0
      %v5184 = vpop.f32.mrb[0].mxu0
      %v5185 = vadd.f32 %v4955, %v5184
      %v5186 = vpop.f32.mrb[0].mxu0
      %5187 = vmatprep.mubr.bf16.mxu0 0
      %5188 = vmatmul.mubr.bf16.gmra.mrb[0].mxu0 %v5027
      %v5189 = vpop.f32.mrb[0].mxu0
      %v5190 = vadd.f32 %v4955, %v5189
      %v5191 = vpop.f32.mrb[0].mxu0
      %v5192 = vpop.f32.mrb[0].mxu0
      %v5193 = vadd.f32 %v4955, %v5192
      %v5194 = vpop.f32.mrb[0].mxu0
      %5195 = vmatprep.mubr.bf16.mxu0 0
      %5196 = vmatmul.mubr.bf16.gmra.mrb[0].mxu0 %v5030
      %v5197 = vpop.f32.mrb[0].mxu0
      %v5198 = vadd.f32 %v4955, %v5197
      %v5199 = vpop.f32.mrb[0].mxu0
      %v5200 = vpop.f32.mrb[0].mxu0
      %v5201 = vadd.f32 %v4955, %v5200
      %v5202 = vpop.f32.mrb[0].mxu0
      %5203 = vmatprep.mubr.bf16.mxu0 0
      %5204 = vmatmul.mubr.bf16.gmra.mrb[0].mxu0 %v5033
      %v5205 = vpop.f32.mrb[0].mxu0
      %v5206 = vadd.f32 %v4955, %v5205
      %v5207 = vpop.f32.mrb[0].mxu0
      %v5208 = vpop.f32.mrb[0].mxu0
      %v5209 = vadd.f32 %v4955, %v5208
      %v5210 = vpop.f32.mrb[0].mxu0
      %5211 = vdwg.mxu0
      %5248 = vrot.lane.b32.xlu0 %v5070, 64
      %v5249 = vpop.permute.xlu0 %5248
      %5250 = vrot.lane.b32.xlu0 %v5073, 64
      %v5251 = vpop.permute.xlu0 %5250
      %5252 = vrot.lane.b32.xlu0 %v5078, 64
      %v5253 = vpop.permute.xlu0 %5252
      %5254 = vrot.lane.b32.xlu0 %v5081, 64
      %v5255 = vpop.permute.xlu0 %5254
      %5256 = vrot.lane.b32.xlu0 %v5086, 64
      %v5257 = vpop.permute.xlu0 %5256
      %5258 = vrot.lane.b32.xlu0 %v5089, 64
      %v5259 = vpop.permute.xlu0 %5258
      %5260 = vrot.lane.b32.xlu0 %v5094, 64
      %v5261 = vpop.permute.xlu0 %5260
      %5262 = vrot.lane.b32.xlu0 %v5097, 64
      %v5263 = vpop.permute.xlu0 %5262
      %5264 = vrot.lane.b32.xlu0 %v5102, 64
      %v5265 = vpop.permute.xlu0 %5264
      %5266 = vrot.lane.b32.xlu0 %v5105, 64
      %v5267 = vpop.permute.xlu0 %5266
      %5268 = vrot.lane.b32.xlu0 %v5110, 64
      %v5269 = vpop.permute.xlu0 %5268
      %5270 = vrot.lane.b32.xlu0 %v5113, 64
      %v5271 = vpop.permute.xlu0 %5270
      %5272 = vrot.lane.b32.xlu0 %v5118, 64
      %v5273 = vpop.permute.xlu0 %5272
      %5274 = vrot.lane.b32.xlu0 %v5121, 64
      %v5275 = vpop.permute.xlu0 %5274
      %5276 = vrot.lane.b32.xlu0 %v5126, 64
      %v5277 = vpop.permute.xlu0 %5276
      %5278 = vrot.lane.b32.xlu0 %v5129, 64
      %v5279 = vpop.permute.xlu0 %5278
      %5280 = vrot.lane.b32.xlu0 %v5134, 64
      %v5281 = vpop.permute.xlu0 %5280
      %5282 = vrot.lane.b32.xlu0 %v5137, 64
      %v5283 = vpop.permute.xlu0 %5282
      %5284 = vrot.lane.b32.xlu0 %v5142, 64
      %v5285 = vpop.permute.xlu0 %5284
      %5286 = vrot.lane.b32.xlu0 %v5145, 64
      %v5287 = vpop.permute.xlu0 %5286
      %5288 = vrot.lane.b32.xlu0 %v5150, 64
      %v5289 = vpop.permute.xlu0 %5288
      %5290 = vrot.lane.b32.xlu0 %v5153, 64
      %v5291 = vpop.permute.xlu0 %5290
      %5292 = vrot.lane.b32.xlu0 %v5158, 64
      %v5293 = vpop.permute.xlu0 %5292
      %5294 = vrot.lane.b32.xlu0 %v5161, 64
      %v5295 = vpop.permute.xlu0 %5294
      %5296 = vrot.lane.b32.xlu0 %v5166, 64
      %v5297 = vpop.permute.xlu0 %5296
      %5298 = vrot.lane.b32.xlu0 %v5169, 64
      %v5299 = vpop.permute.xlu0 %5298
      %5300 = vrot.lane.b32.xlu0 %v5174, 64
      %v5301 = vpop.permute.xlu0 %5300
      %5302 = vrot.lane.b32.xlu0 %v5177, 64
      %v5303 = vpop.permute.xlu0 %5302
      %5304 = vrot.lane.b32.xlu0 %v5182, 64
      %v5305 = vpop.permute.xlu0 %5304
      %5306 = vrot.lane.b32.xlu0 %v5185, 64
      %v5307 = vpop.permute.xlu0 %5306
      %5308 = vrot.lane.b32.xlu0 %v5190, 64
      %v5309 = vpop.permute.xlu0 %5308
      %5310 = vrot.lane.b32.xlu0 %v5193, 64
      %v5311 = vpop.permute.xlu0 %5310
      %5312 = vrot.lane.b32.xlu0 %v5198, 64
      %v5313 = vpop.permute.xlu0 %5312
      %5314 = vrot.lane.b32.xlu0 %v5201, 64
      %v5315 = vpop.permute.xlu0 %5314
      %5316 = vrot.lane.b32.xlu0 %v5206, 64
      %v5317 = vpop.permute.xlu0 %5316
      %5318 = vrot.lane.b32.xlu0 %v5209, 64
      %v5319 = vpop.permute.xlu0 %5318
      %v5356 = vsel %vm1203, %v4888, %v5249
      %v5357 = vsel %vm1203, %v4889, %v5251
      %v5358 = vsel %vm1203, %v4890, %v5253
      %v5359 = vsel %vm1203, %v4891, %v5255
      %v5360 = vsel %vm1203, %v4892, %v5257
      %v5361 = vsel %vm1203, %v4893, %v5259
      %v5362 = vsel %vm1203, %v4894, %v5261
      %v5363 = vsel %vm1203, %v4895, %v5263
      %v5364 = vsel %vm1203, %v4896, %v5265
      %v5365 = vsel %vm1203, %v4897, %v5267
      %v5366 = vsel %vm1203, %v4898, %v5269
      %v5367 = vsel %vm1203, %v4899, %v5271
      %v5368 = vsel %vm1203, %v4900, %v5273
      %v5369 = vsel %vm1203, %v4901, %v5275
      %v5370 = vsel %vm1203, %v4902, %v5277
      %v5371 = vsel %vm1203, %v4903, %v5279
      %v5372 = vsel %vm1203, %v4904, %v5281
      %v5373 = vsel %vm1203, %v4905, %v5283
      %v5374 = vsel %vm1203, %v4906, %v5285
      %v5375 = vsel %vm1203, %v4907, %v5287
      %v5376 = vsel %vm1203, %v4908, %v5289
      %v5377 = vsel %vm1203, %v4909, %v5291
      %v5378 = vsel %vm1203, %v4910, %v5293
      %v5379 = vsel %vm1203, %v4911, %v5295
      %v5380 = vsel %vm1203, %v4912, %v5297
      %v5381 = vsel %vm1203, %v4913, %v5299
      %v5382 = vsel %vm1203, %v4914, %v5301
      %v5383 = vsel %vm1203, %v4915, %v5303
      %v5384 = vsel %vm1203, %v4916, %v5305
      %v5385 = vsel %vm1203, %v4917, %v5307
      %v5386 = vsel %vm1203, %v4918, %v5309
      %v5387 = vsel %vm1203, %v4919, %v5311
      %v5388 = vsel %vm1203, %v4920, %v5313
      %v5389 = vsel %vm1203, %v4921, %v5315
      %v5390 = vsel %vm1203, %v4922, %v5317
      %v5391 = vsel %vm1203, %v4923, %v5319
      %vm5392 = vcmask 596992
      %5393 = vst.msk [vmem:[%s359] sm:$0xff] %vm5392, %v5356
      %5394 = vst.msk [vmem:[%s359 + $0x8] sm:$0xff] %vm5392, %v5357
      %5395 = vst.msk [vmem:[%s359 + $0x10] sm:$0xff] %vm5392, %v5358
      %5396 = vst.msk [vmem:[%s359 + $0x18] sm:$0xff] %vm5392, %v5359
      %5397 = vst.msk [vmem:[%s359 + $0x20] sm:$0xff] %vm5392, %v5360
      %5398 = vst.msk [vmem:[%s359 + $0x28] sm:$0xff] %vm5392, %v5361
      %5399 = vst.msk [vmem:[%s359 + $0x30] sm:$0xff] %vm5392, %v5362
      %5400 = vst.msk [vmem:[%s359 + $0x38] sm:$0xff] %vm5392, %v5363
      %5401 = vst.msk [vmem:[%s359 + $0x40] sm:$0xff] %vm5392, %v5364
      %5402 = vst.msk [vmem:[%s359 + $0x48] sm:$0xff] %vm5392, %v5365
      %5403 = vst.msk [vmem:[%s359 + $0x50] sm:$0xff] %vm5392, %v5366
      %5404 = vst.msk [vmem:[%s359 + $0x58] sm:$0xff] %vm5392, %v5367
      %5405 = vst.msk [vmem:[%s359 + $0x60] sm:$0xff] %vm5392, %v5368
      %5406 = vst.msk [vmem:[%s359 + $0x68] sm:$0xff] %vm5392, %v5369
      %5407 = vst.msk [vmem:[%s359 + $0x70] sm:$0xff] %vm5392, %v5370
      %5408 = vst.msk [vmem:[%s359 + $0x78] sm:$0xff] %vm5392, %v5371
      %5409 = vst.msk [vmem:[%s359 + $0x80] sm:$0xff] %vm5392, %v5372
      %5410 = vst.msk [vmem:[%s359 + $0x88] sm:$0xff] %vm5392, %v5373
      %5411 = vst.msk [vmem:[%s359 + $0x90] sm:$0xff] %vm5392, %v5374
      %5412 = vst.msk [vmem:[%s359 + $0x98] sm:$0xff] %vm5392, %v5375
      %5413 = vst.msk [vmem:[%s359 + $0xa0] sm:$0xff] %vm5392, %v5376
      %5414 = vst.msk [vmem:[%s359 + $0xa8] sm:$0xff] %vm5392, %v5377
      %5415 = vst.msk [vmem:[%s359 + $0xb0] sm:$0xff] %vm5392, %v5378
      %5416 = vst.msk [vmem:[%s359 + $0xb8] sm:$0xff] %vm5392, %v5379
      %5417 = vst.msk [vmem:[%s359 + $0xc0] sm:$0xff] %vm5392, %v5380
      %5418 = vst.msk [vmem:[%s359 + $0xc8] sm:$0xff] %vm5392, %v5381
      %5419 = vst.msk [vmem:[%s359 + $0xd0] sm:$0xff] %vm5392, %v5382
      %5420 = vst.msk [vmem:[%s359 + $0xd8] sm:$0xff] %vm5392, %v5383
      %5421 = vst.msk [vmem:[%s359 + $0xe0] sm:$0xff] %vm5392, %v5384
      %5422 = vst.msk [vmem:[%s359 + $0xe8] sm:$0xff] %vm5392, %v5385
      %5423 = vst.msk [vmem:[%s359 + $0xf0] sm:$0xff] %vm5392, %v5386
      %5424 = vst.msk [vmem:[%s359 + $0xf8] sm:$0xff] %vm5392, %v5387
      %5425 = vst.msk [vmem:[%s359 + $0x100] sm:$0xff] %vm5392, %v5388
      %5426 = vst.msk [vmem:[%s359 + $0x108] sm:$0xff] %vm5392, %v5389
      %5427 = vst.msk [vmem:[%s359 + $0x110] sm:$0xff] %vm5392, %v5390
      %5428 = vst.msk [vmem:[%s359 + $0x118] sm:$0xff] %vm5392, %v5391
      %p5429 = scmp.lt.s32.totalorder %s21, 1
      %s5430 = scalar_select %p5429, %s21, 1
      %s5431 = smul.addr %s5430, 36
      %s5432 = smul.addr %s5431, 8
      %s5433 = scalar_lea.vmem %s10, %s5432
      // Predicated region
      $region61: #{_per_decoder_forward_impl.1} parent=59 // pred_check
        %p5434 = pneg %p254
      $region62: #{_per_decoder_forward_impl.1} parent=59 // pred_check_branch
        %5436 = sbr.rel (%p5434) target = $region64
      $region63: #{_per_decoder_forward_impl.1} parent=59 // pred_region
        _
      $region64: #{_per_decoder_forward_impl.1} parent=59 // pred_fallthru
        _
    $region60: #{_per_decoder_forward_impl.1} parent=5 // pred_fallthru
      _
    %p5437 = scmp.le.s32.totalorder 2, %s16
    // Predicated region
    $region65: #{_per_decoder_forward_impl.1} parent=5 // pred_check
      %p5438 = pneg %p5437
    $region66: #{_per_decoder_forward_impl.1} parent=5 // pred_check_branch
      %5440 = sbr.rel (%p5438) target = $region68
    $region67: #{_per_decoder_forward_impl.1} parent=5 // pred_region
      %s5441 = ssub.s32 %s16, 2
      // Predicated region
      $region69: #{_per_decoder_forward_impl.1} parent=67 // pred_check
        %p5442 = pneg %p260
      $region70: #{_per_decoder_forward_impl.1} parent=67 // pred_check_branch
        %5444 = sbr.rel (%p5442) target = $region72
      $region71: #{_per_decoder_forward_impl.1} parent=67 // pred_region
        %p5445 = scmp.lt.s32.totalorder %s22, 1
        %s5446 = scalar_select %p5445, %s22, 1
        %s5447 = smul.addr %s5446, 36
        %s5448 = smul.addr %s5447, 8
        %s5449 = scalar_lea.vmem %s10, %s5448
      $region72: #{_per_decoder_forward_impl.1} parent=67 // pred_fallthru
        _
    $region68: #{_per_decoder_forward_impl.1} parent=5 // pred_fallthru
      _
  $region6: #{_per_decoder_forward_impl.1} parent=0 // loop_footer
    %s20 = sadd.s32 1, %s16
  $region7: #{_per_decoder_forward_impl.1} parent=0 // loop_footer_branch
    %15 = sbr.rel target = $region3
  $region8: #{_per_decoder_forward_impl.1} parent=0 // loop_exit
    _

</llo_original>
